<compile_context>
chip_gen: v6e
topology: v6e:2x2x1
jax: 0.10.0
libtpu: 0.0.40
codegen_flags: <defaults>
</compile_context>

<pallas_src>
import functools

import numpy as np
import jax
import jax.numpy as jnp
from jax.experimental import pallas as pl
from jax.experimental.pallas import tpu as pltpu


# ---------------------------------------------------------------------------
# In-kernel math helpers (operate on loaded VMEM values)
# ---------------------------------------------------------------------------

def _elu(y):
    # PyTorch nn.ELU(alpha=1.0)
    return jnp.where(y > 0, y, jnp.exp(jnp.minimum(y, 0.0)) - 1.0)


def _mlp(h, ws, bs):
    for w, b in zip(ws, bs):
        h = _elu(jnp.dot(h, w, preferred_element_type=jnp.float32) + b)
    return h


def _edge_scalar_mlp(pre0, wmid, bmid, wlast, blast):
    """Scalar-edge MLP 1 -> H -> ... -> H -> 1 with ELU after every layer.

    `pre0` is the layer-0 pre-activation (the [*,1] scalar already broadcast
    by w0/b0 on the VPU); the last layer is a lane reduce -- no K=1 / N=1 MXU
    passes anywhere in this MLP.
    """
    h = _elu(pre0)
    for w, b in zip(wmid, bmid):
        h = _elu(jnp.dot(h, w, preferred_element_type=jnp.float32) + b)
    s = jnp.sum(h * wlast, axis=1, keepdims=True) + blast
    return _elu(s)


def _gcn_stack(x, edge_w, t_mat, s_mat, ws, bs):
    """Fused GCNConv stack.

    A = T @ (w * S) + I is built in-kernel (no XLA scatter between kernels);
    the symmetric D^-1/2 A D^-1/2 normalization is hoisted out of the layer
    loop, so each unrolled layer is two MXU matmuls + bias + ELU.
    """
    n = t_mat.shape[0]
    a = jnp.dot(t_mat, edge_w * s_mat, preferred_element_type=jnp.float32)
    row = jax.lax.broadcasted_iota(jnp.int32, (n, n), 0)
    col = jax.lax.broadcasted_iota(jnp.int32, (n, n), 1)
    eye = jnp.where(row == col, 1.0, 0.0).astype(jnp.float32)
    a = a + eye                                    # gcn_norm add_self_loops

    deg = jnp.sum(a, axis=1, keepdims=True)        # weighted in-degree (+1)
    # PyG maps deg == 0 -> 0; deg < 0 (possible with ELU edge weights) would
    # be NaN in the reference -- clamped to 0 here (documented deviation).
    dinv = jnp.where(deg > 0.0, jax.lax.rsqrt(jnp.maximum(deg, 1e-12)), 0.0)
    # Column scaling without an in-kernel [N,1] -> [1,N] relayout: multiply by
    # diag(dinv) on the MXU (N^3 MACs once per level, trivial at these sizes).
    a_hat = jnp.dot(dinv * a, eye * dinv, preferred_element_type=jnp.float32)

    h = x
    for w, b in zip(ws, bs):
        xw = jnp.dot(h, w, preferred_element_type=jnp.float32)
        h = _elu(jnp.dot(a_hat, xw, preferred_element_type=jnp.float32) + b)
    return h


# ---------------------------------------------------------------------------
# The single fused Encoder kernel (grid=(); everything resident in VMEM)
# ---------------------------------------------------------------------------

def _encoder_kernel(cfg, layout, *refs):
    depth = cfg["depth"]
    n_mid = cfg["n_mid"]
    hidden = cfg["hidden"]
    n_in = cfg["n_in"]

    in_refs = refs[:n_in]
    out_refs = refs[n_in:]

    def grab(name):
        s, n = layout[name]
        return [r[...] for r in in_refs[s:s + n]]

    x = grab("x")[0]
    ea = grab("ea")[0]

    ne_w, ne_b = grab("ne_w"), grab("ne_b")
    f2c_w, f2c_b = grab("f2c_w"), grab("f2c_b")
    ds_w, ds_b = grab("ds_w"), grab("ds_b")
    gamma, beta = grab("ln")

    def edge_mlp_params(i):
        ee = grab(f"ee{i}")
        w0, b0 = ee[0], ee[1]
        wmid = ee[2:2 + n_mid]
        bmid = ee[2 + n_mid:2 + 2 * n_mid]
        return w0, b0, wmid, bmid, ee[-2], ee[-1]

    # ---- level 0: node embedding MLP, edge encoder MLP, GCN stack ----------
    x = _mlp(x, ne_w, ne_b)

    w0, b0, wmid, bmid, wlast, blast = edge_mlp_params(0)
    ea = _edge_scalar_mlp(ea * w0 + b0, wmid, bmid, wlast, blast)

    t_mat, s_mat = grab("adj0")
    x = _gcn_stack(x, ea, t_mat, s_mat, grab("mp0_w"), grab("mp0_b"))

    out_refs[0][...] = x
    out_refs[depth][...] = ea

    # ---- coarser levels -----------------------------------------------------
    for i in range(1, depth):
        # avg_pool_mod_no_x (coalesce 'mean') fused with the coarse edge MLP:
        # pool the [E,1] scalar FIRST, then broadcast by w0 (same math as
        # M @ (e * w0), ~H x fewer MACs, no [E_fine, H] temp).
        pool_m = grab(f"pool{i}")[0]
        pooled = jnp.dot(pool_m, ea, preferred_element_type=jnp.float32)
        w0, b0, wmid, bmid, wlast, blast = edge_mlp_params(i)
        ea = _edge_scalar_mlp(pooled * w0 + b0, wmid, bmid, wlast, blast)

        # f2c geometry (normalize(pos_coarse[cluster] - pos_fine)) + f2c MLP
        pc, pf = grab(f"geom{i}")
        diff = pc - pf
        nrm = jnp.sqrt(jnp.sum(diff * diff, axis=1, keepdims=True))
        ea_f2c = _mlp(diff / (nrm + 1e-8), f2c_w, f2c_b)

        # downsample MLP on concat([ea_f2c, x]) as a split matmul (layer 0):
        # reference concatenation order is (edge_attr_f2c, x).
        w0d = ds_w[0]
        t = _elu(jnp.dot(ea_f2c, w0d[:hidden, :],
                         preferred_element_type=jnp.float32)
                 + jnp.dot(x, w0d[hidden:, :],
                           preferred_element_type=jnp.float32)
                 + ds_b[0])
        for j in range(1, len(ds_w)):
            t = _elu(jnp.dot(t, ds_w[j],
                             preferred_element_type=jnp.float32) + ds_b[j])

        # residual + LayerNorm (eps=1e-5), both after the residual add as in
        # the reference.
        t = ea_f2c + t
        mu = jnp.mean(t, axis=-1, keepdims=True)
        var = jnp.mean((t - mu) ** 2, axis=-1, keepdims=True)
        t = (t - mu) * jax.lax.rsqrt(var + 1e-5) * gamma + beta

        # EdgeAggregator(aggr='mean'): segment mean onto coarse nodes.
        agg_m = grab(f"agg{i}")[0]
        x = jnp.dot(agg_m, t, preferred_element_type=jnp.float32)

        # coarse GCN stack
        t_mat, s_mat = grab(f"adj{i}")
        x = _gcn_stack(x, ea, t_mat, s_mat, grab(f"mp{i}_w"), grab(f"mp{i}_b"))

        out_refs[i][...] = x
        out_refs[depth + i][...] = ea


# ---------------------------------------------------------------------------
# Jitted wrapper: packs params / precomputed structure into one pallas_call
# ---------------------------------------------------------------------------

@jax.jit
def encoder_forward(params, x, edge_attr, pos, prep):
    depth = len(params["mp_blocks"])
    hidden = params["node_embedding"][0][0].shape[1]
    n_mid = len(params["edge_encoder_mlp"][0]["wmid"])

    args, layout = [], {}

    def add(name, arrs):
        layout[name] = (len(args), len(arrs))
        args.extend(arrs)

    add("x", [x])
    add("ea", [edge_attr])
    add("ne_w", [w for w, _ in params["node_embedding"]])
    add("ne_b", [b for _, b in params["node_embedding"]])
    add("f2c_w", [w for w, _ in params["edge_encoder_f2c_mlp"]])
    add("f2c_b", [b for _, b in params["edge_encoder_f2c_mlp"]])
    add("ds_w", [w for w, _ in params["downsample_mlp"]])
    add("ds_b", [b for _, b in params["downsample_mlp"]])
    add("ln", list(params["downsample_norm"]))

    for i in range(depth):
        p = params["edge_encoder_mlp"][i]
        add(f"ee{i}", [p["w0"], p["b0"], *p["wmid"], *p["bmid"],
                       p["wlast"], p["blast"]])
        add(f"adj{i}", [prep["T"][i], prep["S"][i]])
        add(f"mp{i}_w", [w for w, _ in params["mp_blocks"][i]])
        add(f"mp{i}_b", [b for _, b in params["mp_blocks"][i]])
        if i >= 1:
            add(f"pool{i}", [prep["pool_M"][i - 1]])
            add(f"agg{i}", [prep["agg_M"][i - 1]])
            pos_fine = pos if i == 1 else prep["centroids"][i - 2]
            add(f"geom{i}", [prep["f2c_pos_coarse"][i - 1], pos_fine])

    node_sizes = [x.shape[0]] + [m.shape[0] for m in prep["agg_M"]]
    edge_sizes = [edge_attr.shape[0]] + [m.shape[0] for m in prep["pool_M"]]
    # TODO(synk): for the large-graph path these (E,1)/(N,H) outputs should be
    # packed lane-dense (last dim a multiple of 128) before leaving VMEM.
    out_shapes = tuple(
        jax.ShapeDtypeStruct((node_sizes[i], hidden), jnp.float32)
        for i in range(depth)
    ) + tuple(
        jax.ShapeDtypeStruct((edge_sizes[i], 1), jnp.float32)
        for i in range(depth)
    )

    cfg = dict(depth=depth, n_mid=n_mid, hidden=hidden, n_in=len(args))
    kernel = functools.partial(_encoder_kernel, cfg, dict(layout))

    outs = pl.pallas_call(
        kernel,
        out_shape=out_shapes,
        compiler_params=pltpu.CompilerParams(
            vmem_limit_bytes=32 * 1024 * 1024),
    )(*args)

    node_attrs = list(outs[:depth])
    edge_attrs = list(outs[depth:])
    return node_attrs[-1], edge_attrs[-1], edge_attrs, node_attrs


# ---------------------------------------------------------------------------
# Host-side one-time graph preprocessing (structure only; no feature math)
# ---------------------------------------------------------------------------

def consecutive_cluster_np(cluster):
    _, inv = np.unique(np.asarray(cluster), return_inverse=True)
    return inv.astype(np.int32)


def adjacency_one_hots(edge_index, n):
    """One-hot T [N,E] (rows=target) and S [E,N] (cols=source) so that the
    dense adjacency can be built in-kernel as A = T @ (w * S)."""
    e = edge_index.shape[1]
    t = np.zeros((n, e), np.float32)
    s = np.zeros((e, n), np.float32)
    t[edge_index[1], np.arange(e)] = 1.0
    s[np.arange(e), edge_index[0]] = 1.0
    return t, s


def pool_edge_mean_matrix(cluster, edge_index, num_coarse):
    """cluster[edge_index], remove_self_loops, coalesce('mean'); returns the
    coarse edge_index and the [Ec, E_fine] mean matrix."""
    e_fine = edge_index.shape[1]
    ei = cluster[edge_index.reshape(-1)].reshape(2, -1)
    keep = np.nonzero(ei[0] != ei[1])[0]
    key = ei[0, keep].astype(np.int64) * num_coarse + ei[1, keep].astype(np.int64)
    uniq, inv = np.unique(key, return_inverse=True)
    ei_pool = np.stack([uniq // num_coarse, uniq % num_coarse]).astype(np.int32)
    m = np.zeros((uniq.shape[0], e_fine), np.float32)
    m[inv, keep] = 1.0
    m = m / np.maximum(m.sum(axis=1, keepdims=True), 1.0)
    return ei_pool, m


def cluster_mean_matrix(cluster, n_coarse):
    nf = cluster.shape[0]
    m = np.zeros((n_coarse, nf), np.float32)
    m[cluster, np.arange(nf)] = 1.0
    return m / np.maximum(m.sum(axis=1, keepdims=True), 1.0)


def preprocess_graph(edge_index_np, clusters_np, centroids_np, n_fine):
    depth = len(clusters_np) + 1
    edge_indices = [edge_index_np.astype(np.int32)]
    t_mats, s_mats, pool_m, agg_m, f2c_pos_coarse = [], [], [], [], []

    t0, s0 = adjacency_one_hots(edge_indices[0], n_fine)
    t_mats.append(t0)
    s_mats.append(s0)

    ei = edge_indices[0]
    for i in range(1, depth):
        cluster = consecutive_cluster_np(clusters_np[i - 1])
        cent = np.asarray(centroids_np[i - 1], np.float32)
        n_coarse = cent.shape[0]

        ei_pool, m_pool = pool_edge_mean_matrix(cluster, ei, n_coarse)
        pool_m.append(m_pool)
        edge_indices.append(ei_pool)
        agg_m.append(cluster_mean_matrix(cluster, n_coarse))
        f2c_pos_coarse.append(cent[cluster])        # gathered centroid / node

        ti, si = adjacency_one_hots(ei_pool, n_coarse)
        t_mats.append(ti)
        s_mats.append(si)
        ei = ei_pool

    prep = {
        "T": [jnp.asarray(t) for t in t_mats],
        "S": [jnp.asarray(s) for s in s_mats],
        "pool_M": [jnp.asarray(m) for m in pool_m],
        "agg_M": [jnp.asarray(m) for m in agg_m],
        "f2c_pos_coarse": [jnp.asarray(p) for p in f2c_pos_coarse],
        "centroids": [jnp.asarray(np.asarray(c, np.float32)) for c in centroids_np],
    }
    static = {"edge_indices": edge_indices}
    return prep, static


# ---------------------------------------------------------------------------
# Parameters (deterministic synthetic init; weights [in, out], bias [1, out])
# ---------------------------------------------------------------------------

def make_encoder_params(key, in_ch, num_mp_layers, hidden, n_mlp):
    depth = len(num_mp_layers)
    keys = iter(jax.random.split(key, 256))

    def lin(fi, fo):
        w = jax.random.normal(next(keys), (fi, fo), jnp.float32) * (0.1 / np.sqrt(fi))
        b = jax.random.normal(next(keys), (1, fo), jnp.float32) * 0.01
        return (w, b)

    def scalar_edge_mlp():
        w0, b0 = lin(1, hidden)
        wmid, bmid = [], []
        for _ in range(max(n_mlp - 2, 0)):
            w, b = lin(hidden, hidden)
            wmid.append(w)
            bmid.append(b)
        wl, bl = lin(hidden, 1)
        return {"w0": w0, "b0": b0, "wmid": wmid, "bmid": bmid,
                "wlast": jnp.transpose(wl), "blast": bl}   # wlast as [1, H] row

    return {
        "node_embedding": [lin(in_ch if j == 0 else hidden, hidden)
                           for j in range(n_mlp)],
        "edge_encoder_mlp": [scalar_edge_mlp() for _ in range(depth)],
        "edge_encoder_f2c_mlp": [lin(2 if j == 0 else hidden, hidden)
                                 for j in range(n_mlp)],
        "downsample_mlp": [lin(hidden * 2 if j == 0 else hidden, hidden)
                           for j in range(n_mlp)],
        "downsample_norm": (jnp.ones((1, hidden), jnp.float32),
                            jnp.zeros((1, hidden), jnp.float32)),
        "mp_blocks": [[lin(hidden, hidden) for _ in range(num_mp_layers[i])]
                      for i in range(depth)],
    }


# ---------------------------------------------------------------------------

if __name__ == "__main__":
    key = jax.random.PRNGKey(0)

    input_node_channel = 3
    num_mp_layers = [2, 2]        # depth = 2 (one pooling level)
    hidden_channels = 32
    n_mlp_mp = 2

    # fine graph: 4x4 grid, 16 nodes, bidirectional nearest-neighbour edges
    side = 4
    n_fine = side * side
    coords = np.stack(np.meshgrid(np.arange(side), np.arange(side),
                                  indexing="ij"), -1).reshape(-1, 2)
    coords = coords.astype(np.float32)
    edges = []
    for n in range(n_fine):
        i, j = divmod(n, side)
        for di, dj in ((0, 1), (1, 0), (0, -1), (-1, 0)):
            ni, nj = i + di, j + dj
            if 0 <= ni < side and 0 <= nj < side:
                edges.append((n, ni * side + nj))
    edge_index = np.asarray(edges, dtype=np.int32).T             # [2, 48]
    edge_attr_np = np.linalg.norm(coords[edge_index[0]] - coords[edge_index[1]],
                                  axis=-1, keepdims=True).astype(np.float32)

    # one pooling level: 2x2 blocks -> 4 clusters + centroids
    cluster = np.asarray([(i // 2) * 2 + (j // 2)
                          for i in range(side) for j in range(side)],
                         dtype=np.int32)
    centroids0 = np.stack([coords[cluster == c].mean(0)
                           for c in range(4)]).astype(np.float32)

    # one-time host preprocessing of the graph structure
    prep, static = preprocess_graph(edge_index, [cluster], [centroids0], n_fine)

    kx, kp = jax.random.split(key)
    x = jax.random.normal(kx, (n_fine, input_node_channel), jnp.float32)
    pos = jnp.asarray(coords)
    edge_attr = jnp.asarray(edge_attr_np)

    params = make_encoder_params(kp, input_node_channel, num_mp_layers,
                                 hidden_channels, n_mlp_mp)

    out_x, out_ea, edge_attrs, node_attrs = encoder_forward(
        params, x, edge_attr, pos, prep)
    out_x = jax.block_until_ready(out_x)
    out_ea = jax.block_until_ready(out_ea)

    n_coarse = centroids0.shape[0]
    assert out_x.shape == (n_coarse, hidden_channels), out_x.shape
    assert out_ea.shape == (static["edge_indices"][1].shape[1], 1), out_ea.shape
    assert len(edge_attrs) == len(num_mp_layers)
    assert len(node_attrs) == len(num_mp_layers)
    assert bool(jnp.all(jnp.isfinite(out_x)))
    assert bool(jnp.all(jnp.isfinite(out_ea)))
    print("KERNEL_OK")
</pallas_src>

<mosaic_0001>
module attributes {stable_mosaic.version = 11 : i64} {
  func.func @_encoder_kernel(%arg0: memref<16x3xf32, #tpu.memory_space<vmem>>, %arg1: memref<48x1xf32, #tpu.memory_space<vmem>>, %arg2: memref<3x32xf32, #tpu.memory_space<vmem>>, %arg3: memref<32x32xf32, #tpu.memory_space<vmem>>, %arg4: memref<1x32xf32, #tpu.memory_space<vmem>>, %arg5: memref<1x32xf32, #tpu.memory_space<vmem>>, %arg6: memref<2x32xf32, #tpu.memory_space<vmem>>, %arg7: memref<32x32xf32, #tpu.memory_space<vmem>>, %arg8: memref<1x32xf32, #tpu.memory_space<vmem>>, %arg9: memref<1x32xf32, #tpu.memory_space<vmem>>, %arg10: memref<64x32xf32, #tpu.memory_space<vmem>>, %arg11: memref<32x32xf32, #tpu.memory_space<vmem>>, %arg12: memref<1x32xf32, #tpu.memory_space<vmem>>, %arg13: memref<1x32xf32, #tpu.memory_space<vmem>>, %arg14: memref<1x32xf32, #tpu.memory_space<vmem>>, %arg15: memref<1x32xf32, #tpu.memory_space<vmem>>, %arg16: memref<1x32xf32, #tpu.memory_space<vmem>>, %arg17: memref<1x32xf32, #tpu.memory_space<vmem>>, %arg18: memref<1x32xf32, #tpu.memory_space<vmem>>, %arg19: memref<1x1xf32, #tpu.memory_space<vmem>>, %arg20: memref<16x48xf32, #tpu.memory_space<vmem>>, %arg21: memref<48x16xf32, #tpu.memory_space<vmem>>, %arg22: memref<32x32xf32, #tpu.memory_space<vmem>>, %arg23: memref<32x32xf32, #tpu.memory_space<vmem>>, %arg24: memref<1x32xf32, #tpu.memory_space<vmem>>, %arg25: memref<1x32xf32, #tpu.memory_space<vmem>>, %arg26: memref<1x32xf32, #tpu.memory_space<vmem>>, %arg27: memref<1x32xf32, #tpu.memory_space<vmem>>, %arg28: memref<1x32xf32, #tpu.memory_space<vmem>>, %arg29: memref<1x1xf32, #tpu.memory_space<vmem>>, %arg30: memref<4x8xf32, #tpu.memory_space<vmem>>, %arg31: memref<8x4xf32, #tpu.memory_space<vmem>>, %arg32: memref<32x32xf32, #tpu.memory_space<vmem>>, %arg33: memref<32x32xf32, #tpu.memory_space<vmem>>, %arg34: memref<1x32xf32, #tpu.memory_space<vmem>>, %arg35: memref<1x32xf32, #tpu.memory_space<vmem>>, %arg36: memref<8x48xf32, #tpu.memory_space<vmem>>, %arg37: memref<4x16xf32, #tpu.memory_space<vmem>>, %arg38: memref<16x2xf32, #tpu.memory_space<vmem>>, %arg39: memref<16x2xf32, #tpu.memory_space<vmem>>, %arg40: memref<16x32xf32, #tpu.memory_space<vmem>>, %arg41: memref<4x32xf32, #tpu.memory_space<vmem>>, %arg42: memref<48x1xf32, #tpu.memory_space<vmem>>, %arg43: memref<8x1xf32, #tpu.memory_space<vmem>>) attributes {dimension_semantics = [], scalar_prefetch = 0 : i64, scratch_operands = 0 : i64, tpu.core_type = #tpu.core_type<tc>} {
    %c0 = arith.constant 0 : index
    %c0_0 = arith.constant 0 : index
    %0 = vector.load %arg0[%c0, %c0_0] : memref<16x3xf32, #tpu.memory_space<vmem>>, vector<16x3xf32>
    %c0_1 = arith.constant 0 : index
    %c0_2 = arith.constant 0 : index
    %1 = vector.load %arg1[%c0_1, %c0_2] : memref<48x1xf32, #tpu.memory_space<vmem>>, vector<48x1xf32>
    %c0_3 = arith.constant 0 : index
    %c0_4 = arith.constant 0 : index
    %2 = vector.load %arg2[%c0_3, %c0_4] : memref<3x32xf32, #tpu.memory_space<vmem>>, vector<3x32xf32>
    %c0_5 = arith.constant 0 : index
    %c0_6 = arith.constant 0 : index
    %3 = vector.load %arg3[%c0_5, %c0_6] : memref<32x32xf32, #tpu.memory_space<vmem>>, vector<32x32xf32>
    %c0_7 = arith.constant 0 : index
    %c0_8 = arith.constant 0 : index
    %4 = vector.load %arg4[%c0_7, %c0_8] : memref<1x32xf32, #tpu.memory_space<vmem>>, vector<1x32xf32>
    %c0_9 = arith.constant 0 : index
    %c0_10 = arith.constant 0 : index
    %5 = vector.load %arg5[%c0_9, %c0_10] : memref<1x32xf32, #tpu.memory_space<vmem>>, vector<1x32xf32>
    %c0_11 = arith.constant 0 : index
    %c0_12 = arith.constant 0 : index
    %6 = vector.load %arg6[%c0_11, %c0_12] : memref<2x32xf32, #tpu.memory_space<vmem>>, vector<2x32xf32>
    %c0_13 = arith.constant 0 : index
    %c0_14 = arith.constant 0 : index
    %7 = vector.load %arg7[%c0_13, %c0_14] : memref<32x32xf32, #tpu.memory_space<vmem>>, vector<32x32xf32>
    %c0_15 = arith.constant 0 : index
    %c0_16 = arith.constant 0 : index
    %8 = vector.load %arg8[%c0_15, %c0_16] : memref<1x32xf32, #tpu.memory_space<vmem>>, vector<1x32xf32>
    %c0_17 = arith.constant 0 : index
    %c0_18 = arith.constant 0 : index
    %9 = vector.load %arg9[%c0_17, %c0_18] : memref<1x32xf32, #tpu.memory_space<vmem>>, vector<1x32xf32>
    %c0_19 = arith.constant 0 : index
    %c0_20 = arith.constant 0 : index
    %10 = vector.load %arg10[%c0_19, %c0_20] : memref<64x32xf32, #tpu.memory_space<vmem>>, vector<64x32xf32>
    %c0_21 = arith.constant 0 : index
    %c0_22 = arith.constant 0 : index
    %11 = vector.load %arg11[%c0_21, %c0_22] : memref<32x32xf32, #tpu.memory_space<vmem>>, vector<32x32xf32>
    %c0_23 = arith.constant 0 : index
    %c0_24 = arith.constant 0 : index
    %12 = vector.load %arg12[%c0_23, %c0_24] : memref<1x32xf32, #tpu.memory_space<vmem>>, vector<1x32xf32>
    %c0_25 = arith.constant 0 : index
    %c0_26 = arith.constant 0 : index
    %13 = vector.load %arg13[%c0_25, %c0_26] : memref<1x32xf32, #tpu.memory_space<vmem>>, vector<1x32xf32>
    %c0_27 = arith.constant 0 : index
    %c0_28 = arith.constant 0 : index
    %14 = vector.load %arg14[%c0_27, %c0_28] : memref<1x32xf32, #tpu.memory_space<vmem>>, vector<1x32xf32>
    %c0_29 = arith.constant 0 : index
    %c0_30 = arith.constant 0 : index
    %15 = vector.load %arg15[%c0_29, %c0_30] : memref<1x32xf32, #tpu.memory_space<vmem>>, vector<1x32xf32>
    %cst = arith.constant dense<0.000000e+00> : vector<16x32xf32>
    %16 = tpu.matmul %0, %2, %cst {dimension_numbers = #tpu.dot_dimension_numbers<[1], [0], [0], [1], [0, 0, 1, 1], [], []>} : vector<16x3xf32>, vector<3x32xf32>, vector<16x32xf32> -> vector<16x32xf32>
    %17 = vector.broadcast %4 : vector<1x32xf32> to vector<16x32xf32>
    %18 = arith.addf %16, %17 : vector<16x32xf32>
    %cst_31 = arith.constant 0.000000e+00 : f32
    %19 = vector.broadcast %cst_31 : f32 to vector<16x32xf32>
    %20 = arith.cmpf ogt, %18, %19 : vector<16x32xf32>
    %cst_32 = arith.constant 0.000000e+00 : f32
    %21 = vector.broadcast %cst_32 : f32 to vector<16x32xf32>
    %22 = arith.minimumf %18, %21 : vector<16x32xf32>
    %23 = math.exp %22 : vector<16x32xf32>
    %cst_33 = arith.constant 1.000000e+00 : f32
    %24 = vector.broadcast %cst_33 : f32 to vector<16x32xf32>
    %25 = arith.subf %23, %24 : vector<16x32xf32>
    %26 = arith.select %20, %18, %25 : vector<16x32xi1>, vector<16x32xf32>
    %cst_34 = arith.constant dense<0.000000e+00> : vector<16x32xf32>
    %27 = tpu.matmul %26, %3, %cst_34 {dimension_numbers = #tpu.dot_dimension_numbers<[1], [0], [0], [1], [0, 0, 1, 1], [], []>} : vector<16x32xf32>, vector<32x32xf32>, vector<16x32xf32> -> vector<16x32xf32>
    %28 = vector.broadcast %5 : vector<1x32xf32> to vector<16x32xf32>
    %29 = arith.addf %27, %28 : vector<16x32xf32>
    %cst_35 = arith.constant 0.000000e+00 : f32
    %30 = vector.broadcast %cst_35 : f32 to vector<16x32xf32>
    %31 = arith.cmpf ogt, %29, %30 : vector<16x32xf32>
    %cst_36 = arith.constant 0.000000e+00 : f32
    %32 = vector.broadcast %cst_36 : f32 to vector<16x32xf32>
    %33 = arith.minimumf %29, %32 : vector<16x32xf32>
    %34 = math.exp %33 : vector<16x32xf32>
    %cst_37 = arith.constant 1.000000e+00 : f32
    %35 = vector.broadcast %cst_37 : f32 to vector<16x32xf32>
    %36 = arith.subf %34, %35 : vector<16x32xf32>
    %37 = arith.select %31, %29, %36 : vector<16x32xi1>, vector<16x32xf32>
    %c0_38 = arith.constant 0 : index
    %c0_39 = arith.constant 0 : index
    %38 = vector.load %arg16[%c0_38, %c0_39] : memref<1x32xf32, #tpu.memory_space<vmem>>, vector<1x32xf32>
    %c0_40 = arith.constant 0 : index
    %c0_41 = arith.constant 0 : index
    %39 = vector.load %arg17[%c0_40, %c0_41] : memref<1x32xf32, #tpu.memory_space<vmem>>, vector<1x32xf32>
    %c0_42 = arith.constant 0 : index
    %c0_43 = arith.constant 0 : index
    %40 = vector.load %arg18[%c0_42, %c0_43] : memref<1x32xf32, #tpu.memory_space<vmem>>, vector<1x32xf32>
    %c0_44 = arith.constant 0 : index
    %c0_45 = arith.constant 0 : index
    %41 = vector.load %arg19[%c0_44, %c0_45] : memref<1x1xf32, #tpu.memory_space<vmem>>, vector<1x1xf32>
    %42 = vector.broadcast %1 : vector<48x1xf32> to vector<48x32xf32>
    %43 = vector.broadcast %38 : vector<1x32xf32> to vector<48x32xf32>
    %44 = arith.mulf %42, %43 : vector<48x32xf32>
    %45 = vector.broadcast %39 : vector<1x32xf32> to vector<48x32xf32>
    %46 = arith.addf %44, %45 : vector<48x32xf32>
    %cst_46 = arith.constant 0.000000e+00 : f32
    %47 = vector.broadcast %cst_46 : f32 to vector<48x32xf32>
    %48 = arith.cmpf ogt, %46, %47 : vector<48x32xf32>
    %cst_47 = arith.constant 0.000000e+00 : f32
    %49 = vector.broadcast %cst_47 : f32 to vector<48x32xf32>
    %50 = arith.minimumf %46, %49 : vector<48x32xf32>
    %51 = math.exp %50 : vector<48x32xf32>
    %cst_48 = arith.constant 1.000000e+00 : f32
    %52 = vector.broadcast %cst_48 : f32 to vector<48x32xf32>
    %53 = arith.subf %51, %52 : vector<48x32xf32>
    %54 = arith.select %48, %46, %53 : vector<48x32xi1>, vector<48x32xf32>
    %55 = vector.broadcast %40 : vector<1x32xf32> to vector<48x32xf32>
    %56 = arith.mulf %54, %55 : vector<48x32xf32>
    %cst_49 = arith.constant dense<0.000000e+00> : vector<48xf32>
    %57 = vector.multi_reduction <add>, %56, %cst_49 [1] : vector<48x32xf32> to vector<48xf32>
    %58 = vector.shape_cast %57 : vector<48xf32> to vector<48x1xf32>
    %59 = vector.broadcast %41 : vector<1x1xf32> to vector<48x1xf32>
    %60 = arith.addf %58, %59 : vector<48x1xf32>
    %cst_50 = arith.constant 0.000000e+00 : f32
    %61 = vector.broadcast %cst_50 : f32 to vector<48x1xf32>
    %62 = arith.cmpf ogt, %60, %61 : vector<48x1xf32>
    %cst_51 = arith.constant 0.000000e+00 : f32
    %63 = vector.broadcast %cst_51 : f32 to vector<48x1xf32>
    %64 = arith.minimumf %60, %63 : vector<48x1xf32>
    %65 = math.exp %64 : vector<48x1xf32>
    %cst_52 = arith.constant 1.000000e+00 : f32
    %66 = vector.broadcast %cst_52 : f32 to vector<48x1xf32>
    %67 = arith.subf %65, %66 : vector<48x1xf32>
    %68 = arith.select %62, %60, %67 : vector<48x1xi1>, vector<48x1xf32>
    %c0_53 = arith.constant 0 : index
    %c0_54 = arith.constant 0 : index
    %69 = vector.load %arg20[%c0_53, %c0_54] : memref<16x48xf32, #tpu.memory_space<vmem>>, vector<16x48xf32>
    %c0_55 = arith.constant 0 : index
    %c0_56 = arith.constant 0 : index
    %70 = vector.load %arg21[%c0_55, %c0_56] : memref<48x16xf32, #tpu.memory_space<vmem>>, vector<48x16xf32>
    %c0_57 = arith.constant 0 : index
    %c0_58 = arith.constant 0 : index
    %71 = vector.load %arg22[%c0_57, %c0_58] : memref<32x32xf32, #tpu.memory_space<vmem>>, vector<32x32xf32>
    %c0_59 = arith.constant 0 : index
    %c0_60 = arith.constant 0 : index
    %72 = vector.load %arg23[%c0_59, %c0_60] : memref<32x32xf32, #tpu.memory_space<vmem>>, vector<32x32xf32>
    %c0_61 = arith.constant 0 : index
    %c0_62 = arith.constant 0 : index
    %73 = vector.load %arg24[%c0_61, %c0_62] : memref<1x32xf32, #tpu.memory_space<vmem>>, vector<1x32xf32>
    %c0_63 = arith.constant 0 : index
    %c0_64 = arith.constant 0 : index
    %74 = vector.load %arg25[%c0_63, %c0_64] : memref<1x32xf32, #tpu.memory_space<vmem>>, vector<1x32xf32>
    %75 = vector.broadcast %68 : vector<48x1xf32> to vector<48x16xf32>
    %76 = arith.mulf %75, %70 : vector<48x16xf32>
    %cst_65 = arith.constant dense<0.000000e+00> : vector<16x16xf32>
    %77 = tpu.matmul %69, %76, %cst_65 {dimension_numbers = #tpu.dot_dimension_numbers<[1], [0], [0], [1], [0, 0, 1, 1], [], []>} : vector<16x48xf32>, vector<48x16xf32>, vector<16x16xf32> -> vector<16x16xf32>
    %78 = tpu.iota {dimensions = array<i32: 0>} : vector<16x16xi32>
    %79 = tpu.iota {dimensions = array<i32: 1>} : vector<16x16xi32>
    %80 = arith.cmpi eq, %78, %79 : vector<16x16xi32>
    %cst_66 = arith.constant 1.000000e+00 : f32
    %cst_67 = arith.constant 0.000000e+00 : f32
    %81 = vector.broadcast %cst_66 : f32 to vector<16x16xf32>
    %82 = vector.broadcast %cst_67 : f32 to vector<16x16xf32>
    %83 = arith.select %80, %81, %82 : vector<16x16xi1>, vector<16x16xf32>
    %84 = arith.addf %77, %83 : vector<16x16xf32>
    %cst_68 = arith.constant dense<0.000000e+00> : vector<16xf32>
    %85 = vector.multi_reduction <add>, %84, %cst_68 [1] : vector<16x16xf32> to vector<16xf32>
    %86 = vector.shape_cast %85 : vector<16xf32> to vector<16x1xf32>
    %cst_69 = arith.constant 0.000000e+00 : f32
    %87 = vector.broadcast %cst_69 : f32 to vector<16x1xf32>
    %88 = arith.cmpf ogt, %86, %87 : vector<16x1xf32>
    %cst_70 = arith.constant 9.99999996E-13 : f32
    %89 = vector.broadcast %cst_70 : f32 to vector<16x1xf32>
    %90 = arith.maximumf %86, %89 : vector<16x1xf32>
    %91 = math.rsqrt %90 : vector<16x1xf32>
    %cst_71 = arith.constant 0.000000e+00 : f32
    %92 = vector.broadcast %cst_71 : f32 to vector<16x1xf32>
    %93 = arith.select %88, %91, %92 : vector<16x1xi1>, vector<16x1xf32>
    %94 = vector.broadcast %93 : vector<16x1xf32> to vector<16x16xf32>
    %95 = arith.mulf %94, %84 : vector<16x16xf32>
    %96 = vector.broadcast %93 : vector<16x1xf32> to vector<16x16xf32>
    %97 = arith.mulf %83, %96 : vector<16x16xf32>
    %cst_72 = arith.constant dense<0.000000e+00> : vector<16x16xf32>
    %98 = tpu.matmul %95, %97, %cst_72 {dimension_numbers = #tpu.dot_dimension_numbers<[1], [0], [0], [1], [0, 0, 1, 1], [], []>} : vector<16x16xf32>, vector<16x16xf32>, vector<16x16xf32> -> vector<16x16xf32>
    %cst_73 = arith.constant dense<0.000000e+00> : vector<16x32xf32>
    %99 = tpu.matmul %37, %71, %cst_73 {dimension_numbers = #tpu.dot_dimension_numbers<[1], [0], [0], [1], [0, 0, 1, 1], [], []>} : vector<16x32xf32>, vector<32x32xf32>, vector<16x32xf32> -> vector<16x32xf32>
    %cst_74 = arith.constant dense<0.000000e+00> : vector<16x32xf32>
    %100 = tpu.matmul %98, %99, %cst_74 {dimension_numbers = #tpu.dot_dimension_numbers<[1], [0], [0], [1], [0, 0, 1, 1], [], []>} : vector<16x16xf32>, vector<16x32xf32>, vector<16x32xf32> -> vector<16x32xf32>
    %101 = vector.broadcast %73 : vector<1x32xf32> to vector<16x32xf32>
    %102 = arith.addf %100, %101 : vector<16x32xf32>
    %cst_75 = arith.constant 0.000000e+00 : f32
    %103 = vector.broadcast %cst_75 : f32 to vector<16x32xf32>
    %104 = arith.cmpf ogt, %102, %103 : vector<16x32xf32>
    %cst_76 = arith.constant 0.000000e+00 : f32
    %105 = vector.broadcast %cst_76 : f32 to vector<16x32xf32>
    %106 = arith.minimumf %102, %105 : vector<16x32xf32>
    %107 = math.exp %106 : vector<16x32xf32>
    %cst_77 = arith.constant 1.000000e+00 : f32
    %108 = vector.broadcast %cst_77 : f32 to vector<16x32xf32>
    %109 = arith.subf %107, %108 : vector<16x32xf32>
    %110 = arith.select %104, %102, %109 : vector<16x32xi1>, vector<16x32xf32>
    %cst_78 = arith.constant dense<0.000000e+00> : vector<16x32xf32>
    %111 = tpu.matmul %110, %72, %cst_78 {dimension_numbers = #tpu.dot_dimension_numbers<[1], [0], [0], [1], [0, 0, 1, 1], [], []>} : vector<16x32xf32>, vector<32x32xf32>, vector<16x32xf32> -> vector<16x32xf32>
    %cst_79 = arith.constant dense<0.000000e+00> : vector<16x32xf32>
    %112 = tpu.matmul %98, %111, %cst_79 {dimension_numbers = #tpu.dot_dimension_numbers<[1], [0], [0], [1], [0, 0, 1, 1], [], []>} : vector<16x16xf32>, vector<16x32xf32>, vector<16x32xf32> -> vector<16x32xf32>
    %113 = vector.broadcast %74 : vector<1x32xf32> to vector<16x32xf32>
    %114 = arith.addf %112, %113 : vector<16x32xf32>
    %cst_80 = arith.constant 0.000000e+00 : f32
    %115 = vector.broadcast %cst_80 : f32 to vector<16x32xf32>
    %116 = arith.cmpf ogt, %114, %115 : vector<16x32xf32>
    %cst_81 = arith.constant 0.000000e+00 : f32
    %117 = vector.broadcast %cst_81 : f32 to vector<16x32xf32>
    %118 = arith.minimumf %114, %117 : vector<16x32xf32>
    %119 = math.exp %118 : vector<16x32xf32>
    %cst_82 = arith.constant 1.000000e+00 : f32
    %120 = vector.broadcast %cst_82 : f32 to vector<16x32xf32>
    %121 = arith.subf %119, %120 : vector<16x32xf32>
    %122 = arith.select %116, %114, %121 : vector<16x32xi1>, vector<16x32xf32>
    %c0_83 = arith.constant 0 : index
    %c0_84 = arith.constant 0 : index
    %123 = vector.load %arg40[%c0_83, %c0_84] : memref<16x32xf32, #tpu.memory_space<vmem>>, vector<16x32xf32>
    tpu.vector_store %arg40[%c0_83, %c0_84], %122 {strides = array<i32>} : memref<16x32xf32, #tpu.memory_space<vmem>>, vector<16x32xf32>,
    %c0_85 = arith.constant 0 : index
    %c0_86 = arith.constant 0 : index
    %124 = vector.load %arg42[%c0_85, %c0_86] : memref<48x1xf32, #tpu.memory_space<vmem>>, vector<48x1xf32>
    tpu.vector_store %arg42[%c0_85, %c0_86], %68 {strides = array<i32>} : memref<48x1xf32, #tpu.memory_space<vmem>>, vector<48x1xf32>,
    %c0_87 = arith.constant 0 : index
    %c0_88 = arith.constant 0 : index
    %125 = vector.load %arg36[%c0_87, %c0_88] : memref<8x48xf32, #tpu.memory_space<vmem>>, vector<8x48xf32>
    %cst_89 = arith.constant dense<0.000000e+00> : vector<8x1xf32>
    %126 = tpu.matmul %125, %68, %cst_89 {dimension_numbers = #tpu.dot_dimension_numbers<[1], [0], [0], [1], [0, 0, 1, 1], [], []>} : vector<8x48xf32>, vector<48x1xf32>, vector<8x1xf32> -> vector<8x1xf32>
    %c0_90 = arith.constant 0 : index
    %c0_91 = arith.constant 0 : index
    %127 = vector.load %arg26[%c0_90, %c0_91] : memref<1x32xf32, #tpu.memory_space<vmem>>, vector<1x32xf32>
    %c0_92 = arith.constant 0 : index
    %c0_93 = arith.constant 0 : index
    %128 = vector.load %arg27[%c0_92, %c0_93] : memref<1x32xf32, #tpu.memory_space<vmem>>, vector<1x32xf32>
    %c0_94 = arith.constant 0 : index
    %c0_95 = arith.constant 0 : index
    %129 = vector.load %arg28[%c0_94, %c0_95] : memref<1x32xf32, #tpu.memory_space<vmem>>, vector<1x32xf32>
    %c0_96 = arith.constant 0 : index
    %c0_97 = arith.constant 0 : index
    %130 = vector.load %arg29[%c0_96, %c0_97] : memref<1x1xf32, #tpu.memory_space<vmem>>, vector<1x1xf32>
    %131 = vector.broadcast %126 : vector<8x1xf32> to vector<8x32xf32>
    %132 = vector.broadcast %127 : vector<1x32xf32> to vector<8x32xf32>
    %133 = arith.mulf %131, %132 : vector<8x32xf32>
    %134 = vector.broadcast %128 : vector<1x32xf32> to vector<8x32xf32>
    %135 = arith.addf %133, %134 : vector<8x32xf32>
    %cst_98 = arith.constant 0.000000e+00 : f32
    %136 = vector.broadcast %cst_98 : f32 to vector<8x32xf32>
    %137 = arith.cmpf ogt, %135, %136 : vector<8x32xf32>
    %cst_99 = arith.constant 0.000000e+00 : f32
    %138 = vector.broadcast %cst_99 : f32 to vector<8x32xf32>
    %139 = arith.minimumf %135, %138 : vector<8x32xf32>
    %140 = math.exp %139 : vector<8x32xf32>
    %cst_100 = arith.constant 1.000000e+00 : f32
    %141 = vector.broadcast %cst_100 : f32 to vector<8x32xf32>
    %142 = arith.subf %140, %141 : vector<8x32xf32>
    %143 = arith.select %137, %135, %142 : vector<8x32xi1>, vector<8x32xf32>
    %144 = vector.broadcast %129 : vector<1x32xf32> to vector<8x32xf32>
    %145 = arith.mulf %143, %144 : vector<8x32xf32>
    %cst_101 = arith.constant dense<0.000000e+00> : vector<8xf32>
    %146 = vector.multi_reduction <add>, %145, %cst_101 [1] : vector<8x32xf32> to vector<8xf32>
    %147 = vector.shape_cast %146 : vector<8xf32> to vector<8x1xf32>
    %148 = vector.broadcast %130 : vector<1x1xf32> to vector<8x1xf32>
    %149 = arith.addf %147, %148 : vector<8x1xf32>
    %cst_102 = arith.constant 0.000000e+00 : f32
    %150 = vector.broadcast %cst_102 : f32 to vector<8x1xf32>
    %151 = arith.cmpf ogt, %149, %150 : vector<8x1xf32>
    %cst_103 = arith.constant 0.000000e+00 : f32
    %152 = vector.broadcast %cst_103 : f32 to vector<8x1xf32>
    %153 = arith.minimumf %149, %152 : vector<8x1xf32>
    %154 = math.exp %153 : vector<8x1xf32>
    %cst_104 = arith.constant 1.000000e+00 : f32
    %155 = vector.broadcast %cst_104 : f32 to vector<8x1xf32>
    %156 = arith.subf %154, %155 : vector<8x1xf32>
    %157 = arith.select %151, %149, %156 : vector<8x1xi1>, vector<8x1xf32>
    %c0_105 = arith.constant 0 : index
    %c0_106 = arith.constant 0 : index
    %158 = vector.load %arg38[%c0_105, %c0_106] : memref<16x2xf32, #tpu.memory_space<vmem>>, vector<16x2xf32>
    %c0_107 = arith.constant 0 : index
    %c0_108 = arith.constant 0 : index
    %159 = vector.load %arg39[%c0_107, %c0_108] : memref<16x2xf32, #tpu.memory_space<vmem>>, vector<16x2xf32>
    %160 = arith.subf %158, %159 : vector<16x2xf32>
    %161 = arith.mulf %160, %160 : vector<16x2xf32>
    %cst_109 = arith.constant dense<0.000000e+00> : vector<16xf32>
    %162 = vector.multi_reduction <add>, %161, %cst_109 [1] : vector<16x2xf32> to vector<16xf32>
    %163 = vector.shape_cast %162 : vector<16xf32> to vector<16x1xf32>
    %164 = math.sqrt %163 : vector<16x1xf32>
    %cst_110 = arith.constant 9.99999993E-9 : f32
    %165 = vector.broadcast %cst_110 : f32 to vector<16x1xf32>
    %166 = arith.addf %164, %165 : vector<16x1xf32>
    %167 = vector.broadcast %166 : vector<16x1xf32> to vector<16x2xf32>
    %168 = arith.divf %160, %167 : vector<16x2xf32>
    %cst_111 = arith.constant dense<0.000000e+00> : vector<16x32xf32>
    %169 = tpu.matmul %168, %6, %cst_111 {dimension_numbers = #tpu.dot_dimension_numbers<[1], [0], [0], [1], [0, 0, 1, 1], [], []>} : vector<16x2xf32>, vector<2x32xf32>, vector<16x32xf32> -> vector<16x32xf32>
    %170 = vector.broadcast %8 : vector<1x32xf32> to vector<16x32xf32>
    %171 = arith.addf %169, %170 : vector<16x32xf32>
    %cst_112 = arith.constant 0.000000e+00 : f32
    %172 = vector.broadcast %cst_112 : f32 to vector<16x32xf32>
    %173 = arith.cmpf ogt, %171, %172 : vector<16x32xf32>
    %cst_113 = arith.constant 0.000000e+00 : f32
    %174 = vector.broadcast %cst_113 : f32 to vector<16x32xf32>
    %175 = arith.minimumf %171, %174 : vector<16x32xf32>
    %176 = math.exp %175 : vector<16x32xf32>
    %cst_114 = arith.constant 1.000000e+00 : f32
    %177 = vector.broadcast %cst_114 : f32 to vector<16x32xf32>
    %178 = arith.subf %176, %177 : vector<16x32xf32>
    %179 = arith.select %173, %171, %178 : vector<16x32xi1>, vector<16x32xf32>
    %cst_115 = arith.constant dense<0.000000e+00> : vector<16x32xf32>
    %180 = tpu.matmul %179, %7, %cst_115 {dimension_numbers = #tpu.dot_dimension_numbers<[1], [0], [0], [1], [0, 0, 1, 1], [], []>} : vector<16x32xf32>, vector<32x32xf32>, vector<16x32xf32> -> vector<16x32xf32>
    %181 = vector.broadcast %9 : vector<1x32xf32> to vector<16x32xf32>
    %182 = arith.addf %180, %181 : vector<16x32xf32>
    %cst_116 = arith.constant 0.000000e+00 : f32
    %183 = vector.broadcast %cst_116 : f32 to vector<16x32xf32>
    %184 = arith.cmpf ogt, %182, %183 : vector<16x32xf32>
    %cst_117 = arith.constant 0.000000e+00 : f32
    %185 = vector.broadcast %cst_117 : f32 to vector<16x32xf32>
    %186 = arith.minimumf %182, %185 : vector<16x32xf32>
    %187 = math.exp %186 : vector<16x32xf32>
    %cst_118 = arith.constant 1.000000e+00 : f32
    %188 = vector.broadcast %cst_118 : f32 to vector<16x32xf32>
    %189 = arith.subf %187, %188 : vector<16x32xf32>
    %190 = arith.select %184, %182, %189 : vector<16x32xi1>, vector<16x32xf32>
    %191 = vector.extract_strided_slice %10 {offsets = [0, 0], sizes = [32, 32], strides = [1, 1]} : vector<64x32xf32> to vector<32x32xf32>
    %cst_119 = arith.constant dense<0.000000e+00> : vector<16x32xf32>
    %192 = tpu.matmul %190, %191, %cst_119 {dimension_numbers = #tpu.dot_dimension_numbers<[1], [0], [0], [1], [0, 0, 1, 1], [], []>} : vector<16x32xf32>, vector<32x32xf32>, vector<16x32xf32> -> vector<16x32xf32>
    %193 = vector.extract_strided_slice %10 {offsets = [32, 0], sizes = [32, 32], strides = [1, 1]} : vector<64x32xf32> to vector<32x32xf32>
    %cst_120 = arith.constant dense<0.000000e+00> : vector<16x32xf32>
    %194 = tpu.matmul %122, %193, %cst_120 {dimension_numbers = #tpu.dot_dimension_numbers<[1], [0], [0], [1], [0, 0, 1, 1], [], []>} : vector<16x32xf32>, vector<32x32xf32>, vector<16x32xf32> -> vector<16x32xf32>
    %195 = arith.addf %192, %194 : vector<16x32xf32>
    %196 = vector.broadcast %12 : vector<1x32xf32> to vector<16x32xf32>
    %197 = arith.addf %195, %196 : vector<16x32xf32>
    %cst_121 = arith.constant 0.000000e+00 : f32
    %198 = vector.broadcast %cst_121 : f32 to vector<16x32xf32>
    %199 = arith.cmpf ogt, %197, %198 : vector<16x32xf32>
    %cst_122 = arith.constant 0.000000e+00 : f32
    %200 = vector.broadcast %cst_122 : f32 to vector<16x32xf32>
    %201 = arith.minimumf %197, %200 : vector<16x32xf32>
    %202 = math.exp %201 : vector<16x32xf32>
    %cst_123 = arith.constant 1.000000e+00 : f32
    %203 = vector.broadcast %cst_123 : f32 to vector<16x32xf32>
    %204 = arith.subf %202, %203 : vector<16x32xf32>
    %205 = arith.select %199, %197, %204 : vector<16x32xi1>, vector<16x32xf32>
    %cst_124 = arith.constant dense<0.000000e+00> : vector<16x32xf32>
    %206 = tpu.matmul %205, %11, %cst_124 {dimension_numbers = #tpu.dot_dimension_numbers<[1], [0], [0], [1], [0, 0, 1, 1], [], []>} : vector<16x32xf32>, vector<32x32xf32>, vector<16x32xf32> -> vector<16x32xf32>
    %207 = vector.broadcast %13 : vector<1x32xf32> to vector<16x32xf32>
    %208 = arith.addf %206, %207 : vector<16x32xf32>
    %cst_125 = arith.constant 0.000000e+00 : f32
    %209 = vector.broadcast %cst_125 : f32 to vector<16x32xf32>
    %210 = arith.cmpf ogt, %208, %209 : vector<16x32xf32>
    %cst_126 = arith.constant 0.000000e+00 : f32
    %211 = vector.broadcast %cst_126 : f32 to vector<16x32xf32>
    %212 = arith.minimumf %208, %211 : vector<16x32xf32>
    %213 = math.exp %212 : vector<16x32xf32>
    %cst_127 = arith.constant 1.000000e+00 : f32
    %214 = vector.broadcast %cst_127 : f32 to vector<16x32xf32>
    %215 = arith.subf %213, %214 : vector<16x32xf32>
    %216 = arith.select %210, %208, %215 : vector<16x32xi1>, vector<16x32xf32>
    %217 = arith.addf %190, %216 : vector<16x32xf32>
    %cst_128 = arith.constant dense<0.000000e+00> : vector<16xf32>
    %218 = vector.multi_reduction <add>, %217, %cst_128 [1] : vector<16x32xf32> to vector<16xf32>
    %219 = vector.shape_cast %218 : vector<16xf32> to vector<16x1xf32>
    %cst_129 = arith.constant 3.200000e+01 : f32
    %220 = vector.broadcast %cst_129 : f32 to vector<16x1xf32>
    %221 = arith.divf %219, %220 : vector<16x1xf32>
    %222 = vector.broadcast %221 : vector<16x1xf32> to vector<16x32xf32>
    %223 = arith.subf %217, %222 : vector<16x32xf32>
    %224 = arith.mulf %223, %223 : vector<16x32xf32>
    %cst_130 = arith.constant dense<0.000000e+00> : vector<16xf32>
    %225 = vector.multi_reduction <add>, %224, %cst_130 [1] : vector<16x32xf32> to vector<16xf32>
    %226 = vector.shape_cast %225 : vector<16xf32> to vector<16x1xf32>
    %cst_131 = arith.constant 3.200000e+01 : f32
    %227 = vector.broadcast %cst_131 : f32 to vector<16x1xf32>
    %228 = arith.divf %226, %227 : vector<16x1xf32>
    %229 = vector.broadcast %221 : vector<16x1xf32> to vector<16x32xf32>
    %230 = arith.subf %217, %229 : vector<16x32xf32>
    %cst_132 = arith.constant 9.99999974E-6 : f32
    %231 = vector.broadcast %cst_132 : f32 to vector<16x1xf32>
    %232 = arith.addf %228, %231 : vector<16x1xf32>
    %233 = math.rsqrt %232 : vector<16x1xf32>
    %234 = vector.broadcast %233 : vector<16x1xf32> to vector<16x32xf32>
    %235 = arith.mulf %230, %234 : vector<16x32xf32>
    %236 = vector.broadcast %14 : vector<1x32xf32> to vector<16x32xf32>
    %237 = arith.mulf %235, %236 : vector<16x32xf32>
    %238 = vector.broadcast %15 : vector<1x32xf32> to vector<16x32xf32>
    %239 = arith.addf %237, %238 : vector<16x32xf32>
    %c0_133 = arith.constant 0 : index
    %c0_134 = arith.constant 0 : index
    %240 = vector.load %arg37[%c0_133, %c0_134] : memref<4x16xf32, #tpu.memory_space<vmem>>, vector<4x16xf32>
    %cst_135 = arith.constant dense<0.000000e+00> : vector<4x32xf32>
    %241 = tpu.matmul %240, %239, %cst_135 {dimension_numbers = #tpu.dot_dimension_numbers<[1], [0], [0], [1], [0, 0, 1, 1], [], []>} : vector<4x16xf32>, vector<16x32xf32>, vector<4x32xf32> -> vector<4x32xf32>
    %c0_136 = arith.constant 0 : index
    %c0_137 = arith.constant 0 : index
    %242 = vector.load %arg30[%c0_136, %c0_137] : memref<4x8xf32, #tpu.memory_space<vmem>>, vector<4x8xf32>
    %c0_138 = arith.constant 0 : index
    %c0_139 = arith.constant 0 : index
    %243 = vector.load %arg31[%c0_138, %c0_139] : memref<8x4xf32, #tpu.memory_space<vmem>>, vector<8x4xf32>
    %c0_140 = arith.constant 0 : index
    %c0_141 = arith.constant 0 : index
    %244 = vector.load %arg32[%c0_140, %c0_141] : memref<32x32xf32, #tpu.memory_space<vmem>>, vector<32x32xf32>
    %c0_142 = arith.constant 0 : index
    %c0_143 = arith.constant 0 : index
    %245 = vector.load %arg33[%c0_142, %c0_143] : memref<32x32xf32, #tpu.memory_space<vmem>>, vector<32x32xf32>
    %c0_144 = arith.constant 0 : index
    %c0_145 = arith.constant 0 : index
    %246 = vector.load %arg34[%c0_144, %c0_145] : memref<1x32xf32, #tpu.memory_space<vmem>>, vector<1x32xf32>
    %c0_146 = arith.constant 0 : index
    %c0_147 = arith.constant 0 : index
    %247 = vector.load %arg35[%c0_146, %c0_147] : memref<1x32xf32, #tpu.memory_space<vmem>>, vector<1x32xf32>
    %248 = vector.broadcast %157 : vector<8x1xf32> to vector<8x4xf32>
    %249 = arith.mulf %248, %243 : vector<8x4xf32>
    %cst_148 = arith.constant dense<0.000000e+00> : vector<4x4xf32>
    %250 = tpu.matmul %242, %249, %cst_148 {dimension_numbers = #tpu.dot_dimension_numbers<[1], [0], [0], [1], [0, 0, 1, 1], [], []>} : vector<4x8xf32>, vector<8x4xf32>, vector<4x4xf32> -> vector<4x4xf32>
    %251 = tpu.iota {dimensions = array<i32: 0>} : vector<4x4xi32>
    %252 = tpu.iota {dimensions = array<i32: 1>} : vector<4x4xi32>
    %253 = arith.cmpi eq, %251, %252 : vector<4x4xi32>
    %cst_149 = arith.constant 1.000000e+00 : f32
    %cst_150 = arith.constant 0.000000e+00 : f32
    %254 = vector.broadcast %cst_149 : f32 to vector<4x4xf32>
    %255 = vector.broadcast %cst_150 : f32 to vector<4x4xf32>
    %256 = arith.select %253, %254, %255 : vector<4x4xi1>, vector<4x4xf32>
    %257 = arith.addf %250, %256 : vector<4x4xf32>
    %cst_151 = arith.constant dense<0.000000e+00> : vector<4xf32>
    %258 = vector.multi_reduction <add>, %257, %cst_151 [1] : vector<4x4xf32> to vector<4xf32>
    %259 = vector.shape_cast %258 : vector<4xf32> to vector<4x1xf32>
    %cst_152 = arith.constant 0.000000e+00 : f32
    %260 = vector.broadcast %cst_152 : f32 to vector<4x1xf32>
    %261 = arith.cmpf ogt, %259, %260 : vector<4x1xf32>
    %cst_153 = arith.constant 9.99999996E-13 : f32
    %262 = vector.broadcast %cst_153 : f32 to vector<4x1xf32>
    %263 = arith.maximumf %259, %262 : vector<4x1xf32>
    %264 = math.rsqrt %263 : vector<4x1xf32>
    %cst_154 = arith.constant 0.000000e+00 : f32
    %265 = vector.broadcast %cst_154 : f32 to vector<4x1xf32>
    %266 = arith.select %261, %264, %265 : vector<4x1xi1>, vector<4x1xf32>
    %267 = vector.broadcast %266 : vector<4x1xf32> to vector<4x4xf32>
    %268 = arith.mulf %267, %257 : vector<4x4xf32>
    %269 = vector.broadcast %266 : vector<4x1xf32> to vector<4x4xf32>
    %270 = arith.mulf %256, %269 : vector<4x4xf32>
    %cst_155 = arith.constant dense<0.000000e+00> : vector<4x4xf32>
    %271 = tpu.matmul %268, %270, %cst_155 {dimension_numbers = #tpu.dot_dimension_numbers<[1], [0], [0], [1], [0, 0, 1, 1], [], []>} : vector<4x4xf32>, vector<4x4xf32>, vector<4x4xf32> -> vector<4x4xf32>
    %cst_156 = arith.constant dense<0.000000e+00> : vector<4x32xf32>
    %272 = tpu.matmul %241, %244, %cst_156 {dimension_numbers = #tpu.dot_dimension_numbers<[1], [0], [0], [1], [0, 0, 1, 1], [], []>} : vector<4x32xf32>, vector<32x32xf32>, vector<4x32xf32> -> vector<4x32xf32>
    %cst_157 = arith.constant dense<0.000000e+00> : vector<4x32xf32>
    %273 = tpu.matmul %271, %272, %cst_157 {dimension_numbers = #tpu.dot_dimension_numbers<[1], [0], [0], [1], [0, 0, 1, 1], [], []>} : vector<4x4xf32>, vector<4x32xf32>, vector<4x32xf32> -> vector<4x32xf32>
    %274 = vector.broadcast %246 : vector<1x32xf32> to vector<4x32xf32>
    %275 = arith.addf %273, %274 : vector<4x32xf32>
    %cst_158 = arith.constant 0.000000e+00 : f32
    %276 = vector.broadcast %cst_158 : f32 to vector<4x32xf32>
    %277 = arith.cmpf ogt, %275, %276 : vector<4x32xf32>
    %cst_159 = arith.constant 0.000000e+00 : f32
    %278 = vector.broadcast %cst_159 : f32 to vector<4x32xf32>
    %279 = arith.minimumf %275, %278 : vector<4x32xf32>
    %280 = math.exp %279 : vector<4x32xf32>
    %cst_160 = arith.constant 1.000000e+00 : f32
    %281 = vector.broadcast %cst_160 : f32 to vector<4x32xf32>
    %282 = arith.subf %280, %281 : vector<4x32xf32>
    %283 = arith.select %277, %275, %282 : vector<4x32xi1>, vector<4x32xf32>
    %cst_161 = arith.constant dense<0.000000e+00> : vector<4x32xf32>
    %284 = tpu.matmul %283, %245, %cst_161 {dimension_numbers = #tpu.dot_dimension_numbers<[1], [0], [0], [1], [0, 0, 1, 1], [], []>} : vector<4x32xf32>, vector<32x32xf32>, vector<4x32xf32> -> vector<4x32xf32>
    %cst_162 = arith.constant dense<0.000000e+00> : vector<4x32xf32>
    %285 = tpu.matmul %271, %284, %cst_162 {dimension_numbers = #tpu.dot_dimension_numbers<[1], [0], [0], [1], [0, 0, 1, 1], [], []>} : vector<4x4xf32>, vector<4x32xf32>, vector<4x32xf32> -> vector<4x32xf32>
    %286 = vector.broadcast %247 : vector<1x32xf32> to vector<4x32xf32>
    %287 = arith.addf %285, %286 : vector<4x32xf32>
    %cst_163 = arith.constant 0.000000e+00 : f32
    %288 = vector.broadcast %cst_163 : f32 to vector<4x32xf32>
    %289 = arith.cmpf ogt, %287, %288 : vector<4x32xf32>
    %cst_164 = arith.constant 0.000000e+00 : f32
    %290 = vector.broadcast %cst_164 : f32 to vector<4x32xf32>
    %291 = arith.minimumf %287, %290 : vector<4x32xf32>
    %292 = math.exp %291 : vector<4x32xf32>
    %cst_165 = arith.constant 1.000000e+00 : f32
    %293 = vector.broadcast %cst_165 : f32 to vector<4x32xf32>
    %294 = arith.subf %292, %293 : vector<4x32xf32>
    %295 = arith.select %289, %287, %294 : vector<4x32xi1>, vector<4x32xf32>
    %c0_166 = arith.constant 0 : index
    %c0_167 = arith.constant 0 : index
    %296 = vector.load %arg41[%c0_166, %c0_167] : memref<4x32xf32, #tpu.memory_space<vmem>>, vector<4x32xf32>
    tpu.vector_store %arg41[%c0_166, %c0_167], %295 {strides = array<i32>} : memref<4x32xf32, #tpu.memory_space<vmem>>, vector<4x32xf32>,
    %c0_168 = arith.constant 0 : index
    %c0_169 = arith.constant 0 : index
    %297 = vector.load %arg43[%c0_168, %c0_169] : memref<8x1xf32, #tpu.memory_space<vmem>>, vector<8x1xf32>
    tpu.vector_store %arg43[%c0_168, %c0_169], %157 {strides = array<i32>} : memref<8x1xf32, #tpu.memory_space<vmem>>, vector<8x1xf32>,
    return
  }
}

</mosaic_0001>

<llo_original>
// kernel: encoder_forward.1
$region0: #{encoder_forward.1}
  #allocation0 [shape = 'u32[]', space=smem, size = 0x4, offset = 0x4, fixed_abs, tag = 'smem constant byte address 0x4 - core index']
  #allocation1 [shape = 'u32[144,128]{1,0:T(1,128)}', space=vmem, size = 0x12000, scoped, tag = 'internal scratch']
  #allocation2 [shape = 'f32[1,1]{1,0:T(1,128)S(1)}', space=vmem, size = 0x200, scoped, tag = 'scoped memory for encoder_forward.1']
  #allocation3 [shape = 'f32[1,1]{1,0:T(1,128)S(1)}', space=vmem, size = 0x200, scoped, tag = 'scoped memory for encoder_forward.1']
  %s0 = inlined_call_operand.smem [shape: u32[44], index: -1, kind: input, shape index: {}]
  %s1 = sld [smem:[%s0]]
  %s2 = scalar_lea.smem %s0, 1
  %s3 = sld [smem:[%s2]]
  %s4 = scalar_lea.smem %s0, 2
  %s5 = sld [smem:[%s4]]
  %s6 = scalar_lea.smem %s0, 3
  %s7 = sld [smem:[%s6]]
  %s8 = scalar_lea.smem %s0, 4
  %s9 = sld [smem:[%s8]]
  %s10 = scalar_lea.smem %s0, 5
  %s11 = sld [smem:[%s10]]
  %s12 = scalar_lea.smem %s0, 6
  %s13 = sld [smem:[%s12]]
  %s14 = scalar_lea.smem %s0, 7
  %s15 = sld [smem:[%s14]]
  %s16 = scalar_lea.smem %s0, 8
  %s17 = sld [smem:[%s16]]
  %s18 = scalar_lea.smem %s0, 9
  %s19 = sld [smem:[%s18]]
  %s20 = scalar_lea.smem %s0, 10
  %s21 = sld [smem:[%s20]]
  %s22 = scalar_lea.smem %s0, 11
  %s23 = sld [smem:[%s22]]
  %s24 = scalar_lea.smem %s0, 12
  %s25 = sld [smem:[%s24]]
  %s26 = scalar_lea.smem %s0, 13
  %s27 = sld [smem:[%s26]]
  %s28 = scalar_lea.smem %s0, 14
  %s29 = sld [smem:[%s28]]
  %s30 = scalar_lea.smem %s0, 15
  %s31 = sld [smem:[%s30]]
  %s32 = scalar_lea.smem %s0, 16
  %s33 = sld [smem:[%s32]]
  %s34 = scalar_lea.smem %s0, 17
  %s35 = sld [smem:[%s34]]
  %s36 = scalar_lea.smem %s0, 18
  %s37 = sld [smem:[%s36]]
  %s38 = scalar_lea.smem %s0, 19
  %s39 = sld [smem:[%s38]]
  %s40 = scalar_lea.smem %s0, 20
  %s41 = sld [smem:[%s40]]
  %s42 = scalar_lea.smem %s0, 21
  %s43 = sld [smem:[%s42]]
  %s44 = scalar_lea.smem %s0, 22
  %s45 = sld [smem:[%s44]]
  %s46 = scalar_lea.smem %s0, 23
  %s47 = sld [smem:[%s46]]
  %s48 = scalar_lea.smem %s0, 24
  %s49 = sld [smem:[%s48]]
  %s50 = scalar_lea.smem %s0, 25
  %s51 = sld [smem:[%s50]]
  %s52 = scalar_lea.smem %s0, 26
  %s53 = sld [smem:[%s52]]
  %s54 = scalar_lea.smem %s0, 27
  %s55 = sld [smem:[%s54]]
  %s56 = scalar_lea.smem %s0, 28
  %s57 = sld [smem:[%s56]]
  %s58 = scalar_lea.smem %s0, 29
  %s59 = sld [smem:[%s58]]
  %s60 = scalar_lea.smem %s0, 30
  %s61 = sld [smem:[%s60]]
  %s62 = scalar_lea.smem %s0, 31
  %s63 = sld [smem:[%s62]]
  %s64 = scalar_lea.smem %s0, 32
  %s65 = sld [smem:[%s64]]
  %s66 = scalar_lea.smem %s0, 33
  %s67 = sld [smem:[%s66]]
  %s68 = scalar_lea.smem %s0, 34
  %s69 = sld [smem:[%s68]]
  %s70 = scalar_lea.smem %s0, 35
  %s71 = sld [smem:[%s70]]
  %s72 = scalar_lea.smem %s0, 36
  %s73 = sld [smem:[%s72]]
  %s74 = scalar_lea.smem %s0, 37
  %s75 = sld [smem:[%s74]]
  %s76 = scalar_lea.smem %s0, 38
  %s77 = sld [smem:[%s76]]
  %s78 = scalar_lea.smem %s0, 39
  %s79 = sld [smem:[%s78]]
  %s80 = scalar_lea.smem %s0, 40
  %s81 = sld [smem:[%s80]]
  %s82 = scalar_lea.smem %s0, 41
  %s83 = sld [smem:[%s82]]
  %s84 = scalar_lea.smem %s0, 42
  %s85 = sld [smem:[%s84]]
  %s86 = scalar_lea.smem %s0, 43
  %s87 = sld [smem:[%s86]]
  %88 = xla_tuple %s81, %s83, %s85, %s87
  %s89 = sld [smem:[#allocation0]]
  $region262: #{encoder_forward.1} parent=0
    _
  %s91 = ssub.s32 1, %s89
  %s92 = scalar_select 0, %s91, %s89
  %v93 = vstv %s39
  %94 = vst [vmem:[#allocation2] sm:$0x1] %v93
  %v95 = vstv %s59
  %96 = vst [vmem:[#allocation3] sm:$0x1] %v95
  $region1: #{encoder_forward.1} parent=0
    #allocation4 [shape = 'u8[1024]{0}', space=vmem, size = 0x400, scoped, tag = 'input window, operand 6, single buffered']
    #allocation5 [shape = 's32[1]{0}', space=sflag, size = 0x4, scoped, tag = 'scoped memory for encoder_forward.1']
    #allocation6 [shape = 's32[1]{0}', space=sflag, size = 0x4, scoped, tag = 'scoped memory for encoder_forward.1']
    #allocation7 [shape = 'u8[512]{0}', space=vmem, size = 0x400, scoped, tag = 'input window, operand 8, single buffered']
    #allocation8 [shape = 's32[1]{0}', space=sflag, size = 0x4, scoped, tag = 'scoped memory for encoder_forward.1']
    #allocation9 [shape = 'u8[512]{0}', space=vmem, size = 0x400, scoped, tag = 'input window, operand 9, single buffered']
    #allocation10 [shape = 'u8[512]{0}', space=vmem, size = 0x400, scoped, tag = 'input window, operand 12, single buffered']
    #allocation11 [shape = 's32[1]{0}', space=sflag, size = 0x4, scoped, tag = 'scoped memory for encoder_forward.1']
    #allocation12 [shape = 'u8[512]{0}', space=vmem, size = 0x400, scoped, tag = 'input window, operand 13, single buffered']
    #allocation13 [shape = 'u8[512]{0}', space=vmem, size = 0x400, scoped, tag = 'input window, operand 14, single buffered']
    #allocation14 [shape = 's32[1]{0}', space=sflag, size = 0x4, scoped, tag = 'scoped memory for encoder_forward.1']
    #allocation15 [shape = 'u8[512]{0}', space=vmem, size = 0x400, scoped, tag = 'input window, operand 15, single buffered']
    #allocation16 [shape = 'u8[512]{0}', space=vmem, size = 0x400, scoped, tag = 'input window, operand 16, single buffered']
    #allocation17 [shape = 's32[1]{0}', space=sflag, size = 0x4, scoped, tag = 'scoped memory for encoder_forward.1']
    #allocation18 [shape = 'u8[512]{0}', space=vmem, size = 0x400, scoped, tag = 'input window, operand 17, single buffered']
    #allocation19 [shape = 'u8[512]{0}', space=vmem, size = 0x400, scoped, tag = 'input window, operand 18, single buffered']
    #allocation20 [shape = 's32[1]{0}', space=sflag, size = 0x4, scoped, tag = 'scoped memory for encoder_forward.1']
    #allocation21 [shape = 'u8[512]{0}', space=vmem, size = 0x400, scoped, tag = 'input window, operand 24, single buffered']
    #allocation22 [shape = 'u8[512]{0}', space=vmem, size = 0x400, scoped, tag = 'input window, operand 25, single buffered']
    #allocation23 [shape = 's32[1]{0}', space=sflag, size = 0x4, scoped, tag = 'scoped memory for encoder_forward.1']
    #allocation24 [shape = 'u8[512]{0}', space=vmem, size = 0x400, scoped, tag = 'input window, operand 26, single buffered']
    #allocation25 [shape = 'u8[512]{0}', space=vmem, size = 0x400, scoped, tag = 'input window, operand 27, single buffered']
    #allocation26 [shape = 's32[1]{0}', space=sflag, size = 0x4, scoped, tag = 'scoped memory for encoder_forward.1']
    #allocation27 [shape = 'u8[512]{0}', space=vmem, size = 0x400, scoped, tag = 'input window, operand 28, single buffered']
    #allocation28 [shape = 'u8[512]{0}', space=vmem, size = 0x400, scoped, tag = 'input window, operand 34, single buffered']
    #allocation29 [shape = 's32[1]{0}', space=sflag, size = 0x4, scoped, tag = 'scoped memory for encoder_forward.1']
    #allocation30 [shape = 'u8[512]{0}', space=vmem, size = 0x400, scoped, tag = 'input window, operand 35, single buffered']
    #allocation31 [shape = 'u8[8192]{0}', space=vmem, size = 0x2000, scoped, tag = 'output window, operand 0, single buffered']
    %97 = vsyncpa [#allocation5], 0
    %98 = vsyncpa [#allocation8], 0
    %99 = vsyncpa [#allocation11], 0
    %100 = vsyncpa [#allocation14], 0
    %101 = vsyncpa [#allocation17], 0
    %102 = vsyncpa [#allocation20], 0
    %103 = vsyncpa [#allocation23], 0
    %104 = vsyncpa [#allocation26], 0
    %105 = vsyncpa [#allocation29], 0
    %106 = vsyncpa [#allocation6], 0
    // Predicated region
    $region2: #{encoder_forward.1} parent=1 // pred_check
      _
    $region3: #{encoder_forward.1} parent=1 // pred_check_branch
      %108 = sbr.rel (0) target = $region5
    $region4: #{encoder_forward.1} parent=1 // pred_region
      _
    $region5: #{encoder_forward.1} parent=1 // pred_fallthru
      _
    // Predicated region
    $region6: #{encoder_forward.1} parent=1 // pred_check
      _
    $region7: #{encoder_forward.1} parent=1 // pred_check_branch
      %110 = sbr.rel (0) target = $region9
    $region8: #{encoder_forward.1} parent=1 // pred_region
      _
    $region9: #{encoder_forward.1} parent=1 // pred_fallthru
      _
    // Predicated region
    $region10: #{encoder_forward.1} parent=1 // pred_check
      _
    $region11: #{encoder_forward.1} parent=1 // pred_check_branch
      %112 = sbr.rel (0) target = $region13
    $region12: #{encoder_forward.1} parent=1 // pred_region
      _
    $region13: #{encoder_forward.1} parent=1 // pred_fallthru
      _
    // Predicated region
    $region14: #{encoder_forward.1} parent=1 // pred_check
      _
    $region15: #{encoder_forward.1} parent=1 // pred_check_branch
      %114 = sbr.rel (0) target = $region17
    $region16: #{encoder_forward.1} parent=1 // pred_region
      _
    $region17: #{encoder_forward.1} parent=1 // pred_fallthru
      _
    // Predicated region
    $region18: #{encoder_forward.1} parent=1 // pred_check
      _
    $region19: #{encoder_forward.1} parent=1 // pred_check_branch
      %116 = sbr.rel (0) target = $region21
    $region20: #{encoder_forward.1} parent=1 // pred_region
      _
    $region21: #{encoder_forward.1} parent=1 // pred_fallthru
      _
    // Predicated region
    $region22: #{encoder_forward.1} parent=1 // pred_check
      _
    $region23: #{encoder_forward.1} parent=1 // pred_check_branch
      %118 = sbr.rel (0) target = $region25
    $region24: #{encoder_forward.1} parent=1 // pred_region
      _
    $region25: #{encoder_forward.1} parent=1 // pred_fallthru
      _
    // Predicated region
    $region26: #{encoder_forward.1} parent=1 // pred_check
      _
    $region27: #{encoder_forward.1} parent=1 // pred_check_branch
      %120 = sbr.rel (0) target = $region29
    $region28: #{encoder_forward.1} parent=1 // pred_region
      %s122 = ssub.s32 32, 32
      %123 = vsyncadd [#allocation5], %s122
      %s125 = sshll.u32 [#allocation4], 4
      %s126 = int_to_ptr.vmem [resolvable:$true] %s125
      %128 = dma.hbm_to_vmem [thread:$0]  %s13, 32, %s126, [#allocation5]
    $region29: #{encoder_forward.1} parent=1 // pred_fallthru
      _
    // Predicated region
    $region30: #{encoder_forward.1} parent=1 // pred_check
      _
    $region31: #{encoder_forward.1} parent=1 // pred_check_branch
      %130 = sbr.rel (0) target = $region33
    $region32: #{encoder_forward.1} parent=1 // pred_region
      _
    $region33: #{encoder_forward.1} parent=1 // pred_fallthru
      _
    // Predicated region
    $region34: #{encoder_forward.1} parent=1 // pred_check
      _
    $region35: #{encoder_forward.1} parent=1 // pred_check_branch
      %132 = sbr.rel (0) target = $region37
    $region36: #{encoder_forward.1} parent=1 // pred_region
      %s134 = ssub.s32 16, 16
      %135 = vsyncadd [#allocation8], %s134
      %s137 = sshll.u32 [#allocation7], 4
      %s138 = int_to_ptr.vmem [resolvable:$true] %s137
      %140 = dma.hbm_to_vmem [thread:$0]  %s17, 16, %s138, [#allocation8]
    $region37: #{encoder_forward.1} parent=1 // pred_fallthru
      _
    // Predicated region
    $region38: #{encoder_forward.1} parent=1 // pred_check
      _
    $region39: #{encoder_forward.1} parent=1 // pred_check_branch
      %142 = sbr.rel (0) target = $region41
    $region40: #{encoder_forward.1} parent=1 // pred_region
      %s144 = ssub.s32 16, 16
      %145 = vsyncadd [#allocation8], %s144
      %s147 = sshll.u32 [#allocation9], 4
      %s148 = int_to_ptr.vmem [resolvable:$true] %s147
      %150 = dma.hbm_to_vmem [thread:$0]  %s19, 16, %s148, [#allocation8]
    $region41: #{encoder_forward.1} parent=1 // pred_fallthru
      _
    // Predicated region
    $region42: #{encoder_forward.1} parent=1 // pred_check
      _
    $region43: #{encoder_forward.1} parent=1 // pred_check_branch
      %152 = sbr.rel (0) target = $region45
    $region44: #{encoder_forward.1} parent=1 // pred_region
      _
    $region45: #{encoder_forward.1} parent=1 // pred_fallthru
      _
    // Predicated region
    $region46: #{encoder_forward.1} parent=1 // pred_check
      _
    $region47: #{encoder_forward.1} parent=1 // pred_check_branch
      %154 = sbr.rel (0) target = $region49
    $region48: #{encoder_forward.1} parent=1 // pred_region
      _
    $region49: #{encoder_forward.1} parent=1 // pred_fallthru
      _
    // Predicated region
    $region50: #{encoder_forward.1} parent=1 // pred_check
      _
    $region51: #{encoder_forward.1} parent=1 // pred_check_branch
      %156 = sbr.rel (0) target = $region53
    $region52: #{encoder_forward.1} parent=1 // pred_region
      %s158 = ssub.s32 16, 16
      %159 = vsyncadd [#allocation11], %s158
      %s161 = sshll.u32 [#allocation10], 4
      %s162 = int_to_ptr.vmem [resolvable:$true] %s161
      %164 = dma.hbm_to_vmem [thread:$0]  %s25, 16, %s162, [#allocation11]
    $region53: #{encoder_forward.1} parent=1 // pred_fallthru
      _
    // Predicated region
    $region54: #{encoder_forward.1} parent=1 // pred_check
      _
    $region55: #{encoder_forward.1} parent=1 // pred_check_branch
      %166 = sbr.rel (0) target = $region57
    $region56: #{encoder_forward.1} parent=1 // pred_region
      %s168 = ssub.s32 16, 16
      %169 = vsyncadd [#allocation11], %s168
      %s171 = sshll.u32 [#allocation12], 4
      %s172 = int_to_ptr.vmem [resolvable:$true] %s171
      %174 = dma.hbm_to_vmem [thread:$0]  %s27, 16, %s172, [#allocation11]
    $region57: #{encoder_forward.1} parent=1 // pred_fallthru
      _
    // Predicated region
    $region58: #{encoder_forward.1} parent=1 // pred_check
      _
    $region59: #{encoder_forward.1} parent=1 // pred_check_branch
      %176 = sbr.rel (0) target = $region61
    $region60: #{encoder_forward.1} parent=1 // pred_region
      %s178 = ssub.s32 16, 16
      %179 = vsyncadd [#allocation14], %s178
      %s181 = sshll.u32 [#allocation13], 4
      %s182 = int_to_ptr.vmem [resolvable:$true] %s181
      %184 = dma.hbm_to_vmem [thread:$0]  %s29, 16, %s182, [#allocation14]
    $region61: #{encoder_forward.1} parent=1 // pred_fallthru
      _
    // Predicated region
    $region62: #{encoder_forward.1} parent=1 // pred_check
      _
    $region63: #{encoder_forward.1} parent=1 // pred_check_branch
      %186 = sbr.rel (0) target = $region65
    $region64: #{encoder_forward.1} parent=1 // pred_region
      %s188 = ssub.s32 16, 16
      %189 = vsyncadd [#allocation14], %s188
      %s191 = sshll.u32 [#allocation15], 4
      %s192 = int_to_ptr.vmem [resolvable:$true] %s191
      %194 = dma.hbm_to_vmem [thread:$0]  %s31, 16, %s192, [#allocation14]
    $region65: #{encoder_forward.1} parent=1 // pred_fallthru
      _
    // Predicated region
    $region66: #{encoder_forward.1} parent=1 // pred_check
      _
    $region67: #{encoder_forward.1} parent=1 // pred_check_branch
      %196 = sbr.rel (0) target = $region69
    $region68: #{encoder_forward.1} parent=1 // pred_region
      %s198 = ssub.s32 16, 16
      %199 = vsyncadd [#allocation17], %s198
      %s201 = sshll.u32 [#allocation16], 4
      %s202 = int_to_ptr.vmem [resolvable:$true] %s201
      %204 = dma.hbm_to_vmem [thread:$0]  %s33, 16, %s202, [#allocation17]
    $region69: #{encoder_forward.1} parent=1 // pred_fallthru
      _
    // Predicated region
    $region70: #{encoder_forward.1} parent=1 // pred_check
      _
    $region71: #{encoder_forward.1} parent=1 // pred_check_branch
      %206 = sbr.rel (0) target = $region73
    $region72: #{encoder_forward.1} parent=1 // pred_region
      %s208 = ssub.s32 16, 16
      %209 = vsyncadd [#allocation17], %s208
      %s211 = sshll.u32 [#allocation18], 4
      %s212 = int_to_ptr.vmem [resolvable:$true] %s211
      %214 = dma.hbm_to_vmem [thread:$0]  %s35, 16, %s212, [#allocation17]
    $region73: #{encoder_forward.1} parent=1 // pred_fallthru
      _
    // Predicated region
    $region74: #{encoder_forward.1} parent=1 // pred_check
      _
    $region75: #{encoder_forward.1} parent=1 // pred_check_branch
      %216 = sbr.rel (0) target = $region77
    $region76: #{encoder_forward.1} parent=1 // pred_region
      %s218 = ssub.s32 16, 16
      %219 = vsyncadd [#allocation20], %s218
      %s221 = sshll.u32 [#allocation19], 4
      %s222 = int_to_ptr.vmem [resolvable:$true] %s221
      %224 = dma.hbm_to_vmem [thread:$0]  %s37, 16, %s222, [#allocation20]
    $region77: #{encoder_forward.1} parent=1 // pred_fallthru
      _
    // Predicated region
    $region78: #{encoder_forward.1} parent=1 // pred_check
      _
    $region79: #{encoder_forward.1} parent=1 // pred_check_branch
      %226 = sbr.rel (0) target = $region81
    $region80: #{encoder_forward.1} parent=1 // pred_region
      _
    $region81: #{encoder_forward.1} parent=1 // pred_fallthru
      _
    // Predicated region
    $region82: #{encoder_forward.1} parent=1 // pred_check
      _
    $region83: #{encoder_forward.1} parent=1 // pred_check_branch
      %228 = sbr.rel (0) target = $region85
    $region84: #{encoder_forward.1} parent=1 // pred_region
      _
    $region85: #{encoder_forward.1} parent=1 // pred_fallthru
      _
    // Predicated region
    $region86: #{encoder_forward.1} parent=1 // pred_check
      _
    $region87: #{encoder_forward.1} parent=1 // pred_check_branch
      %230 = sbr.rel (0) target = $region89
    $region88: #{encoder_forward.1} parent=1 // pred_region
      _
    $region89: #{encoder_forward.1} parent=1 // pred_fallthru
      _
    // Predicated region
    $region90: #{encoder_forward.1} parent=1 // pred_check
      _
    $region91: #{encoder_forward.1} parent=1 // pred_check_branch
      %232 = sbr.rel (0) target = $region93
    $region92: #{encoder_forward.1} parent=1 // pred_region
      _
    $region93: #{encoder_forward.1} parent=1 // pred_fallthru
      _
    // Predicated region
    $region94: #{encoder_forward.1} parent=1 // pred_check
      _
    $region95: #{encoder_forward.1} parent=1 // pred_check_branch
      %234 = sbr.rel (0) target = $region97
    $region96: #{encoder_forward.1} parent=1 // pred_region
      _
    $region97: #{encoder_forward.1} parent=1 // pred_fallthru
      _
    // Predicated region
    $region98: #{encoder_forward.1} parent=1 // pred_check
      _
    $region99: #{encoder_forward.1} parent=1 // pred_check_branch
      %236 = sbr.rel (0) target = $region101
    $region100: #{encoder_forward.1} parent=1 // pred_region
      %s238 = ssub.s32 16, 16
      %239 = vsyncadd [#allocation20], %s238
      %s241 = sshll.u32 [#allocation21], 4
      %s242 = int_to_ptr.vmem [resolvable:$true] %s241
      %244 = dma.hbm_to_vmem [thread:$0]  %s49, 16, %s242, [#allocation20]
    $region101: #{encoder_forward.1} parent=1 // pred_fallthru
      _
    // Predicated region
    $region102: #{encoder_forward.1} parent=1 // pred_check
      _
    $region103: #{encoder_forward.1} parent=1 // pred_check_branch
      %246 = sbr.rel (0) target = $region105
    $region104: #{encoder_forward.1} parent=1 // pred_region
      %s248 = ssub.s32 16, 16
      %249 = vsyncadd [#allocation23], %s248
      %s251 = sshll.u32 [#allocation22], 4
      %s252 = int_to_ptr.vmem [resolvable:$true] %s251
      %254 = dma.hbm_to_vmem [thread:$0]  %s51, 16, %s252, [#allocation23]
    $region105: #{encoder_forward.1} parent=1 // pred_fallthru
      _
    // Predicated region
    $region106: #{encoder_forward.1} parent=1 // pred_check
      _
    $region107: #{encoder_forward.1} parent=1 // pred_check_branch
      %256 = sbr.rel (0) target = $region109
    $region108: #{encoder_forward.1} parent=1 // pred_region
      %s258 = ssub.s32 16, 16
      %259 = vsyncadd [#allocation23], %s258
      %s261 = sshll.u32 [#allocation24], 4
      %s262 = int_to_ptr.vmem [resolvable:$true] %s261
      %264 = dma.hbm_to_vmem [thread:$0]  %s53, 16, %s262, [#allocation23]
    $region109: #{encoder_forward.1} parent=1 // pred_fallthru
      _
    // Predicated region
    $region110: #{encoder_forward.1} parent=1 // pred_check
      _
    $region111: #{encoder_forward.1} parent=1 // pred_check_branch
      %266 = sbr.rel (0) target = $region113
    $region112: #{encoder_forward.1} parent=1 // pred_region
      %s268 = ssub.s32 16, 16
      %269 = vsyncadd [#allocation26], %s268
      %s271 = sshll.u32 [#allocation25], 4
      %s272 = int_to_ptr.vmem [resolvable:$true] %s271
      %274 = dma.hbm_to_vmem [thread:$0]  %s55, 16, %s272, [#allocation26]
    $region113: #{encoder_forward.1} parent=1 // pred_fallthru
      _
    // Predicated region
    $region114: #{encoder_forward.1} parent=1 // pred_check
      _
    $region115: #{encoder_forward.1} parent=1 // pred_check_branch
      %276 = sbr.rel (0) target = $region117
    $region116: #{encoder_forward.1} parent=1 // pred_region
      %s278 = ssub.s32 16, 16
      %279 = vsyncadd [#allocation26], %s278
      %s281 = sshll.u32 [#allocation27], 4
      %s282 = int_to_ptr.vmem [resolvable:$true] %s281
      %284 = dma.hbm_to_vmem [thread:$0]  %s57, 16, %s282, [#allocation26]
    $region117: #{encoder_forward.1} parent=1 // pred_fallthru
      _
    // Predicated region
    $region118: #{encoder_forward.1} parent=1 // pred_check
      _
    $region119: #{encoder_forward.1} parent=1 // pred_check_branch
      %286 = sbr.rel (0) target = $region121
    $region120: #{encoder_forward.1} parent=1 // pred_region
      _
    $region121: #{encoder_forward.1} parent=1 // pred_fallthru
      _
    // Predicated region
    $region122: #{encoder_forward.1} parent=1 // pred_check
      _
    $region123: #{encoder_forward.1} parent=1 // pred_check_branch
      %288 = sbr.rel (0) target = $region125
    $region124: #{encoder_forward.1} parent=1 // pred_region
      _
    $region125: #{encoder_forward.1} parent=1 // pred_fallthru
      _
    // Predicated region
    $region126: #{encoder_forward.1} parent=1 // pred_check
      _
    $region127: #{encoder_forward.1} parent=1 // pred_check_branch
      %290 = sbr.rel (0) target = $region129
    $region128: #{encoder_forward.1} parent=1 // pred_region
      _
    $region129: #{encoder_forward.1} parent=1 // pred_fallthru
      _
    // Predicated region
    $region130: #{encoder_forward.1} parent=1 // pred_check
      _
    $region131: #{encoder_forward.1} parent=1 // pred_check_branch
      %292 = sbr.rel (0) target = $region133
    $region132: #{encoder_forward.1} parent=1 // pred_region
      _
    $region133: #{encoder_forward.1} parent=1 // pred_fallthru
      _
    // Predicated region
    $region134: #{encoder_forward.1} parent=1 // pred_check
      _
    $region135: #{encoder_forward.1} parent=1 // pred_check_branch
      %294 = sbr.rel (0) target = $region137
    $region136: #{encoder_forward.1} parent=1 // pred_region
      _
    $region137: #{encoder_forward.1} parent=1 // pred_fallthru
      _
    // Predicated region
    $region138: #{encoder_forward.1} parent=1 // pred_check
      _
    $region139: #{encoder_forward.1} parent=1 // pred_check_branch
      %296 = sbr.rel (0) target = $region141
    $region140: #{encoder_forward.1} parent=1 // pred_region
      %s298 = ssub.s32 16, 16
      %299 = vsyncadd [#allocation29], %s298
      %s301 = sshll.u32 [#allocation28], 4
      %s302 = int_to_ptr.vmem [resolvable:$true] %s301
      %304 = dma.hbm_to_vmem [thread:$0]  %s69, 16, %s302, [#allocation29]
    $region141: #{encoder_forward.1} parent=1 // pred_fallthru
      _
    // Predicated region
    $region142: #{encoder_forward.1} parent=1 // pred_check
      _
    $region143: #{encoder_forward.1} parent=1 // pred_check_branch
      %306 = sbr.rel (0) target = $region145
    $region144: #{encoder_forward.1} parent=1 // pred_region
      %s308 = ssub.s32 16, 16
      %309 = vsyncadd [#allocation29], %s308
      %s311 = sshll.u32 [#allocation30], 4
      %s312 = int_to_ptr.vmem [resolvable:$true] %s311
      %314 = dma.hbm_to_vmem [thread:$0]  %s71, 16, %s312, [#allocation29]
    $region145: #{encoder_forward.1} parent=1 // pred_fallthru
      _
    // Predicated region
    $region146: #{encoder_forward.1} parent=1 // pred_check
      _
    $region147: #{encoder_forward.1} parent=1 // pred_check_branch
      %316 = sbr.rel (0) target = $region149
    $region148: #{encoder_forward.1} parent=1 // pred_region
      _
    $region149: #{encoder_forward.1} parent=1 // pred_fallthru
      _
    // Predicated region
    $region150: #{encoder_forward.1} parent=1 // pred_check
      _
    $region151: #{encoder_forward.1} parent=1 // pred_check_branch
      %318 = sbr.rel (0) target = $region153
    $region152: #{encoder_forward.1} parent=1 // pred_region
      _
    $region153: #{encoder_forward.1} parent=1 // pred_fallthru
      _
    // Predicated region
    $region154: #{encoder_forward.1} parent=1 // pred_check
      _
    $region155: #{encoder_forward.1} parent=1 // pred_check_branch
      %320 = sbr.rel (0) target = $region157
    $region156: #{encoder_forward.1} parent=1 // pred_region
      _
    $region157: #{encoder_forward.1} parent=1 // pred_fallthru
      _
    // Predicated region
    $region158: #{encoder_forward.1} parent=1 // pred_check
      _
    $region159: #{encoder_forward.1} parent=1 // pred_check_branch
      %322 = sbr.rel (0) target = $region161
    $region160: #{encoder_forward.1} parent=1 // pred_region
      _
    $region161: #{encoder_forward.1} parent=1 // pred_fallthru
      _
    // Predicated region
    $region162: #{encoder_forward.1} parent=1 // pred_check
      _
    $region163: #{encoder_forward.1} parent=1 // pred_check_branch
      %324 = sbr.rel (0) target = $region165
    $region164: #{encoder_forward.1} parent=1 // pred_region
      %325 = dma.done [#allocation5], 32
    $region165: #{encoder_forward.1} parent=1 // pred_fallthru
      _
    // Predicated region
    $region166: #{encoder_forward.1} parent=1 // pred_check
      _
    $region167: #{encoder_forward.1} parent=1 // pred_check_branch
      %327 = sbr.rel (0) target = $region169
    $region168: #{encoder_forward.1} parent=1 // pred_region
      %328 = dma.done [#allocation8], 16
    $region169: #{encoder_forward.1} parent=1 // pred_fallthru
      _
    // Predicated region
    $region170: #{encoder_forward.1} parent=1 // pred_check
      _
    $region171: #{encoder_forward.1} parent=1 // pred_check_branch
      %330 = sbr.rel (0) target = $region173
    $region172: #{encoder_forward.1} parent=1 // pred_region
      %331 = dma.done [#allocation8], 16
    $region173: #{encoder_forward.1} parent=1 // pred_fallthru
      _
    // Predicated region
    $region174: #{encoder_forward.1} parent=1 // pred_check
      _
    $region175: #{encoder_forward.1} parent=1 // pred_check_branch
      %333 = sbr.rel (0) target = $region177
    $region176: #{encoder_forward.1} parent=1 // pred_region
      %334 = dma.done [#allocation11], 16
    $region177: #{encoder_forward.1} parent=1 // pred_fallthru
      _
    // Predicated region
    $region178: #{encoder_forward.1} parent=1 // pred_check
      _
    $region179: #{encoder_forward.1} parent=1 // pred_check_branch
      %336 = sbr.rel (0) target = $region181
    $region180: #{encoder_forward.1} parent=1 // pred_region
      %337 = dma.done [#allocation11], 16
    $region181: #{encoder_forward.1} parent=1 // pred_fallthru
      _
    // Predicated region
    $region182: #{encoder_forward.1} parent=1 // pred_check
      _
    $region183: #{encoder_forward.1} parent=1 // pred_check_branch
      %339 = sbr.rel (0) target = $region185
    $region184: #{encoder_forward.1} parent=1 // pred_region
      %340 = dma.done [#allocation14], 16
    $region185: #{encoder_forward.1} parent=1 // pred_fallthru
      _
    // Predicated region
    $region186: #{encoder_forward.1} parent=1 // pred_check
      _
    $region187: #{encoder_forward.1} parent=1 // pred_check_branch
      %342 = sbr.rel (0) target = $region189
    $region188: #{encoder_forward.1} parent=1 // pred_region
      %343 = dma.done [#allocation14], 16
    $region189: #{encoder_forward.1} parent=1 // pred_fallthru
      _
    // Predicated region
    $region190: #{encoder_forward.1} parent=1 // pred_check
      _
    $region191: #{encoder_forward.1} parent=1 // pred_check_branch
      %345 = sbr.rel (0) target = $region193
    $region192: #{encoder_forward.1} parent=1 // pred_region
      %346 = dma.done [#allocation17], 16
    $region193: #{encoder_forward.1} parent=1 // pred_fallthru
      _
    // Predicated region
    $region194: #{encoder_forward.1} parent=1 // pred_check
      _
    $region195: #{encoder_forward.1} parent=1 // pred_check_branch
      %348 = sbr.rel (0) target = $region197
    $region196: #{encoder_forward.1} parent=1 // pred_region
      %349 = dma.done [#allocation17], 16
    $region197: #{encoder_forward.1} parent=1 // pred_fallthru
      _
    // Predicated region
    $region198: #{encoder_forward.1} parent=1 // pred_check
      _
    $region199: #{encoder_forward.1} parent=1 // pred_check_branch
      %351 = sbr.rel (0) target = $region201
    $region200: #{encoder_forward.1} parent=1 // pred_region
      %352 = dma.done [#allocation20], 16
    $region201: #{encoder_forward.1} parent=1 // pred_fallthru
      _
    // Predicated region
    $region202: #{encoder_forward.1} parent=1 // pred_check
      _
    $region203: #{encoder_forward.1} parent=1 // pred_check_branch
      %354 = sbr.rel (0) target = $region205
    $region204: #{encoder_forward.1} parent=1 // pred_region
      %355 = dma.done [#allocation20], 16
    $region205: #{encoder_forward.1} parent=1 // pred_fallthru
      _
    // Predicated region
    $region206: #{encoder_forward.1} parent=1 // pred_check
      _
    $region207: #{encoder_forward.1} parent=1 // pred_check_branch
      %357 = sbr.rel (0) target = $region209
    $region208: #{encoder_forward.1} parent=1 // pred_region
      %358 = dma.done [#allocation23], 16
    $region209: #{encoder_forward.1} parent=1 // pred_fallthru
      _
    // Predicated region
    $region210: #{encoder_forward.1} parent=1 // pred_check
      _
    $region211: #{encoder_forward.1} parent=1 // pred_check_branch
      %360 = sbr.rel (0) target = $region213
    $region212: #{encoder_forward.1} parent=1 // pred_region
      %361 = dma.done [#allocation23], 16
    $region213: #{encoder_forward.1} parent=1 // pred_fallthru
      _
    // Predicated region
    $region214: #{encoder_forward.1} parent=1 // pred_check
      _
    $region215: #{encoder_forward.1} parent=1 // pred_check_branch
      %363 = sbr.rel (0) target = $region217
    $region216: #{encoder_forward.1} parent=1 // pred_region
      %364 = dma.done [#allocation26], 16
    $region217: #{encoder_forward.1} parent=1 // pred_fallthru
      _
    // Predicated region
    $region218: #{encoder_forward.1} parent=1 // pred_check
      _
    $region219: #{encoder_forward.1} parent=1 // pred_check_branch
      %366 = sbr.rel (0) target = $region221
    $region220: #{encoder_forward.1} parent=1 // pred_region
      %367 = dma.done [#allocation26], 16
    $region221: #{encoder_forward.1} parent=1 // pred_fallthru
      _
    // Predicated region
    $region222: #{encoder_forward.1} parent=1 // pred_check
      _
    $region223: #{encoder_forward.1} parent=1 // pred_check_branch
      %369 = sbr.rel (0) target = $region225
    $region224: #{encoder_forward.1} parent=1 // pred_region
      %370 = dma.done [#allocation29], 16
    $region225: #{encoder_forward.1} parent=1 // pred_fallthru
      _
    // Predicated region
    $region226: #{encoder_forward.1} parent=1 // pred_check
      _
    $region227: #{encoder_forward.1} parent=1 // pred_check_branch
      %372 = sbr.rel (0) target = $region229
    $region228: #{encoder_forward.1} parent=1 // pred_region
      %373 = dma.done [#allocation29], 16
    $region229: #{encoder_forward.1} parent=1 // pred_fallthru
      _
    %v374 = vld [vmem:[%s1] sm:$0xff]
    %v375 = vld [vmem:[%s1 + $0x8] sm:$0xff]
    %v376 = vld [vmem:[%s3] sm:$0xff]
    %v377 = vld [vmem:[%s3 + $0x8] sm:$0xff]
    %v378 = vld [vmem:[%s3 + $0x10] sm:$0xff]
    %v379 = vld [vmem:[%s3 + $0x18] sm:$0xff]
    %v380 = vld [vmem:[%s3 + $0x20] sm:$0xff]
    %v381 = vld [vmem:[%s3 + $0x28] sm:$0xff]
    %v382 = vld [vmem:[%s5] sm:$0x7]
    %v383 = vld [vmem:[%s7] sm:$0xff]
    %v384 = vld [vmem:[%s7 + $0x8] sm:$0xff]
    %v385 = vld [vmem:[%s7 + $0x10] sm:$0xff]
    %v386 = vld [vmem:[%s7 + $0x18] sm:$0xff]
    %v387 = vld [vmem:[%s9] sm:$0x1]
    %v388 = vld [vmem:[%s11] sm:$0x1]
    %v389 = vld [vmem:[#allocation4] sm:$0x3]
    %v390 = vld [vmem:[%s15] sm:$0xff]
    %v391 = vld [vmem:[%s15 + $0x8] sm:$0xff]
    %v392 = vld [vmem:[%s15 + $0x10] sm:$0xff]
    %v393 = vld [vmem:[%s15 + $0x18] sm:$0xff]
    %v394 = vld [vmem:[#allocation7] sm:$0x1]
    %v395 = vld [vmem:[#allocation9] sm:$0x1]
    %v396 = vld [vmem:[%s21] sm:$0xff]
    %v397 = vld [vmem:[%s21 + $0x8] sm:$0xff]
    %v398 = vld [vmem:[%s21 + $0x10] sm:$0xff]
    %v399 = vld [vmem:[%s21 + $0x18] sm:$0xff]
    %v400 = vld [vmem:[%s21 + $0x20] sm:$0xff]
    %v401 = vld [vmem:[%s21 + $0x28] sm:$0xff]
    %v402 = vld [vmem:[%s21 + $0x30] sm:$0xff]
    %v403 = vld [vmem:[%s21 + $0x38] sm:$0xff]
    %v404 = vld [vmem:[%s23] sm:$0xff]
    %v405 = vld [vmem:[%s23 + $0x8] sm:$0xff]
    %v406 = vld [vmem:[%s23 + $0x10] sm:$0xff]
    %v407 = vld [vmem:[%s23 + $0x18] sm:$0xff]
    %v408 = vld [vmem:[#allocation10] sm:$0x1]
    %v409 = vld [vmem:[#allocation12] sm:$0x1]
    %v410 = vld [vmem:[#allocation13] sm:$0x1]
    %v411 = vld [vmem:[#allocation15] sm:$0x1]
    %v413 = vlaneseq
    %v414 = vshrl.u32 %v413, 7
    %v415 = vsub.s32 0, %v414
    %v416 = vrot.slane %v387, %v415
    %vm418 = vcmask 23552
    %v420 = vsel %vm418, %v374, 0
    %v423 = vsel %vm418, %v375, 0
    %vm425 = vcmask 1042432
    %v427 = vsel %vm425, %v382, 0
    %429 = vmatprep.subr.mxu0 0.0
    %430 = vmatpush1.msra.mxu0 0.0
    %431 = vmatprep.subr.mxu0 0.0
    %432 = vmatpush1.msra.mxu0 0.0
    %433 = vmatprep.subr.mxu0 0.0
    %434 = vmatpush1.msra.mxu0 0.0
    %435 = vmatprep.subr.mxu0 0.0
    %436 = vmatpush1.msra.mxu0 0.0
    %437 = vmatprep.subr.mxu0 0.0
    %438 = vmatpush1.msra.mxu0 0.0
    %439 = vmatprep.subr.mxu0 0.0
    %440 = vmatpush1.msra.mxu0 0.0
    %441 = vmatprep.subr.mxu0 0.0
    %442 = vmatpush1.msra.mxu0 0.0
    %443 = vmatprep.subr.mxu0 0.0
    %444 = vmatpush1.msra.mxu0 0.0
    %445 = vmatprep.subr.mxu0 0.0
    %446 = vmatpush1.msra.mxu0 0.0
    %447 = vmatprep.subr.mxu0 0.0
    %448 = vmatpush1.msra.mxu0 0.0
    %449 = vmatprep.subr.mxu0 0.0
    %450 = vmatpush1.msra.mxu0 0.0
    %451 = vmatprep.subr.mxu0 0.0
    %452 = vmatpush1.msra.mxu0 0.0
    %453 = vmatprep.subr.mxu0 0.0
    %454 = vmatpush1.msra.mxu0 0.0
    %455 = vmatprep.subr.mxu0 0.0
    %456 = vmatpush1.msra.mxu0 0.0
    %457 = vmatprep.subr.mxu0 0.0
    %458 = vmatpush1.msra.mxu0 0.0
    %459 = vmatprep.subr.mxu0 0.0
    %460 = vmatpush1.msra.mxu0 %v427
    %461 = vmatprep.subr.mxu0 0.0
    %462 = vmatpush2.msra.mxu0 0.0
    %463 = vmatprep.subr.mxu0 0.0
    %464 = vmatpush2.msra.mxu0 0.0
    %465 = vmatprep.subr.mxu0 0.0
    %466 = vmatpush2.msra.mxu0 0.0
    %467 = vmatprep.subr.mxu0 0.0
    %468 = vmatpush2.msra.mxu0 0.0
    %469 = vmatprep.subr.mxu0 0.0
    %470 = vmatpush2.msra.mxu0 0.0
    %471 = vmatprep.subr.mxu0 0.0
    %472 = vmatpush2.msra.mxu0 0.0
    %473 = vmatprep.subr.mxu0 0.0
    %474 = vmatpush2.msra.mxu0 0.0
    %475 = vmatprep.subr.mxu0 0.0
    %476 = vmatpush2.msra.mxu0 0.0
    %477 = vmatprep.subr.mxu0 0.0
    %478 = vmatpush2.msra.mxu0 0.0
    %479 = vmatprep.subr.mxu0 0.0
    %480 = vmatpush2.msra.mxu0 0.0
    %481 = vmatprep.subr.mxu0 0.0
    %482 = vmatpush2.msra.mxu0 0.0
    %483 = vmatprep.subr.mxu0 0.0
    %484 = vmatpush2.msra.mxu0 0.0
    %485 = vmatprep.subr.mxu0 0.0
    %486 = vmatpush2.msra.mxu0 0.0
    %487 = vmatprep.subr.mxu0 0.0
    %488 = vmatpush2.msra.mxu0 0.0
    %489 = vmatprep.subr.mxu0 0.0
    %490 = vmatpush2.msra.mxu0 0.0
    %491 = vmatprep.subr.mxu0 0.0
    %492 = vmatpush2.msra.mxu0 0.0
    %493 = vmatprep.mubr.f32.mxu0 0.0
    %494 = vmatmul.mubr.f32.gmra.mxu0 %v420
    %v495 = vpop.f32.mrf.mxu0
    %v496 = vadd.f32 %v416, %v495
    %v497 = vpop.f32.mrf.mxu0
    %498 = vmatprep.mubr.f32.mxu0 0.0
    %499 = vmatmul.mubr.f32.gmra.mxu0 %v423
    %v500 = vpop.f32.mrf.mxu0
    %v501 = vadd.f32 %v416, %v500
    %v502 = vpop.f32.mrf.mxu0
    %503 = vdwg.mxu0
    %vm504 = vcmp.gt.f32.partialorder %v496, 0.0
    %vm505 = vcmp.gt.f32.partialorder %v501, 0.0
    %v506 = vmin.f32 %v496, 0.0
    %v507 = vmin.f32 %v501, 0.0
    %v508 = vmul.f32 %v506, 1.442695
    %v509 = vpow.pop %v508
    %v510 = vmul.f32 %v507, 1.442695
    %v511 = vpow.pop %v510
    %v512 = vsub.f32 %v509, 1.0
    %v513 = vsub.f32 %v511, 1.0
    %v514 = vsel %vm504, %v496, %v512
    %v515 = vsel %vm505, %v501, %v513
    %v517 = vlaneseq
    %v518 = vshrl.u32 %v517, 7
    %v519 = vsub.s32 0, %v518
    %v520 = vrot.slane %v388, %v519
    %vm522 = vcmask 261120
    %v524 = vsel %vm522, %v514, 0
    %v527 = vsel %vm522, %v515, 0
    %529 = vmatprep.subr.mxu0 0.0
    %530 = vmatpush1.msra.mxu0 0.0
    %531 = vmatprep.subr.mxu0 0.0
    %532 = vmatpush1.msra.mxu0 0.0
    %533 = vmatprep.subr.mxu0 0.0
    %534 = vmatpush1.msra.mxu0 0.0
    %535 = vmatprep.subr.mxu0 0.0
    %536 = vmatpush1.msra.mxu0 0.0
    %537 = vmatprep.subr.mxu0 0.0
    %538 = vmatpush1.msra.mxu0 0.0
    %539 = vmatprep.subr.mxu0 0.0
    %540 = vmatpush1.msra.mxu0 0.0
    %541 = vmatprep.subr.mxu0 0.0
    %542 = vmatpush1.msra.mxu0 0.0
    %543 = vmatprep.subr.mxu0 0.0
    %544 = vmatpush1.msra.mxu0 0.0
    %545 = vmatprep.subr.mxu0 0.0
    %546 = vmatpush1.msra.mxu0 0.0
    %547 = vmatprep.subr.mxu0 0.0
    %548 = vmatpush1.msra.mxu0 0.0
    %549 = vmatprep.subr.mxu0 0.0
    %550 = vmatpush1.msra.mxu0 0.0
    %551 = vmatprep.subr.mxu0 0.0
    %552 = vmatpush1.msra.mxu0 0.0
    %553 = vmatprep.subr.mxu0 0.0
    %554 = vmatpush1.msra.mxu0 %v386
    %555 = vmatprep.subr.mxu0 0.0
    %556 = vmatpush1.msra.mxu0 %v385
    %557 = vmatprep.subr.mxu0 0.0
    %558 = vmatpush1.msra.mxu0 %v384
    %559 = vmatprep.subr.mxu0 0.0
    %560 = vmatpush1.msra.mxu0 %v383
    %561 = vmatprep.subr.mxu0 0.0
    %562 = vmatpush2.msra.mxu0 0.0
    %563 = vmatprep.subr.mxu0 0.0
    %564 = vmatpush2.msra.mxu0 0.0
    %565 = vmatprep.subr.mxu0 0.0
    %566 = vmatpush2.msra.mxu0 0.0
    %567 = vmatprep.subr.mxu0 0.0
    %568 = vmatpush2.msra.mxu0 0.0
    %569 = vmatprep.subr.mxu0 0.0
    %570 = vmatpush2.msra.mxu0 0.0
    %571 = vmatprep.subr.mxu0 0.0
    %572 = vmatpush2.msra.mxu0 0.0
    %573 = vmatprep.subr.mxu0 0.0
    %574 = vmatpush2.msra.mxu0 0.0
    %575 = vmatprep.subr.mxu0 0.0
    %576 = vmatpush2.msra.mxu0 0.0
    %577 = vmatprep.subr.mxu0 0.0
    %578 = vmatpush2.msra.mxu0 0.0
    %579 = vmatprep.subr.mxu0 0.0
    %580 = vmatpush2.msra.mxu0 0.0
    %581 = vmatprep.subr.mxu0 0.0
    %582 = vmatpush2.msra.mxu0 0.0
    %583 = vmatprep.subr.mxu0 0.0
    %584 = vmatpush2.msra.mxu0 0.0
    %585 = vmatprep.subr.mxu0 0.0
    %586 = vmatpush2.msra.mxu0 0.0
    %587 = vmatprep.subr.mxu0 0.0
    %588 = vmatpush2.msra.mxu0 0.0
    %589 = vmatprep.subr.mxu0 0.0
    %590 = vmatpush2.msra.mxu0 0.0
    %591 = vmatprep.subr.mxu0 0.0
    %592 = vmatpush2.msra.mxu0 0.0
    %593 = vmatprep.mubr.f32.mxu0 0.0
    %594 = vmatmul.mubr.f32.gmra.mxu0 %v524
    %v595 = vpop.f32.mrf.mxu0
    %v596 = vadd.f32 %v520, %v595
    %v597 = vpop.f32.mrf.mxu0
    %598 = vmatprep.mubr.f32.mxu0 0.0
    %599 = vmatmul.mubr.f32.gmra.mxu0 %v527
    %v600 = vpop.f32.mrf.mxu0
    %v601 = vadd.f32 %v520, %v600
    %v602 = vpop.f32.mrf.mxu0
    %603 = vdwg.mxu0
    %vm604 = vcmp.gt.f32.partialorder %v596, 0.0
    %vm605 = vcmp.gt.f32.partialorder %v601, 0.0
    %v606 = vmin.f32 %v596, 0.0
    %v607 = vmin.f32 %v601, 0.0
    %v608 = vmul.f32 %v606, 1.442695
    %v609 = vpow.pop %v608
    %v610 = vmul.f32 %v607, 1.442695
    %v611 = vpow.pop %v610
    %v612 = vsub.f32 %v609, 1.0
    %v613 = vsub.f32 %v611, 1.0
    %v614 = vsel %vm604, %v596, %v612
    %v615 = vsel %vm605, %v601, %v613
    %v616 = vld [vmem:[#allocation16] sm:$0x1]
    %v617 = vld [vmem:[#allocation18] sm:$0x1]
    %v618 = vld [vmem:[#allocation19] sm:$0x1]
    %v619 = vld [vmem:[#allocation2] sm:$0x1]
    %621 = vset.pattern.permute.xlu0 0
    %622 = vperm.xlu0 %621, %v376
    %v623 = vpop.permute.xlu0 %622
    %626 = vset.pattern.permute.xlu0 0
    %627 = vperm.xlu0 %626, %v377
    %v628 = vpop.permute.xlu0 %627
    %631 = vset.pattern.permute.xlu0 0
    %632 = vperm.xlu0 %631, %v378
    %v633 = vpop.permute.xlu0 %632
    %636 = vset.pattern.permute.xlu0 0
    %637 = vperm.xlu0 %636, %v379
    %v638 = vpop.permute.xlu0 %637
    %641 = vset.pattern.permute.xlu0 0
    %642 = vperm.xlu0 %641, %v380
    %v643 = vpop.permute.xlu0 %642
    %646 = vset.pattern.permute.xlu0 0
    %647 = vperm.xlu0 %646, %v381
    %v648 = vpop.permute.xlu0 %647
    %v651 = vlaneseq
    %v652 = vshrl.u32 %v651, 7
    %v653 = vsub.s32 0, %v652
    %v654 = vrot.slane %v616, %v653
    %v656 = vmul.f32 %v623, %v654
    %v657 = vmul.f32 %v628, %v654
    %v658 = vmul.f32 %v633, %v654
    %v659 = vmul.f32 %v638, %v654
    %v660 = vmul.f32 %v643, %v654
    %v661 = vmul.f32 %v648, %v654
    %v663 = vlaneseq
    %v664 = vshrl.u32 %v663, 7
    %v665 = vsub.s32 0, %v664
    %v666 = vrot.slane %v617, %v665
    %v668 = vadd.f32 %v656, %v666
    %v669 = vadd.f32 %v657, %v666
    %v670 = vadd.f32 %v658, %v666
    %v671 = vadd.f32 %v659, %v666
    %v672 = vadd.f32 %v660, %v666
    %v673 = vadd.f32 %v661, %v666
    %vm674 = vcmp.gt.f32.partialorder %v668, 0.0
    %vm675 = vcmp.gt.f32.partialorder %v669, 0.0
    %vm676 = vcmp.gt.f32.partialorder %v670, 0.0
    %vm677 = vcmp.gt.f32.partialorder %v671, 0.0
    %vm678 = vcmp.gt.f32.partialorder %v672, 0.0
    %vm679 = vcmp.gt.f32.partialorder %v673, 0.0
    %v680 = vmin.f32 %v668, 0.0
    %v681 = vmin.f32 %v669, 0.0
    %v682 = vmin.f32 %v670, 0.0
    %v683 = vmin.f32 %v671, 0.0
    %v684 = vmin.f32 %v672, 0.0
    %v685 = vmin.f32 %v673, 0.0
    %v686 = vmul.f32 %v680, 1.442695
    %v687 = vpow.pop %v686
    %v688 = vmul.f32 %v681, 1.442695
    %v689 = vpow.pop %v688
    %v690 = vmul.f32 %v682, 1.442695
    %v691 = vpow.pop %v690
    %v692 = vmul.f32 %v683, 1.442695
    %v693 = vpow.pop %v692
    %v694 = vmul.f32 %v684, 1.442695
    %v695 = vpow.pop %v694
    %v696 = vmul.f32 %v685, 1.442695
    %v697 = vpow.pop %v696
    %v698 = vsub.f32 %v687, 1.0
    %v699 = vsub.f32 %v689, 1.0
    %v700 = vsub.f32 %v691, 1.0
    %v701 = vsub.f32 %v693, 1.0
    %v702 = vsub.f32 %v695, 1.0
    %v703 = vsub.f32 %v697, 1.0
    %v704 = vsel %vm674, %v668, %v698
    %v705 = vsel %vm675, %v669, %v699
    %v706 = vsel %vm676, %v670, %v700
    %v707 = vsel %vm677, %v671, %v701
    %v708 = vsel %vm678, %v672, %v702
    %v709 = vsel %vm679, %v673, %v703
    %v711 = vlaneseq
    %v712 = vshrl.u32 %v711, 7
    %v713 = vsub.s32 0, %v712
    %v714 = vrot.slane %v618, %v713
    %v716 = vmul.f32 %v704, %v714
    %v717 = vmul.f32 %v705, %v714
    %v718 = vmul.f32 %v706, %v714
    %v719 = vmul.f32 %v707, %v714
    %v720 = vmul.f32 %v708, %v714
    %v721 = vmul.f32 %v709, %v714
    %v722 = vsel %vm522, %v716, 0.0
    %723 = vadd.xlane.f32.xlu0 %v722
    %v724 = vpop.xlane.xlu0 %723
    %v725 = vsel %vm522, %v717, 0.0
    %726 = vadd.xlane.f32.xlu0 %v725
    %v727 = vpop.xlane.xlu0 %726
    %v728 = vsel %vm522, %v718, 0.0
    %729 = vadd.xlane.f32.xlu0 %v728
    %v730 = vpop.xlane.xlu0 %729
    %v731 = vsel %vm522, %v719, 0.0
    %732 = vadd.xlane.f32.xlu0 %v731
    %v733 = vpop.xlane.xlu0 %732
    %v734 = vsel %vm522, %v720, 0.0
    %735 = vadd.xlane.f32.xlu0 %v734
    %v736 = vpop.xlane.xlu0 %735
    %v737 = vsel %vm522, %v721, 0.0
    %738 = vadd.xlane.f32.xlu0 %v737
    %v739 = vpop.xlane.xlu0 %738
    %v741 = vlaneseq
    %v742 = vshrl.u32 %v741, 7
    %v743 = vsub.s32 0, %v742
    %v744 = vrot.slane %v619, %v743
    %v746 = vadd.f32 %v724, %v744
    %v747 = vadd.f32 %v727, %v744
    %v748 = vadd.f32 %v730, %v744
    %v749 = vadd.f32 %v733, %v744
    %v750 = vadd.f32 %v736, %v744
    %v751 = vadd.f32 %v739, %v744
    %vm752 = vcmp.gt.f32.partialorder %v746, 0.0
    %vm753 = vcmp.gt.f32.partialorder %v747, 0.0
    %vm754 = vcmp.gt.f32.partialorder %v748, 0.0
    %vm755 = vcmp.gt.f32.partialorder %v749, 0.0
    %vm756 = vcmp.gt.f32.partialorder %v750, 0.0
    %vm757 = vcmp.gt.f32.partialorder %v751, 0.0
    %v758 = vmin.f32 %v746, 0.0
    %v759 = vmin.f32 %v747, 0.0
    %v760 = vmin.f32 %v748, 0.0
    %v761 = vmin.f32 %v749, 0.0
    %v762 = vmin.f32 %v750, 0.0
    %v763 = vmin.f32 %v751, 0.0
    %v764 = vmul.f32 %v758, 1.442695
    %v765 = vpow.pop %v764
    %v766 = vmul.f32 %v759, 1.442695
    %v767 = vpow.pop %v766
    %v768 = vmul.f32 %v760, 1.442695
    %v769 = vpow.pop %v768
    %v770 = vmul.f32 %v761, 1.442695
    %v771 = vpow.pop %v770
    %v772 = vmul.f32 %v762, 1.442695
    %v773 = vpow.pop %v772
    %v774 = vmul.f32 %v763, 1.442695
    %v775 = vpow.pop %v774
    %v776 = vsub.f32 %v765, 1.0
    %v777 = vsub.f32 %v767, 1.0
    %v778 = vsub.f32 %v769, 1.0
    %v779 = vsub.f32 %v771, 1.0
    %v780 = vsub.f32 %v773, 1.0
    %v781 = vsub.f32 %v775, 1.0
    %v782 = vsel %vm752, %v746, %v776
    %v783 = vsel %vm753, %v747, %v777
    %v784 = vsel %vm754, %v748, %v778
    %v785 = vsel %vm755, %v749, %v779
    %v786 = vsel %vm756, %v750, %v780
    %v787 = vsel %vm757, %v751, %v781
    %v788 = vld [vmem:[%s41] sm:$0xff]
    %v789 = vld [vmem:[%s41 + $0x8] sm:$0xff]
    %v790 = vld [vmem:[%s43] sm:$0xff]
    %v791 = vld [vmem:[%s43 + $0x8] sm:$0xff]
    %v792 = vld [vmem:[%s43 + $0x10] sm:$0xff]
    %v793 = vld [vmem:[%s43 + $0x18] sm:$0xff]
    %v794 = vld [vmem:[%s43 + $0x20] sm:$0xff]
    %v795 = vld [vmem:[%s43 + $0x28] sm:$0xff]
    %v796 = vld [vmem:[%s45] sm:$0xff]
    %v797 = vld [vmem:[%s45 + $0x8] sm:$0xff]
    %v798 = vld [vmem:[%s45 + $0x10] sm:$0xff]
    %v799 = vld [vmem:[%s45 + $0x18] sm:$0xff]
    %v800 = vld [vmem:[%s47] sm:$0xff]
    %v801 = vld [vmem:[%s47 + $0x8] sm:$0xff]
    %v802 = vld [vmem:[%s47 + $0x10] sm:$0xff]
    %v803 = vld [vmem:[%s47 + $0x18] sm:$0xff]
    %v804 = vld [vmem:[#allocation21] sm:$0x1]
    %v805 = vld [vmem:[#allocation22] sm:$0x1]
    %807 = vset.pattern.permute.xlu0 0
    %808 = vperm.xlu0 %807, %v782
    %v809 = vpop.permute.xlu0 %808
    %812 = vset.pattern.permute.xlu0 0
    %813 = vperm.xlu0 %812, %v783
    %v814 = vpop.permute.xlu0 %813
    %817 = vset.pattern.permute.xlu0 0
    %818 = vperm.xlu0 %817, %v784
    %v819 = vpop.permute.xlu0 %818
    %822 = vset.pattern.permute.xlu0 0
    %823 = vperm.xlu0 %822, %v785
    %v824 = vpop.permute.xlu0 %823
    %827 = vset.pattern.permute.xlu0 0
    %828 = vperm.xlu0 %827, %v786
    %v829 = vpop.permute.xlu0 %828
    %832 = vset.pattern.permute.xlu0 0
    %833 = vperm.xlu0 %832, %v787
    %v834 = vpop.permute.xlu0 %833
    %v836 = vmul.f32 %v809, %v790
    %v837 = vmul.f32 %v814, %v791
    %v838 = vmul.f32 %v819, %v792
    %v839 = vmul.f32 %v824, %v793
    %v840 = vmul.f32 %v829, %v794
    %v841 = vmul.f32 %v834, %v795
    %v842 = vlaneseq
    %v843 = vshrl.u32 %v842, 7
    %v844 = vadd.s32 %v843, 8
    %v845 = vlaneseq
    %v846 = vand.u32 %v845, 127
    %vm847 = vcmp.eq.s32.totalorder %v843, %v846
    %vm848 = vcmp.eq.s32.totalorder %v844, %v846
    %v849 = vsel %vm847, 1.0, 0.0
    %v850 = vsel %vm848, 1.0, 0.0
    %vm851 = vcmask 392192
    %v853 = vsel %vm851, %v788, 0
    %v856 = vsel %vm851, %v789, 0
    %858 = vmatprep.subr.mxu0 0.0
    %859 = vmatpush1.msra.mxu0 0.0
    %860 = vmatprep.subr.mxu0 0.0
    %861 = vmatpush1.msra.mxu0 0.0
    %862 = vmatprep.subr.mxu0 0.0
    %863 = vmatpush1.msra.mxu0 0.0
    %864 = vmatprep.subr.mxu0 0.0
    %865 = vmatpush1.msra.mxu0 0.0
    %866 = vmatprep.subr.mxu0 0.0
    %867 = vmatpush1.msra.mxu0 0.0
    %868 = vmatprep.subr.mxu0 0.0
    %869 = vmatpush1.msra.mxu0 0.0
    %870 = vmatprep.subr.mxu0 0.0
    %871 = vmatpush1.msra.mxu0 0.0
    %872 = vmatprep.subr.mxu0 0.0
    %873 = vmatpush1.msra.mxu0 0.0
    %874 = vmatprep.subr.mxu0 0.0
    %875 = vmatpush1.msra.mxu0 0.0
    %876 = vmatprep.subr.mxu0 0.0
    %877 = vmatpush1.msra.mxu0 0.0
    %878 = vmatprep.subr.mxu0 0.0
    %879 = vmatpush1.msra.mxu0 %v841
    %880 = vmatprep.subr.mxu0 0.0
    %881 = vmatpush1.msra.mxu0 %v840
    %882 = vmatprep.subr.mxu0 0.0
    %883 = vmatpush1.msra.mxu0 %v839
    %884 = vmatprep.subr.mxu0 0.0
    %885 = vmatpush1.msra.mxu0 %v838
    %886 = vmatprep.subr.mxu0 0.0
    %887 = vmatpush1.msra.mxu0 %v837
    %888 = vmatprep.subr.mxu0 0.0
    %889 = vmatpush1.msra.mxu0 %v836
    %890 = vmatprep.subr.mxu0 0.0
    %891 = vmatpush2.msra.mxu0 0.0
    %892 = vmatprep.subr.mxu0 0.0
    %893 = vmatpush2.msra.mxu0 0.0
    %894 = vmatprep.subr.mxu0 0.0
    %895 = vmatpush2.msra.mxu0 0.0
    %896 = vmatprep.subr.mxu0 0.0
    %897 = vmatpush2.msra.mxu0 0.0
    %898 = vmatprep.subr.mxu0 0.0
    %899 = vmatpush2.msra.mxu0 0.0
    %900 = vmatprep.subr.mxu0 0.0
    %901 = vmatpush2.msra.mxu0 0.0
    %902 = vmatprep.subr.mxu0 0.0
    %903 = vmatpush2.msra.mxu0 0.0
    %904 = vmatprep.subr.mxu0 0.0
    %905 = vmatpush2.msra.mxu0 0.0
    %906 = vmatprep.subr.mxu0 0.0
    %907 = vmatpush2.msra.mxu0 0.0
    %908 = vmatprep.subr.mxu0 0.0
    %909 = vmatpush2.msra.mxu0 0.0
    %910 = vmatprep.subr.mxu0 0.0
    %911 = vmatpush2.msra.mxu0 0.0
    %912 = vmatprep.subr.mxu0 0.0
    %913 = vmatpush2.msra.mxu0 0.0
    %914 = vmatprep.subr.mxu0 0.0
    %915 = vmatpush2.msra.mxu0 0.0
    %916 = vmatprep.subr.mxu0 0.0
    %917 = vmatpush2.msra.mxu0 0.0
    %918 = vmatprep.subr.mxu0 0.0
    %919 = vmatpush2.msra.mxu0 0.0
    %920 = vmatprep.subr.mxu0 0.0
    %921 = vmatpush2.msra.mxu0 0.0
    %922 = vmatprep.mubr.f32.mxu0 0.0
    %923 = vmatmul.mubr.f32.gmra.mxu0 %v853
    %v924 = vpop.f32.mrf.mxu0
    %v925 = vadd.f32 %v849, %v924
    %v926 = vpop.f32.mrf.mxu0
    %927 = vmatprep.mubr.f32.mxu0 0.0
    %928 = vmatmul.mubr.f32.gmra.mxu0 %v856
    %v929 = vpop.f32.mrf.mxu0
    %v930 = vadd.f32 %v850, %v929
    %v931 = vpop.f32.mrf.mxu0
    %932 = vdwg.mxu0
    %vm933 = vcmask 130048
    %v934 = vsel %vm933, %v925, 0.0
    %935 = vadd.xlane.f32.xlu0 %v934
    %v936 = vpop.xlane.xlu0 %935
    %v937 = vsel %vm933, %v930, 0.0
    %938 = vadd.xlane.f32.xlu0 %v937
    %v939 = vpop.xlane.xlu0 %938
    %vm940 = vcmp.gt.f32.partialorder %v936, 0.0
    %vm941 = vcmp.gt.f32.partialorder %v939, 0.0
    %v942 = vmax.f32 %v936, 1e-12
    %v943 = vmax.f32 %v939, 1e-12
    %v944 = vrsqrt.pop %v942
    %v945 = vrsqrt.pop %v943
    %v946 = vsel %vm940, %v944, 0.0
    %v947 = vsel %vm941, %v945, 0.0
    %v948 = vmul.f32 %v946, %v925
    %v949 = vmul.f32 %v947, %v930
    %v950 = vmul.f32 %v849, %v946
    %v951 = vmul.f32 %v850, %v947
    %v953 = vsel %vm933, %v948, 0
    %v956 = vsel %vm933, %v949, 0
    %958 = vmatprep.subr.mxu0 0.0
    %959 = vmatpush1.msra.mxu0 0.0
    %960 = vmatprep.subr.mxu0 0.0
    %961 = vmatpush1.msra.mxu0 0.0
    %962 = vmatprep.subr.mxu0 0.0
    %963 = vmatpush1.msra.mxu0 0.0
    %964 = vmatprep.subr.mxu0 0.0
    %965 = vmatpush1.msra.mxu0 0.0
    %966 = vmatprep.subr.mxu0 0.0
    %967 = vmatpush1.msra.mxu0 0.0
    %968 = vmatprep.subr.mxu0 0.0
    %969 = vmatpush1.msra.mxu0 0.0
    %970 = vmatprep.subr.mxu0 0.0
    %971 = vmatpush1.msra.mxu0 0.0
    %972 = vmatprep.subr.mxu0 0.0
    %973 = vmatpush1.msra.mxu0 0.0
    %974 = vmatprep.subr.mxu0 0.0
    %975 = vmatpush1.msra.mxu0 0.0
    %976 = vmatprep.subr.mxu0 0.0
    %977 = vmatpush1.msra.mxu0 0.0
    %978 = vmatprep.subr.mxu0 0.0
    %979 = vmatpush1.msra.mxu0 0.0
    %980 = vmatprep.subr.mxu0 0.0
    %981 = vmatpush1.msra.mxu0 0.0
    %982 = vmatprep.subr.mxu0 0.0
    %983 = vmatpush1.msra.mxu0 0.0
    %984 = vmatprep.subr.mxu0 0.0
    %985 = vmatpush1.msra.mxu0 0.0
    %986 = vmatprep.subr.mxu0 0.0
    %987 = vmatpush1.msra.mxu0 %v951
    %988 = vmatprep.subr.mxu0 0.0
    %989 = vmatpush1.msra.mxu0 %v950
    %990 = vmatprep.subr.mxu0 0.0
    %991 = vmatpush2.msra.mxu0 0.0
    %992 = vmatprep.subr.mxu0 0.0
    %993 = vmatpush2.msra.mxu0 0.0
    %994 = vmatprep.subr.mxu0 0.0
    %995 = vmatpush2.msra.mxu0 0.0
    %996 = vmatprep.subr.mxu0 0.0
    %997 = vmatpush2.msra.mxu0 0.0
    %998 = vmatprep.subr.mxu0 0.0
    %999 = vmatpush2.msra.mxu0 0.0
    %1000 = vmatprep.subr.mxu0 0.0
    %1001 = vmatpush2.msra.mxu0 0.0
    %1002 = vmatprep.subr.mxu0 0.0
    %1003 = vmatpush2.msra.mxu0 0.0
    %1004 = vmatprep.subr.mxu0 0.0
    %1005 = vmatpush2.msra.mxu0 0.0
    %1006 = vmatprep.subr.mxu0 0.0
    %1007 = vmatpush2.msra.mxu0 0.0
    %1008 = vmatprep.subr.mxu0 0.0
    %1009 = vmatpush2.msra.mxu0 0.0
    %1010 = vmatprep.subr.mxu0 0.0
    %1011 = vmatpush2.msra.mxu0 0.0
    %1012 = vmatprep.subr.mxu0 0.0
    %1013 = vmatpush2.msra.mxu0 0.0
    %1014 = vmatprep.subr.mxu0 0.0
    %1015 = vmatpush2.msra.mxu0 0.0
    %1016 = vmatprep.subr.mxu0 0.0
    %1017 = vmatpush2.msra.mxu0 0.0
    %1018 = vmatprep.subr.mxu0 0.0
    %1019 = vmatpush2.msra.mxu0 0.0
    %1020 = vmatprep.subr.mxu0 0.0
    %1021 = vmatpush2.msra.mxu0 0.0
    %1022 = vmatprep.mubr.f32.mxu0 0.0
    %1023 = vmatmul.mubr.f32.gmra.mxu0 %v953
    %v1024 = vpop.f32.mrf.mxu0
    %v1025 = vadd.f32 0.0, %v1024
    %v1026 = vpop.f32.mrf.mxu0
    %1027 = vmatprep.mubr.f32.mxu0 0.0
    %1028 = vmatmul.mubr.f32.gmra.mxu0 %v956
    %v1029 = vpop.f32.mrf.mxu0
    %v1030 = vadd.f32 0.0, %v1029
    %v1031 = vpop.f32.mrf.mxu0
    %1032 = vdwg.mxu0
    %v1034 = vsel %vm522, %v614, 0
    %v1037 = vsel %vm522, %v615, 0
    %1039 = vmatprep.subr.mxu0 0.0
    %1040 = vmatpush1.msra.mxu0 0.0
    %1041 = vmatprep.subr.mxu0 0.0
    %1042 = vmatpush1.msra.mxu0 0.0
    %1043 = vmatprep.subr.mxu0 0.0
    %1044 = vmatpush1.msra.mxu0 0.0
    %1045 = vmatprep.subr.mxu0 0.0
    %1046 = vmatpush1.msra.mxu0 0.0
    %1047 = vmatprep.subr.mxu0 0.0
    %1048 = vmatpush1.msra.mxu0 0.0
    %1049 = vmatprep.subr.mxu0 0.0
    %1050 = vmatpush1.msra.mxu0 0.0
    %1051 = vmatprep.subr.mxu0 0.0
    %1052 = vmatpush1.msra.mxu0 0.0
    %1053 = vmatprep.subr.mxu0 0.0
    %1054 = vmatpush1.msra.mxu0 0.0
    %1055 = vmatprep.subr.mxu0 0.0
    %1056 = vmatpush1.msra.mxu0 0.0
    %1057 = vmatprep.subr.mxu0 0.0
    %1058 = vmatpush1.msra.mxu0 0.0
    %1059 = vmatprep.subr.mxu0 0.0
    %1060 = vmatpush1.msra.mxu0 0.0
    %1061 = vmatprep.subr.mxu0 0.0
    %1062 = vmatpush1.msra.mxu0 0.0
    %1063 = vmatprep.subr.mxu0 0.0
    %1064 = vmatpush1.msra.mxu0 %v799
    %1065 = vmatprep.subr.mxu0 0.0
    %1066 = vmatpush1.msra.mxu0 %v798
    %1067 = vmatprep.subr.mxu0 0.0
    %1068 = vmatpush1.msra.mxu0 %v797
    %1069 = vmatprep.subr.mxu0 0.0
    %1070 = vmatpush1.msra.mxu0 %v796
    %1071 = vmatprep.subr.mxu0 0.0
    %1072 = vmatpush2.msra.mxu0 0.0
    %1073 = vmatprep.subr.mxu0 0.0
    %1074 = vmatpush2.msra.mxu0 0.0
    %1075 = vmatprep.subr.mxu0 0.0
    %1076 = vmatpush2.msra.mxu0 0.0
    %1077 = vmatprep.subr.mxu0 0.0
    %1078 = vmatpush2.msra.mxu0 0.0
    %1079 = vmatprep.subr.mxu0 0.0
    %1080 = vmatpush2.msra.mxu0 0.0
    %1081 = vmatprep.subr.mxu0 0.0
    %1082 = vmatpush2.msra.mxu0 0.0
    %1083 = vmatprep.subr.mxu0 0.0
    %1084 = vmatpush2.msra.mxu0 0.0
    %1085 = vmatprep.subr.mxu0 0.0
    %1086 = vmatpush2.msra.mxu0 0.0
    %1087 = vmatprep.subr.mxu0 0.0
    %1088 = vmatpush2.msra.mxu0 0.0
    %1089 = vmatprep.subr.mxu0 0.0
    %1090 = vmatpush2.msra.mxu0 0.0
    %1091 = vmatprep.subr.mxu0 0.0
    %1092 = vmatpush2.msra.mxu0 0.0
    %1093 = vmatprep.subr.mxu0 0.0
    %1094 = vmatpush2.msra.mxu0 0.0
    %1095 = vmatprep.subr.mxu0 0.0
    %1096 = vmatpush2.msra.mxu0 0.0
    %1097 = vmatprep.subr.mxu0 0.0
    %1098 = vmatpush2.msra.mxu0 0.0
    %1099 = vmatprep.subr.mxu0 0.0
    %1100 = vmatpush2.msra.mxu0 0.0
    %1101 = vmatprep.subr.mxu0 0.0
    %1102 = vmatpush2.msra.mxu0 0.0
    %1103 = vmatprep.mubr.f32.mxu0 0.0
    %1104 = vmatmul.mubr.f32.gmra.mxu0 %v1034
    %v1105 = vpop.f32.mrf.mxu0
    %v1106 = vadd.f32 0.0, %v1105
    %v1107 = vpop.f32.mrf.mxu0
    %1108 = vmatprep.mubr.f32.mxu0 0.0
    %1109 = vmatmul.mubr.f32.gmra.mxu0 %v1037
    %v1110 = vpop.f32.mrf.mxu0
    %v1111 = vadd.f32 0.0, %v1110
    %v1112 = vpop.f32.mrf.mxu0
    %1113 = vdwg.mxu0
    %v1115 = vlaneseq
    %v1116 = vshrl.u32 %v1115, 7
    %v1117 = vsub.s32 0, %v1116
    %v1118 = vrot.slane %v804, %v1117
    %v1121 = vsel %vm933, %v1025, 0
    %v1124 = vsel %vm933, %v1030, 0
    %1126 = vmatprep.subr.mxu0 0.0
    %1127 = vmatpush1.msra.mxu0 0.0
    %1128 = vmatprep.subr.mxu0 0.0
    %1129 = vmatpush1.msra.mxu0 0.0
    %1130 = vmatprep.subr.mxu0 0.0
    %1131 = vmatpush1.msra.mxu0 0.0
    %1132 = vmatprep.subr.mxu0 0.0
    %1133 = vmatpush1.msra.mxu0 0.0
    %1134 = vmatprep.subr.mxu0 0.0
    %1135 = vmatpush1.msra.mxu0 0.0
    %1136 = vmatprep.subr.mxu0 0.0
    %1137 = vmatpush1.msra.mxu0 0.0
    %1138 = vmatprep.subr.mxu0 0.0
    %1139 = vmatpush1.msra.mxu0 0.0
    %1140 = vmatprep.subr.mxu0 0.0
    %1141 = vmatpush1.msra.mxu0 0.0
    %1142 = vmatprep.subr.mxu0 0.0
    %1143 = vmatpush1.msra.mxu0 0.0
    %1144 = vmatprep.subr.mxu0 0.0
    %1145 = vmatpush1.msra.mxu0 0.0
    %1146 = vmatprep.subr.mxu0 0.0
    %1147 = vmatpush1.msra.mxu0 0.0
    %1148 = vmatprep.subr.mxu0 0.0
    %1149 = vmatpush1.msra.mxu0 0.0
    %1150 = vmatprep.subr.mxu0 0.0
    %1151 = vmatpush1.msra.mxu0 0.0
    %1152 = vmatprep.subr.mxu0 0.0
    %1153 = vmatpush1.msra.mxu0 0.0
    %1154 = vmatprep.subr.mxu0 0.0
    %1155 = vmatpush1.msra.mxu0 %v1111
    %1156 = vmatprep.subr.mxu0 0.0
    %1157 = vmatpush1.msra.mxu0 %v1106
    %1158 = vmatprep.subr.mxu0 0.0
    %1159 = vmatpush2.msra.mxu0 0.0
    %1160 = vmatprep.subr.mxu0 0.0
    %1161 = vmatpush2.msra.mxu0 0.0
    %1162 = vmatprep.subr.mxu0 0.0
    %1163 = vmatpush2.msra.mxu0 0.0
    %1164 = vmatprep.subr.mxu0 0.0
    %1165 = vmatpush2.msra.mxu0 0.0
    %1166 = vmatprep.subr.mxu0 0.0
    %1167 = vmatpush2.msra.mxu0 0.0
    %1168 = vmatprep.subr.mxu0 0.0
    %1169 = vmatpush2.msra.mxu0 0.0
    %1170 = vmatprep.subr.mxu0 0.0
    %1171 = vmatpush2.msra.mxu0 0.0
    %1172 = vmatprep.subr.mxu0 0.0
    %1173 = vmatpush2.msra.mxu0 0.0
    %1174 = vmatprep.subr.mxu0 0.0
    %1175 = vmatpush2.msra.mxu0 0.0
    %1176 = vmatprep.subr.mxu0 0.0
    %1177 = vmatpush2.msra.mxu0 0.0
    %1178 = vmatprep.subr.mxu0 0.0
    %1179 = vmatpush2.msra.mxu0 0.0
    %1180 = vmatprep.subr.mxu0 0.0
    %1181 = vmatpush2.msra.mxu0 0.0
    %1182 = vmatprep.subr.mxu0 0.0
    %1183 = vmatpush2.msra.mxu0 0.0
    %1184 = vmatprep.subr.mxu0 0.0
    %1185 = vmatpush2.msra.mxu0 0.0
    %1186 = vmatprep.subr.mxu0 0.0
    %1187 = vmatpush2.msra.mxu0 0.0
    %1188 = vmatprep.subr.mxu0 0.0
    %1189 = vmatpush2.msra.mxu0 0.0
    %1190 = vmatprep.mubr.f32.mxu0 0.0
    %1191 = vmatmul.mubr.f32.gmra.mxu0 %v1121
    %v1192 = vpop.f32.mrf.mxu0
    %v1193 = vadd.f32 %v1118, %v1192
    %v1194 = vpop.f32.mrf.mxu0
    %1195 = vmatprep.mubr.f32.mxu0 0.0
    %1196 = vmatmul.mubr.f32.gmra.mxu0 %v1124
    %v1197 = vpop.f32.mrf.mxu0
    %v1198 = vadd.f32 %v1118, %v1197
    %v1199 = vpop.f32.mrf.mxu0
    %1200 = vdwg.mxu0
    %vm1201 = vcmp.gt.f32.partialorder %v1193, 0.0
    %vm1202 = vcmp.gt.f32.partialorder %v1198, 0.0
    %v1203 = vmin.f32 %v1193, 0.0
    %v1204 = vmin.f32 %v1198, 0.0
    %v1205 = vmul.f32 %v1203, 1.442695
    %v1206 = vpow.pop %v1205
    %v1207 = vmul.f32 %v1204, 1.442695
    %v1208 = vpow.pop %v1207
    %v1209 = vsub.f32 %v1206, 1.0
    %v1210 = vsub.f32 %v1208, 1.0
    %v1211 = vsel %vm1201, %v1193, %v1209
    %v1212 = vsel %vm1202, %v1198, %v1210
    %v1214 = vsel %vm522, %v1211, 0
    %v1217 = vsel %vm522, %v1212, 0
    %1219 = vmatprep.subr.mxu0 0.0
    %1220 = vmatpush1.msra.mxu0 0.0
    %1221 = vmatprep.subr.mxu0 0.0
    %1222 = vmatpush1.msra.mxu0 0.0
    %1223 = vmatprep.subr.mxu0 0.0
    %1224 = vmatpush1.msra.mxu0 0.0
    %1225 = vmatprep.subr.mxu0 0.0
    %1226 = vmatpush1.msra.mxu0 0.0
    %1227 = vmatprep.subr.mxu0 0.0
    %1228 = vmatpush1.msra.mxu0 0.0
    %1229 = vmatprep.subr.mxu0 0.0
    %1230 = vmatpush1.msra.mxu0 0.0
    %1231 = vmatprep.subr.mxu0 0.0
    %1232 = vmatpush1.msra.mxu0 0.0
    %1233 = vmatprep.subr.mxu0 0.0
    %1234 = vmatpush1.msra.mxu0 0.0
    %1235 = vmatprep.subr.mxu0 0.0
    %1236 = vmatpush1.msra.mxu0 0.0
    %1237 = vmatprep.subr.mxu0 0.0
    %1238 = vmatpush1.msra.mxu0 0.0
    %1239 = vmatprep.subr.mxu0 0.0
    %1240 = vmatpush1.msra.mxu0 0.0
    %1241 = vmatprep.subr.mxu0 0.0
    %1242 = vmatpush1.msra.mxu0 0.0
    %1243 = vmatprep.subr.mxu0 0.0
    %1244 = vmatpush1.msra.mxu0 %v803
    %1245 = vmatprep.subr.mxu0 0.0
    %1246 = vmatpush1.msra.mxu0 %v802
    %1247 = vmatprep.subr.mxu0 0.0
    %1248 = vmatpush1.msra.mxu0 %v801
    %1249 = vmatprep.subr.mxu0 0.0
    %1250 = vmatpush1.msra.mxu0 %v800
    %1251 = vmatprep.subr.mxu0 0.0
    %1252 = vmatpush2.msra.mxu0 0.0
    %1253 = vmatprep.subr.mxu0 0.0
    %1254 = vmatpush2.msra.mxu0 0.0
    %1255 = vmatprep.subr.mxu0 0.0
    %1256 = vmatpush2.msra.mxu0 0.0
    %1257 = vmatprep.subr.mxu0 0.0
    %1258 = vmatpush2.msra.mxu0 0.0
    %1259 = vmatprep.subr.mxu0 0.0
    %1260 = vmatpush2.msra.mxu0 0.0
    %1261 = vmatprep.subr.mxu0 0.0
    %1262 = vmatpush2.msra.mxu0 0.0
    %1263 = vmatprep.subr.mxu0 0.0
    %1264 = vmatpush2.msra.mxu0 0.0
    %1265 = vmatprep.subr.mxu0 0.0
    %1266 = vmatpush2.msra.mxu0 0.0
    %1267 = vmatprep.subr.mxu0 0.0
    %1268 = vmatpush2.msra.mxu0 0.0
    %1269 = vmatprep.subr.mxu0 0.0
    %1270 = vmatpush2.msra.mxu0 0.0
    %1271 = vmatprep.subr.mxu0 0.0
    %1272 = vmatpush2.msra.mxu0 0.0
    %1273 = vmatprep.subr.mxu0 0.0
    %1274 = vmatpush2.msra.mxu0 0.0
    %1275 = vmatprep.subr.mxu0 0.0
    %1276 = vmatpush2.msra.mxu0 0.0
    %1277 = vmatprep.subr.mxu0 0.0
    %1278 = vmatpush2.msra.mxu0 0.0
    %1279 = vmatprep.subr.mxu0 0.0
    %1280 = vmatpush2.msra.mxu0 0.0
    %1281 = vmatprep.subr.mxu0 0.0
    %1282 = vmatpush2.msra.mxu0 0.0
    %1283 = vmatprep.mubr.f32.mxu0 0.0
    %1284 = vmatmul.mubr.f32.gmra.mxu0 %v1214
    %v1285 = vpop.f32.mrf.mxu0
    %v1286 = vadd.f32 0.0, %v1285
    %v1287 = vpop.f32.mrf.mxu0
    %1288 = vmatprep.mubr.f32.mxu0 0.0
    %1289 = vmatmul.mubr.f32.gmra.mxu0 %v1217
    %v1290 = vpop.f32.mrf.mxu0
    %v1291 = vadd.f32 0.0, %v1290
    %v1292 = vpop.f32.mrf.mxu0
    %1293 = vdwg.mxu0
    %v1295 = vlaneseq
    %v1296 = vshrl.u32 %v1295, 7
    %v1297 = vsub.s32 0, %v1296
    %v1298 = vrot.slane %v805, %v1297
    %1300 = vmatprep.subr.mxu0 0.0
    %1301 = vmatpush1.msra.mxu0 0.0
    %1302 = vmatprep.subr.mxu0 0.0
    %1303 = vmatpush1.msra.mxu0 0.0
    %1304 = vmatprep.subr.mxu0 0.0
    %1305 = vmatpush1.msra.mxu0 0.0
    %1306 = vmatprep.subr.mxu0 0.0
    %1307 = vmatpush1.msra.mxu0 0.0
    %1308 = vmatprep.subr.mxu0 0.0
    %1309 = vmatpush1.msra.mxu0 0.0
    %1310 = vmatprep.subr.mxu0 0.0
    %1311 = vmatpush1.msra.mxu0 0.0
    %1312 = vmatprep.subr.mxu0 0.0
    %1313 = vmatpush1.msra.mxu0 0.0
    %1314 = vmatprep.subr.mxu0 0.0
    %1315 = vmatpush1.msra.mxu0 0.0
    %1316 = vmatprep.subr.mxu0 0.0
    %1317 = vmatpush1.msra.mxu0 0.0
    %1318 = vmatprep.subr.mxu0 0.0
    %1319 = vmatpush1.msra.mxu0 0.0
    %1320 = vmatprep.subr.mxu0 0.0
    %1321 = vmatpush1.msra.mxu0 0.0
    %1322 = vmatprep.subr.mxu0 0.0
    %1323 = vmatpush1.msra.mxu0 0.0
    %1324 = vmatprep.subr.mxu0 0.0
    %1325 = vmatpush1.msra.mxu0 0.0
    %1326 = vmatprep.subr.mxu0 0.0
    %1327 = vmatpush1.msra.mxu0 0.0
    %1328 = vmatprep.subr.mxu0 0.0
    %1329 = vmatpush1.msra.mxu0 %v1291
    %1330 = vmatprep.subr.mxu0 0.0
    %1331 = vmatpush1.msra.mxu0 %v1286
    %1332 = vmatprep.subr.mxu0 0.0
    %1333 = vmatpush2.msra.mxu0 0.0
    %1334 = vmatprep.subr.mxu0 0.0
    %1335 = vmatpush2.msra.mxu0 0.0
    %1336 = vmatprep.subr.mxu0 0.0
    %1337 = vmatpush2.msra.mxu0 0.0
    %1338 = vmatprep.subr.mxu0 0.0
    %1339 = vmatpush2.msra.mxu0 0.0
    %1340 = vmatprep.subr.mxu0 0.0
    %1341 = vmatpush2.msra.mxu0 0.0
    %1342 = vmatprep.subr.mxu0 0.0
    %1343 = vmatpush2.msra.mxu0 0.0
    %1344 = vmatprep.subr.mxu0 0.0
    %1345 = vmatpush2.msra.mxu0 0.0
    %1346 = vmatprep.subr.mxu0 0.0
    %1347 = vmatpush2.msra.mxu0 0.0
    %1348 = vmatprep.subr.mxu0 0.0
    %1349 = vmatpush2.msra.mxu0 0.0
    %1350 = vmatprep.subr.mxu0 0.0
    %1351 = vmatpush2.msra.mxu0 0.0
    %1352 = vmatprep.subr.mxu0 0.0
    %1353 = vmatpush2.msra.mxu0 0.0
    %1354 = vmatprep.subr.mxu0 0.0
    %1355 = vmatpush2.msra.mxu0 0.0
    %1356 = vmatprep.subr.mxu0 0.0
    %1357 = vmatpush2.msra.mxu0 0.0
    %1358 = vmatprep.subr.mxu0 0.0
    %1359 = vmatpush2.msra.mxu0 0.0
    %1360 = vmatprep.subr.mxu0 0.0
    %1361 = vmatpush2.msra.mxu0 0.0
    %1362 = vmatprep.subr.mxu0 0.0
    %1363 = vmatpush2.msra.mxu0 0.0
    %1364 = vmatprep.mubr.f32.mxu0 0.0
    %1365 = vmatmul.mubr.f32.gmra.mxu0 %v1121
    %v1366 = vpop.f32.mrf.mxu0
    %v1367 = vadd.f32 %v1298, %v1366
    %v1368 = vpop.f32.mrf.mxu0
    %1369 = vmatprep.mubr.f32.mxu0 0.0
    %1370 = vmatmul.mubr.f32.gmra.mxu0 %v1124
    %v1371 = vpop.f32.mrf.mxu0
    %v1372 = vadd.f32 %v1298, %v1371
    %v1373 = vpop.f32.mrf.mxu0
    %1374 = vdwg.mxu0
    %vm1375 = vcmp.gt.f32.partialorder %v1367, 0.0
    %vm1376 = vcmp.gt.f32.partialorder %v1372, 0.0
    %v1377 = vmin.f32 %v1367, 0.0
    %v1378 = vmin.f32 %v1372, 0.0
    %v1379 = vmul.f32 %v1377, 1.442695
    %v1380 = vpow.pop %v1379
    %v1381 = vmul.f32 %v1378, 1.442695
    %v1382 = vpow.pop %v1381
    %v1383 = vsub.f32 %v1380, 1.0
    %v1384 = vsub.f32 %v1382, 1.0
    %v1385 = vsel %vm1375, %v1367, %v1383
    %v1386 = vsel %vm1376, %v1372, %v1384
    %1387 = vst.msk [vmem:[#allocation31] sm:$0xff] %vm522, %v1385
    %1388 = vst.msk [vmem:[#allocation31 + $0x8] sm:$0xff] %vm522, %v1386
    %vm1389 = vcmask 7168
    %1390 = vst.msk [vmem:[%s85] sm:$0xff] %vm1389, %v782
    %1391 = vst.msk [vmem:[%s85 + $0x8] sm:$0xff] %vm1389, %v783
    %1392 = vst.msk [vmem:[%s85 + $0x10] sm:$0xff] %vm1389, %v784
    %1393 = vst.msk [vmem:[%s85 + $0x18] sm:$0xff] %vm1389, %v785
    %1394 = vst.msk [vmem:[%s85 + $0x20] sm:$0xff] %vm1389, %v786
    %1395 = vst.msk [vmem:[%s85 + $0x28] sm:$0xff] %vm1389, %v787
    %v1396 = vld [vmem:[%s73] sm:$0xff]
    %v1398 = vsel %vm851, %v1396, 0
    %1400 = vmatprep.subr.mxu0 0.0
    %1401 = vmatpush1.msra.mxu0 0.0
    %1402 = vmatprep.subr.mxu0 0.0
    %1403 = vmatpush1.msra.mxu0 0.0
    %1404 = vmatprep.subr.mxu0 0.0
    %1405 = vmatpush1.msra.mxu0 0.0
    %1406 = vmatprep.subr.mxu0 0.0
    %1407 = vmatpush1.msra.mxu0 0.0
    %1408 = vmatprep.subr.mxu0 0.0
    %1409 = vmatpush1.msra.mxu0 0.0
    %1410 = vmatprep.subr.mxu0 0.0
    %1411 = vmatpush1.msra.mxu0 0.0
    %1412 = vmatprep.subr.mxu0 0.0
    %1413 = vmatpush1.msra.mxu0 0.0
    %1414 = vmatprep.subr.mxu0 0.0
    %1415 = vmatpush1.msra.mxu0 0.0
    %1416 = vmatprep.subr.mxu0 0.0
    %1417 = vmatpush1.msra.mxu0 0.0
    %1418 = vmatprep.subr.mxu0 0.0
    %1419 = vmatpush1.msra.mxu0 0.0
    %1420 = vmatprep.subr.mxu0 0.0
    %1421 = vmatpush1.msra.mxu0 %v787
    %1422 = vmatprep.subr.mxu0 0.0
    %1423 = vmatpush1.msra.mxu0 %v786
    %1424 = vmatprep.subr.mxu0 0.0
    %1425 = vmatpush1.msra.mxu0 %v785
    %1426 = vmatprep.subr.mxu0 0.0
    %1427 = vmatpush1.msra.mxu0 %v784
    %1428 = vmatprep.subr.mxu0 0.0
    %1429 = vmatpush1.msra.mxu0 %v783
    %1430 = vmatprep.subr.mxu0 0.0
    %1431 = vmatpush1.msra.mxu0 %v782
    %1432 = vmatprep.subr.mxu0 0.0
    %1433 = vmatpush2.msra.mxu0 0.0
    %1434 = vmatprep.subr.mxu0 0.0
    %1435 = vmatpush2.msra.mxu0 0.0
    %1436 = vmatprep.subr.mxu0 0.0
    %1437 = vmatpush2.msra.mxu0 0.0
    %1438 = vmatprep.subr.mxu0 0.0
    %1439 = vmatpush2.msra.mxu0 0.0
    %1440 = vmatprep.subr.mxu0 0.0
    %1441 = vmatpush2.msra.mxu0 0.0
    %1442 = vmatprep.subr.mxu0 0.0
    %1443 = vmatpush2.msra.mxu0 0.0
    %1444 = vmatprep.subr.mxu0 0.0
    %1445 = vmatpush2.msra.mxu0 0.0
    %1446 = vmatprep.subr.mxu0 0.0
    %1447 = vmatpush2.msra.mxu0 0.0
    %1448 = vmatprep.subr.mxu0 0.0
    %1449 = vmatpush2.msra.mxu0 0.0
    %1450 = vmatprep.subr.mxu0 0.0
    %1451 = vmatpush2.msra.mxu0 0.0
    %1452 = vmatprep.subr.mxu0 0.0
    %1453 = vmatpush2.msra.mxu0 0.0
    %1454 = vmatprep.subr.mxu0 0.0
    %1455 = vmatpush2.msra.mxu0 0.0
    %1456 = vmatprep.subr.mxu0 0.0
    %1457 = vmatpush2.msra.mxu0 0.0
    %1458 = vmatprep.subr.mxu0 0.0
    %1459 = vmatpush2.msra.mxu0 0.0
    %1460 = vmatprep.subr.mxu0 0.0
    %1461 = vmatpush2.msra.mxu0 0.0
    %1462 = vmatprep.subr.mxu0 0.0
    %1463 = vmatpush2.msra.mxu0 0.0
    %1464 = vmatprep.mubr.f32.mxu0 0.0
    %1465 = vmatmul.mubr.f32.gmra.mxu0 %v1398
    %v1466 = vpop.f32.mrf.mxu0
    %v1467 = vadd.f32 0.0, %v1466
    %v1468 = vpop.f32.mrf.mxu0
    %1469 = vdwg.mxu0
    %v1470 = vld [vmem:[#allocation24] sm:$0x1]
    %v1471 = vld [vmem:[#allocation25] sm:$0x1]
    %v1472 = vld [vmem:[#allocation27] sm:$0x1]
    %v1473 = vld [vmem:[#allocation3] sm:$0x1]
    %1475 = vset.pattern.permute.xlu0 0
    %1476 = vperm.xlu0 %1475, %v1467
    %v1477 = vpop.permute.xlu0 %1476
    %v1480 = vlaneseq
    %v1481 = vshrl.u32 %v1480, 7
    %v1482 = vsub.s32 0, %v1481
    %v1483 = vrot.slane %v1470, %v1482
    %v1485 = vmul.f32 %v1477, %v1483
    %v1487 = vlaneseq
    %v1488 = vshrl.u32 %v1487, 7
    %v1489 = vsub.s32 0, %v1488
    %v1490 = vrot.slane %v1471, %v1489
    %v1492 = vadd.f32 %v1485, %v1490
    %vm1493 = vcmp.gt.f32.partialorder %v1492, 0.0
    %v1494 = vmin.f32 %v1492, 0.0
    %v1495 = vmul.f32 %v1494, 1.442695
    %v1496 = vpow.pop %v1495
    %v1497 = vsub.f32 %v1496, 1.0
    %v1498 = vsel %vm1493, %v1492, %v1497
    %v1500 = vlaneseq
    %v1501 = vshrl.u32 %v1500, 7
    %v1502 = vsub.s32 0, %v1501
    %v1503 = vrot.slane %v1472, %v1502
    %v1505 = vmul.f32 %v1498, %v1503
    %v1506 = vsel %vm522, %v1505, 0.0
    %1507 = vadd.xlane.f32.xlu0 %v1506
    %v1508 = vpop.xlane.xlu0 %1507
    %v1510 = vlaneseq
    %v1511 = vshrl.u32 %v1510, 7
    %v1512 = vsub.s32 0, %v1511
    %v1513 = vrot.slane %v1473, %v1512
    %v1515 = vadd.f32 %v1508, %v1513
    %vm1516 = vcmp.gt.f32.partialorder %v1515, 0.0
    %v1517 = vmin.f32 %v1515, 0.0
    %v1518 = vmul.f32 %v1517, 1.442695
    %v1519 = vpow.pop %v1518
    %v1520 = vsub.f32 %v1519, 1.0
    %v1521 = vsel %vm1516, %v1515, %v1520
    %v1522 = vld [vmem:[%s77] sm:$0xff]
    %v1523 = vld [vmem:[%s77 + $0x8] sm:$0xff]
    %v1524 = vld [vmem:[%s79] sm:$0xff]
    %v1525 = vld [vmem:[%s79 + $0x8] sm:$0xff]
    %v1526 = vsub.f32 %v1522, %v1524
    %v1527 = vsub.f32 %v1523, %v1525
    %v1528 = vmul.f32 %v1526, %v1526
    %v1529 = vmul.f32 %v1527, %v1527
    %vm1530 = vcmask 15360
    %v1531 = vsel %vm1530, %v1528, 0.0
    %1532 = vadd.xlane.f32.xlu0 %v1531
    %v1533 = vpop.xlane.xlu0 %1532
    %v1534 = vsel %vm1530, %v1529, 0.0
    %1535 = vadd.xlane.f32.xlu0 %v1534
    %v1536 = vpop.xlane.xlu0 %1535
    %v1537 = vrsqrt.pop %v1533
    %v1538 = vmul.f32 %v1533, %v1537
    %vm1539 = vcmp.eq.f32.partialorder %v1533, inf
    %v1540 = vsel %vm1539, %v1533, %v1538
    %vm1541 = vcmp.eq.f32.partialorder %v1533, 0.0
    %v1542 = vand.u32 %v1533, 2147483648
    %v1543 = vsel %vm1541, %v1542, %v1540
    %v1544 = vrsqrt.pop %v1536
    %v1545 = vmul.f32 %v1536, %v1544
    %vm1546 = vcmp.eq.f32.partialorder %v1536, inf
    %v1547 = vsel %vm1546, %v1536, %v1545
    %vm1548 = vcmp.eq.f32.partialorder %v1536, 0.0
    %v1549 = vand.u32 %v1536, 2147483648
    %v1550 = vsel %vm1548, %v1549, %v1547
    %v1551 = vadd.f32 %v1543, 1e-08
    %v1552 = vadd.f32 %v1550, 1e-08
    %v1553 = vrcp.pop %v1551
    %v1554 = vmul.f32 %v1526, %v1553
    %v1555 = vrcp.pop %v1552
    %v1556 = vmul.f32 %v1527, %v1555
    %v1558 = vlaneseq
    %v1559 = vshrl.u32 %v1558, 7
    %v1560 = vsub.s32 0, %v1559
    %v1561 = vrot.slane %v394, %v1560
    %v1564 = vsel %vm1530, %v1554, 0
    %v1567 = vsel %vm1530, %v1556, 0
    %vm1569 = vcmask 1041408
    %v1571 = vsel %vm1569, %v389, 0
    %1573 = vmatprep.subr.mxu0 0.0
    %1574 = vmatpush1.msra.mxu0 0.0
    %1575 = vmatprep.subr.mxu0 0.0
    %1576 = vmatpush1.msra.mxu0 0.0
    %1577 = vmatprep.subr.mxu0 0.0
    %1578 = vmatpush1.msra.mxu0 0.0
    %1579 = vmatprep.subr.mxu0 0.0
    %1580 = vmatpush1.msra.mxu0 0.0
    %1581 = vmatprep.subr.mxu0 0.0
    %1582 = vmatpush1.msra.mxu0 0.0
    %1583 = vmatprep.subr.mxu0 0.0
    %1584 = vmatpush1.msra.mxu0 0.0
    %1585 = vmatprep.subr.mxu0 0.0
    %1586 = vmatpush1.msra.mxu0 0.0
    %1587 = vmatprep.subr.mxu0 0.0
    %1588 = vmatpush1.msra.mxu0 0.0
    %1589 = vmatprep.subr.mxu0 0.0
    %1590 = vmatpush1.msra.mxu0 0.0
    %1591 = vmatprep.subr.mxu0 0.0
    %1592 = vmatpush1.msra.mxu0 0.0
    %1593 = vmatprep.subr.mxu0 0.0
    %1594 = vmatpush1.msra.mxu0 0.0
    %1595 = vmatprep.subr.mxu0 0.0
    %1596 = vmatpush1.msra.mxu0 0.0
    %1597 = vmatprep.subr.mxu0 0.0
    %1598 = vmatpush1.msra.mxu0 0.0
    %1599 = vmatprep.subr.mxu0 0.0
    %1600 = vmatpush1.msra.mxu0 0.0
    %1601 = vmatprep.subr.mxu0 0.0
    %1602 = vmatpush1.msra.mxu0 0.0
    %1603 = vmatprep.subr.mxu0 0.0
    %1604 = vmatpush1.msra.mxu0 %v1571
    %1605 = vmatprep.subr.mxu0 0.0
    %1606 = vmatpush2.msra.mxu0 0.0
    %1607 = vmatprep.subr.mxu0 0.0
    %1608 = vmatpush2.msra.mxu0 0.0
    %1609 = vmatprep.subr.mxu0 0.0
    %1610 = vmatpush2.msra.mxu0 0.0
    %1611 = vmatprep.subr.mxu0 0.0
    %1612 = vmatpush2.msra.mxu0 0.0
    %1613 = vmatprep.subr.mxu0 0.0
    %1614 = vmatpush2.msra.mxu0 0.0
    %1615 = vmatprep.subr.mxu0 0.0
    %1616 = vmatpush2.msra.mxu0 0.0
    %1617 = vmatprep.subr.mxu0 0.0
    %1618 = vmatpush2.msra.mxu0 0.0
    %1619 = vmatprep.subr.mxu0 0.0
    %1620 = vmatpush2.msra.mxu0 0.0
    %1621 = vmatprep.subr.mxu0 0.0
    %1622 = vmatpush2.msra.mxu0 0.0
    %1623 = vmatprep.subr.mxu0 0.0
    %1624 = vmatpush2.msra.mxu0 0.0
    %1625 = vmatprep.subr.mxu0 0.0
    %1626 = vmatpush2.msra.mxu0 0.0
    %1627 = vmatprep.subr.mxu0 0.0
    %1628 = vmatpush2.msra.mxu0 0.0
    %1629 = vmatprep.subr.mxu0 0.0
    %1630 = vmatpush2.msra.mxu0 0.0
    %1631 = vmatprep.subr.mxu0 0.0
    %1632 = vmatpush2.msra.mxu0 0.0
    %1633 = vmatprep.subr.mxu0 0.0
    %1634 = vmatpush2.msra.mxu0 0.0
    %1635 = vmatprep.subr.mxu0 0.0
    %1636 = vmatpush2.msra.mxu0 0.0
    %1637 = vmatprep.mubr.f32.mxu0 0.0
    %1638 = vmatmul.mubr.f32.gmra.mxu0 %v1564
    %v1639 = vpop.f32.mrf.mxu0
    %v1640 = vadd.f32 %v1561, %v1639
    %v1641 = vpop.f32.mrf.mxu0
    %1642 = vmatprep.mubr.f32.mxu0 0.0
    %1643 = vmatmul.mubr.f32.gmra.mxu0 %v1567
    %v1644 = vpop.f32.mrf.mxu0
    %v1645 = vadd.f32 %v1561, %v1644
    %v1646 = vpop.f32.mrf.mxu0
    %1647 = vdwg.mxu0
    %vm1648 = vcmp.gt.f32.partialorder %v1640, 0.0
    %vm1649 = vcmp.gt.f32.partialorder %v1645, 0.0
    %v1650 = vmin.f32 %v1640, 0.0
    %v1651 = vmin.f32 %v1645, 0.0
    %v1652 = vmul.f32 %v1650, 1.442695
    %v1653 = vpow.pop %v1652
    %v1654 = vmul.f32 %v1651, 1.442695
    %v1655 = vpow.pop %v1654
    %v1656 = vsub.f32 %v1653, 1.0
    %v1657 = vsub.f32 %v1655, 1.0
    %v1658 = vsel %vm1648, %v1640, %v1656
    %v1659 = vsel %vm1649, %v1645, %v1657
    %v1661 = vlaneseq
    %v1662 = vshrl.u32 %v1661, 7
    %v1663 = vsub.s32 0, %v1662
    %v1664 = vrot.slane %v395, %v1663
    %v1667 = vsel %vm522, %v1658, 0
    %v1670 = vsel %vm522, %v1659, 0
    %1672 = vmatprep.subr.mxu0 0.0
    %1673 = vmatpush1.msra.mxu0 0.0
    %1674 = vmatprep.subr.mxu0 0.0
    %1675 = vmatpush1.msra.mxu0 0.0
    %1676 = vmatprep.subr.mxu0 0.0
    %1677 = vmatpush1.msra.mxu0 0.0
    %1678 = vmatprep.subr.mxu0 0.0
    %1679 = vmatpush1.msra.mxu0 0.0
    %1680 = vmatprep.subr.mxu0 0.0
    %1681 = vmatpush1.msra.mxu0 0.0
    %1682 = vmatprep.subr.mxu0 0.0
    %1683 = vmatpush1.msra.mxu0 0.0
    %1684 = vmatprep.subr.mxu0 0.0
    %1685 = vmatpush1.msra.mxu0 0.0
    %1686 = vmatprep.subr.mxu0 0.0
    %1687 = vmatpush1.msra.mxu0 0.0
    %1688 = vmatprep.subr.mxu0 0.0
    %1689 = vmatpush1.msra.mxu0 0.0
    %1690 = vmatprep.subr.mxu0 0.0
    %1691 = vmatpush1.msra.mxu0 0.0
    %1692 = vmatprep.subr.mxu0 0.0
    %1693 = vmatpush1.msra.mxu0 0.0
    %1694 = vmatprep.subr.mxu0 0.0
    %1695 = vmatpush1.msra.mxu0 0.0
    %1696 = vmatprep.subr.mxu0 0.0
    %1697 = vmatpush1.msra.mxu0 %v393
    %1698 = vmatprep.subr.mxu0 0.0
    %1699 = vmatpush1.msra.mxu0 %v392
    %1700 = vmatprep.subr.mxu0 0.0
    %1701 = vmatpush1.msra.mxu0 %v391
    %1702 = vmatprep.subr.mxu0 0.0
    %1703 = vmatpush1.msra.mxu0 %v390
    %1704 = vmatprep.subr.mxu0 0.0
    %1705 = vmatpush2.msra.mxu0 0.0
    %1706 = vmatprep.subr.mxu0 0.0
    %1707 = vmatpush2.msra.mxu0 0.0
    %1708 = vmatprep.subr.mxu0 0.0
    %1709 = vmatpush2.msra.mxu0 0.0
    %1710 = vmatprep.subr.mxu0 0.0
    %1711 = vmatpush2.msra.mxu0 0.0
    %1712 = vmatprep.subr.mxu0 0.0
    %1713 = vmatpush2.msra.mxu0 0.0
    %1714 = vmatprep.subr.mxu0 0.0
    %1715 = vmatpush2.msra.mxu0 0.0
    %1716 = vmatprep.subr.mxu0 0.0
    %1717 = vmatpush2.msra.mxu0 0.0
    %1718 = vmatprep.subr.mxu0 0.0
    %1719 = vmatpush2.msra.mxu0 0.0
    %1720 = vmatprep.subr.mxu0 0.0
    %1721 = vmatpush2.msra.mxu0 0.0
    %1722 = vmatprep.subr.mxu0 0.0
    %1723 = vmatpush2.msra.mxu0 0.0
    %1724 = vmatprep.subr.mxu0 0.0
    %1725 = vmatpush2.msra.mxu0 0.0
    %1726 = vmatprep.subr.mxu0 0.0
    %1727 = vmatpush2.msra.mxu0 0.0
    %1728 = vmatprep.subr.mxu0 0.0
    %1729 = vmatpush2.msra.mxu0 0.0
    %1730 = vmatprep.subr.mxu0 0.0
    %1731 = vmatpush2.msra.mxu0 0.0
    %1732 = vmatprep.subr.mxu0 0.0
    %1733 = vmatpush2.msra.mxu0 0.0
    %1734 = vmatprep.subr.mxu0 0.0
    %1735 = vmatpush2.msra.mxu0 0.0
    %1736 = vmatprep.mubr.f32.mxu0 0.0
    %1737 = vmatmul.mubr.f32.gmra.mxu0 %v1667
    %v1738 = vpop.f32.mrf.mxu0
    %v1739 = vadd.f32 %v1664, %v1738
    %v1740 = vpop.f32.mrf.mxu0
    %1741 = vmatprep.mubr.f32.mxu0 0.0
    %1742 = vmatmul.mubr.f32.gmra.mxu0 %v1670
    %v1743 = vpop.f32.mrf.mxu0
    %v1744 = vadd.f32 %v1664, %v1743
    %v1745 = vpop.f32.mrf.mxu0
    %1746 = vdwg.mxu0
    %vm1747 = vcmp.gt.f32.partialorder %v1739, 0.0
    %vm1748 = vcmp.gt.f32.partialorder %v1744, 0.0
    %v1749 = vmin.f32 %v1739, 0.0
    %v1750 = vmin.f32 %v1744, 0.0
    %v1751 = vmul.f32 %v1749, 1.442695
    %v1752 = vpow.pop %v1751
    %v1753 = vmul.f32 %v1750, 1.442695
    %v1754 = vpow.pop %v1753
    %v1755 = vsub.f32 %v1752, 1.0
    %v1756 = vsub.f32 %v1754, 1.0
    %v1757 = vsel %vm1747, %v1739, %v1755
    %v1758 = vsel %vm1748, %v1744, %v1756
    %v1760 = vsel %vm522, %v1385, 0
    %v1763 = vsel %vm522, %v1386, 0
    %1765 = vmatprep.subr.mxu0 0.0
    %1766 = vmatpush1.msra.mxu0 0.0
    %1767 = vmatprep.subr.mxu0 0.0
    %1768 = vmatpush1.msra.mxu0 0.0
    %1769 = vmatprep.subr.mxu0 0.0
    %1770 = vmatpush1.msra.mxu0 0.0
    %1771 = vmatprep.subr.mxu0 0.0
    %1772 = vmatpush1.msra.mxu0 0.0
    %1773 = vmatprep.subr.mxu0 0.0
    %1774 = vmatpush1.msra.mxu0 0.0
    %1775 = vmatprep.subr.mxu0 0.0
    %1776 = vmatpush1.msra.mxu0 0.0
    %1777 = vmatprep.subr.mxu0 0.0
    %1778 = vmatpush1.msra.mxu0 0.0
    %1779 = vmatprep.subr.mxu0 0.0
    %1780 = vmatpush1.msra.mxu0 0.0
    %1781 = vmatprep.subr.mxu0 0.0
    %1782 = vmatpush1.msra.mxu0 0.0
    %1783 = vmatprep.subr.mxu0 0.0
    %1784 = vmatpush1.msra.mxu0 0.0
    %1785 = vmatprep.subr.mxu0 0.0
    %1786 = vmatpush1.msra.mxu0 0.0
    %1787 = vmatprep.subr.mxu0 0.0
    %1788 = vmatpush1.msra.mxu0 0.0
    %1789 = vmatprep.subr.mxu0 0.0
    %1790 = vmatpush1.msra.mxu0 %v403
    %1791 = vmatprep.subr.mxu0 0.0
    %1792 = vmatpush1.msra.mxu0 %v402
    %1793 = vmatprep.subr.mxu0 0.0
    %1794 = vmatpush1.msra.mxu0 %v401
    %1795 = vmatprep.subr.mxu0 0.0
    %1796 = vmatpush1.msra.mxu0 %v400
    %1797 = vmatprep.subr.mxu0 0.0
    %1798 = vmatpush2.msra.mxu0 0.0
    %1799 = vmatprep.subr.mxu0 0.0
    %1800 = vmatpush2.msra.mxu0 0.0
    %1801 = vmatprep.subr.mxu0 0.0
    %1802 = vmatpush2.msra.mxu0 0.0
    %1803 = vmatprep.subr.mxu0 0.0
    %1804 = vmatpush2.msra.mxu0 0.0
    %1805 = vmatprep.subr.mxu0 0.0
    %1806 = vmatpush2.msra.mxu0 0.0
    %1807 = vmatprep.subr.mxu0 0.0
    %1808 = vmatpush2.msra.mxu0 0.0
    %1809 = vmatprep.subr.mxu0 0.0
    %1810 = vmatpush2.msra.mxu0 0.0
    %1811 = vmatprep.subr.mxu0 0.0
    %1812 = vmatpush2.msra.mxu0 0.0
    %1813 = vmatprep.subr.mxu0 0.0
    %1814 = vmatpush2.msra.mxu0 0.0
    %1815 = vmatprep.subr.mxu0 0.0
    %1816 = vmatpush2.msra.mxu0 0.0
    %1817 = vmatprep.subr.mxu0 0.0
    %1818 = vmatpush2.msra.mxu0 0.0
    %1819 = vmatprep.subr.mxu0 0.0
    %1820 = vmatpush2.msra.mxu0 0.0
    %1821 = vmatprep.subr.mxu0 0.0
    %1822 = vmatpush2.msra.mxu0 0.0
    %1823 = vmatprep.subr.mxu0 0.0
    %1824 = vmatpush2.msra.mxu0 0.0
    %1825 = vmatprep.subr.mxu0 0.0
    %1826 = vmatpush2.msra.mxu0 0.0
    %1827 = vmatprep.subr.mxu0 0.0
    %1828 = vmatpush2.msra.mxu0 0.0
    %1829 = vmatprep.mubr.f32.mxu0 0.0
    %1830 = vmatmul.mubr.f32.gmra.mxu0 %v1760
    %v1831 = vpop.f32.mrf.mxu0
    %v1832 = vadd.f32 0.0, %v1831
    %v1833 = vpop.f32.mrf.mxu0
    %1834 = vmatprep.mubr.f32.mxu0 0.0
    %1835 = vmatmul.mubr.f32.gmra.mxu0 %v1763
    %v1836 = vpop.f32.mrf.mxu0
    %v1837 = vadd.f32 0.0, %v1836
    %v1838 = vpop.f32.mrf.mxu0
    %1839 = vdwg.mxu0
    %v1841 = vsel %vm522, %v1757, 0
    %v1844 = vsel %vm522, %v1758, 0
    %1846 = vmatprep.subr.mxu0 0.0
    %1847 = vmatpush1.msra.mxu0 0.0
    %1848 = vmatprep.subr.mxu0 0.0
    %1849 = vmatpush1.msra.mxu0 0.0
    %1850 = vmatprep.subr.mxu0 0.0
    %1851 = vmatpush1.msra.mxu0 0.0
    %1852 = vmatprep.subr.mxu0 0.0
    %1853 = vmatpush1.msra.mxu0 0.0
    %1854 = vmatprep.subr.mxu0 0.0
    %1855 = vmatpush1.msra.mxu0 0.0
    %1856 = vmatprep.subr.mxu0 0.0
    %1857 = vmatpush1.msra.mxu0 0.0
    %1858 = vmatprep.subr.mxu0 0.0
    %1859 = vmatpush1.msra.mxu0 0.0
    %1860 = vmatprep.subr.mxu0 0.0
    %1861 = vmatpush1.msra.mxu0 0.0
    %1862 = vmatprep.subr.mxu0 0.0
    %1863 = vmatpush1.msra.mxu0 0.0
    %1864 = vmatprep.subr.mxu0 0.0
    %1865 = vmatpush1.msra.mxu0 0.0
    %1866 = vmatprep.subr.mxu0 0.0
    %1867 = vmatpush1.msra.mxu0 0.0
    %1868 = vmatprep.subr.mxu0 0.0
    %1869 = vmatpush1.msra.mxu0 0.0
    %1870 = vmatprep.subr.mxu0 0.0
    %1871 = vmatpush1.msra.mxu0 %v399
    %1872 = vmatprep.subr.mxu0 0.0
    %1873 = vmatpush1.msra.mxu0 %v398
    %1874 = vmatprep.subr.mxu0 0.0
    %1875 = vmatpush1.msra.mxu0 %v397
    %1876 = vmatprep.subr.mxu0 0.0
    %1877 = vmatpush1.msra.mxu0 %v396
    %1878 = vmatprep.subr.mxu0 0.0
    %1879 = vmatpush2.msra.mxu0 0.0
    %1880 = vmatprep.subr.mxu0 0.0
    %1881 = vmatpush2.msra.mxu0 0.0
    %1882 = vmatprep.subr.mxu0 0.0
    %1883 = vmatpush2.msra.mxu0 0.0
    %1884 = vmatprep.subr.mxu0 0.0
    %1885 = vmatpush2.msra.mxu0 0.0
    %1886 = vmatprep.subr.mxu0 0.0
    %1887 = vmatpush2.msra.mxu0 0.0
    %1888 = vmatprep.subr.mxu0 0.0
    %1889 = vmatpush2.msra.mxu0 0.0
    %1890 = vmatprep.subr.mxu0 0.0
    %1891 = vmatpush2.msra.mxu0 0.0
    %1892 = vmatprep.subr.mxu0 0.0
    %1893 = vmatpush2.msra.mxu0 0.0
    %1894 = vmatprep.subr.mxu0 0.0
    %1895 = vmatpush2.msra.mxu0 0.0
    %1896 = vmatprep.subr.mxu0 0.0
    %1897 = vmatpush2.msra.mxu0 0.0
    %1898 = vmatprep.subr.mxu0 0.0
    %1899 = vmatpush2.msra.mxu0 0.0
    %1900 = vmatprep.subr.mxu0 0.0
    %1901 = vmatpush2.msra.mxu0 0.0
    %1902 = vmatprep.subr.mxu0 0.0
    %1903 = vmatpush2.msra.mxu0 0.0
    %1904 = vmatprep.subr.mxu0 0.0
    %1905 = vmatpush2.msra.mxu0 0.0
    %1906 = vmatprep.subr.mxu0 0.0
    %1907 = vmatpush2.msra.mxu0 0.0
    %1908 = vmatprep.subr.mxu0 0.0
    %1909 = vmatpush2.msra.mxu0 0.0
    %1910 = vmatprep.mubr.f32.mxu0 0.0
    %1911 = vmatmul.mubr.f32.gmra.mxu0 %v1841
    %v1912 = vpop.f32.mrf.mxu0
    %v1913 = vadd.f32 %v1832, %v1912
    %v1914 = vpop.f32.mrf.mxu0
    %1915 = vmatprep.mubr.f32.mxu0 0.0
    %1916 = vmatmul.mubr.f32.gmra.mxu0 %v1844
    %v1917 = vpop.f32.mrf.mxu0
    %v1918 = vadd.f32 %v1837, %v1917
    %v1919 = vpop.f32.mrf.mxu0
    %1920 = vdwg.mxu0
    %v1922 = vlaneseq
    %v1923 = vshrl.u32 %v1922, 7
    %v1924 = vsub.s32 0, %v1923
    %v1925 = vrot.slane %v408, %v1924
    %v1927 = vadd.f32 %v1913, %v1925
    %v1928 = vadd.f32 %v1918, %v1925
    %vm1929 = vcmp.gt.f32.partialorder %v1927, 0.0
    %vm1930 = vcmp.gt.f32.partialorder %v1928, 0.0
    %v1931 = vmin.f32 %v1927, 0.0
    %v1932 = vmin.f32 %v1928, 0.0
    %v1933 = vmul.f32 %v1931, 1.442695
    %v1934 = vpow.pop %v1933
    %v1935 = vmul.f32 %v1932, 1.442695
    %v1936 = vpow.pop %v1935
    %v1937 = vsub.f32 %v1934, 1.0
    %v1938 = vsub.f32 %v1936, 1.0
    %v1939 = vsel %vm1929, %v1927, %v1937
    %v1940 = vsel %vm1930, %v1928, %v1938
    %v1942 = vlaneseq
    %v1943 = vshrl.u32 %v1942, 7
    %v1944 = vsub.s32 0, %v1943
    %v1945 = vrot.slane %v409, %v1944
    %v1948 = vsel %vm522, %v1939, 0
    %v1951 = vsel %vm522, %v1940, 0
    %1953 = vmatprep.subr.mxu0 0.0
    %1954 = vmatpush1.msra.mxu0 0.0
    %1955 = vmatprep.subr.mxu0 0.0
    %1956 = vmatpush1.msra.mxu0 0.0
    %1957 = vmatprep.subr.mxu0 0.0
    %1958 = vmatpush1.msra.mxu0 0.0
    %1959 = vmatprep.subr.mxu0 0.0
    %1960 = vmatpush1.msra.mxu0 0.0
    %1961 = vmatprep.subr.mxu0 0.0
    %1962 = vmatpush1.msra.mxu0 0.0
    %1963 = vmatprep.subr.mxu0 0.0
    %1964 = vmatpush1.msra.mxu0 0.0
    %1965 = vmatprep.subr.mxu0 0.0
    %1966 = vmatpush1.msra.mxu0 0.0
    %1967 = vmatprep.subr.mxu0 0.0
    %1968 = vmatpush1.msra.mxu0 0.0
    %1969 = vmatprep.subr.mxu0 0.0
    %1970 = vmatpush1.msra.mxu0 0.0
    %1971 = vmatprep.subr.mxu0 0.0
    %1972 = vmatpush1.msra.mxu0 0.0
    %1973 = vmatprep.subr.mxu0 0.0
    %1974 = vmatpush1.msra.mxu0 0.0
    %1975 = vmatprep.subr.mxu0 0.0
    %1976 = vmatpush1.msra.mxu0 0.0
    %1977 = vmatprep.subr.mxu0 0.0
    %1978 = vmatpush1.msra.mxu0 %v407
    %1979 = vmatprep.subr.mxu0 0.0
    %1980 = vmatpush1.msra.mxu0 %v406
    %1981 = vmatprep.subr.mxu0 0.0
    %1982 = vmatpush1.msra.mxu0 %v405
    %1983 = vmatprep.subr.mxu0 0.0
    %1984 = vmatpush1.msra.mxu0 %v404
    %1985 = vmatprep.subr.mxu0 0.0
    %1986 = vmatpush2.msra.mxu0 0.0
    %1987 = vmatprep.subr.mxu0 0.0
    %1988 = vmatpush2.msra.mxu0 0.0
    %1989 = vmatprep.subr.mxu0 0.0
    %1990 = vmatpush2.msra.mxu0 0.0
    %1991 = vmatprep.subr.mxu0 0.0
    %1992 = vmatpush2.msra.mxu0 0.0
    %1993 = vmatprep.subr.mxu0 0.0
    %1994 = vmatpush2.msra.mxu0 0.0
    %1995 = vmatprep.subr.mxu0 0.0
    %1996 = vmatpush2.msra.mxu0 0.0
    %1997 = vmatprep.subr.mxu0 0.0
    %1998 = vmatpush2.msra.mxu0 0.0
    %1999 = vmatprep.subr.mxu0 0.0
    %2000 = vmatpush2.msra.mxu0 0.0
    %2001 = vmatprep.subr.mxu0 0.0
    %2002 = vmatpush2.msra.mxu0 0.0
    %2003 = vmatprep.subr.mxu0 0.0
    %2004 = vmatpush2.msra.mxu0 0.0
    %2005 = vmatprep.subr.mxu0 0.0
    %2006 = vmatpush2.msra.mxu0 0.0
    %2007 = vmatprep.subr.mxu0 0.0
    %2008 = vmatpush2.msra.mxu0 0.0
    %2009 = vmatprep.subr.mxu0 0.0
    %2010 = vmatpush2.msra.mxu0 0.0
    %2011 = vmatprep.subr.mxu0 0.0
    %2012 = vmatpush2.msra.mxu0 0.0
    %2013 = vmatprep.subr.mxu0 0.0
    %2014 = vmatpush2.msra.mxu0 0.0
    %2015 = vmatprep.subr.mxu0 0.0
    %2016 = vmatpush2.msra.mxu0 0.0
    %2017 = vmatprep.mubr.f32.mxu0 0.0
    %2018 = vmatmul.mubr.f32.gmra.mxu0 %v1948
    %v2019 = vpop.f32.mrf.mxu0
    %v2020 = vadd.f32 %v1945, %v2019
    %v2021 = vpop.f32.mrf.mxu0
    %2022 = vmatprep.mubr.f32.mxu0 0.0
    %2023 = vmatmul.mubr.f32.gmra.mxu0 %v1951
    %v2024 = vpop.f32.mrf.mxu0
    %v2025 = vadd.f32 %v1945, %v2024
    %v2026 = vpop.f32.mrf.mxu0
    %2027 = vdwg.mxu0
    %vm2028 = vcmp.gt.f32.partialorder %v2020, 0.0
    %vm2029 = vcmp.gt.f32.partialorder %v2025, 0.0
    %v2030 = vmin.f32 %v2020, 0.0
    %v2031 = vmin.f32 %v2025, 0.0
    %v2032 = vmul.f32 %v2030, 1.442695
    %v2033 = vpow.pop %v2032
    %v2034 = vmul.f32 %v2031, 1.442695
    %v2035 = vpow.pop %v2034
    %v2036 = vsub.f32 %v2033, 1.0
    %v2037 = vsub.f32 %v2035, 1.0
    %v2038 = vsel %vm2028, %v2020, %v2036
    %v2039 = vsel %vm2029, %v2025, %v2037
    %v2040 = vadd.f32 %v1757, %v2038
    %v2041 = vadd.f32 %v1758, %v2039
    %v2042 = vsel %vm522, %v2040, 0.0
    %2043 = vadd.xlane.f32.xlu0 %v2042
    %v2044 = vpop.xlane.xlu0 %2043
    %v2045 = vsel %vm522, %v2041, 0.0
    %2046 = vadd.xlane.f32.xlu0 %v2045
    %v2047 = vpop.xlane.xlu0 %2046
    %v2048 = vrcp.pop 32.0
    %v2049 = vmul.f32 %v2044, %v2048
    %v2050 = vmul.f32 %v2047, %v2048
    %v2051 = vsub.f32 %v2040, %v2049
    %v2052 = vsub.f32 %v2041, %v2050
    %v2053 = vmul.f32 %v2051, %v2051
    %v2054 = vmul.f32 %v2052, %v2052
    %v2055 = vsel %vm522, %v2053, 0.0
    %2056 = vadd.xlane.f32.xlu0 %v2055
    %v2057 = vpop.xlane.xlu0 %2056
    %v2058 = vsel %vm522, %v2054, 0.0
    %2059 = vadd.xlane.f32.xlu0 %v2058
    %v2060 = vpop.xlane.xlu0 %2059
    %v2061 = vmul.f32 %v2057, %v2048
    %v2062 = vmul.f32 %v2060, %v2048
    %v2063 = vadd.f32 %v2061, 1e-05
    %v2064 = vadd.f32 %v2062, 1e-05
    %v2065 = vrsqrt.pop %v2063
    %v2066 = vrsqrt.pop %v2064
    %v2067 = vmul.f32 %v2051, %v2065
    %v2068 = vmul.f32 %v2052, %v2066
    %v2070 = vlaneseq
    %v2071 = vshrl.u32 %v2070, 7
    %v2072 = vsub.s32 0, %v2071
    %v2073 = vrot.slane %v410, %v2072
    %v2075 = vmul.f32 %v2067, %v2073
    %v2076 = vmul.f32 %v2068, %v2073
    %v2078 = vlaneseq
    %v2079 = vshrl.u32 %v2078, 7
    %v2080 = vsub.s32 0, %v2079
    %v2081 = vrot.slane %v411, %v2080
    %v2083 = vadd.f32 %v2075, %v2081
    %v2084 = vadd.f32 %v2076, %v2081
    %v2085 = vld [vmem:[%s75] sm:$0xf]
    %v2087 = vsel %vm933, %v2085, 0
    %2089 = vmatprep.subr.mxu0 0.0
    %2090 = vmatpush1.msra.mxu0 0.0
    %2091 = vmatprep.subr.mxu0 0.0
    %2092 = vmatpush1.msra.mxu0 0.0
    %2093 = vmatprep.subr.mxu0 0.0
    %2094 = vmatpush1.msra.mxu0 0.0
    %2095 = vmatprep.subr.mxu0 0.0
    %2096 = vmatpush1.msra.mxu0 0.0
    %2097 = vmatprep.subr.mxu0 0.0
    %2098 = vmatpush1.msra.mxu0 0.0
    %2099 = vmatprep.subr.mxu0 0.0
    %2100 = vmatpush1.msra.mxu0 0.0
    %2101 = vmatprep.subr.mxu0 0.0
    %2102 = vmatpush1.msra.mxu0 0.0
    %2103 = vmatprep.subr.mxu0 0.0
    %2104 = vmatpush1.msra.mxu0 0.0
    %2105 = vmatprep.subr.mxu0 0.0
    %2106 = vmatpush1.msra.mxu0 0.0
    %2107 = vmatprep.subr.mxu0 0.0
    %2108 = vmatpush1.msra.mxu0 0.0
    %2109 = vmatprep.subr.mxu0 0.0
    %2110 = vmatpush1.msra.mxu0 0.0
    %2111 = vmatprep.subr.mxu0 0.0
    %2112 = vmatpush1.msra.mxu0 0.0
    %2113 = vmatprep.subr.mxu0 0.0
    %2114 = vmatpush1.msra.mxu0 0.0
    %2115 = vmatprep.subr.mxu0 0.0
    %2116 = vmatpush1.msra.mxu0 0.0
    %2117 = vmatprep.subr.mxu0 0.0
    %2118 = vmatpush1.msra.mxu0 %v2084
    %2119 = vmatprep.subr.mxu0 0.0
    %2120 = vmatpush1.msra.mxu0 %v2083
    %2121 = vmatprep.subr.mxu0 0.0
    %2122 = vmatpush2.msra.mxu0 0.0
    %2123 = vmatprep.subr.mxu0 0.0
    %2124 = vmatpush2.msra.mxu0 0.0
    %2125 = vmatprep.subr.mxu0 0.0
    %2126 = vmatpush2.msra.mxu0 0.0
    %2127 = vmatprep.subr.mxu0 0.0
    %2128 = vmatpush2.msra.mxu0 0.0
    %2129 = vmatprep.subr.mxu0 0.0
    %2130 = vmatpush2.msra.mxu0 0.0
    %2131 = vmatprep.subr.mxu0 0.0
    %2132 = vmatpush2.msra.mxu0 0.0
    %2133 = vmatprep.subr.mxu0 0.0
    %2134 = vmatpush2.msra.mxu0 0.0
    %2135 = vmatprep.subr.mxu0 0.0
    %2136 = vmatpush2.msra.mxu0 0.0
    %2137 = vmatprep.subr.mxu0 0.0
    %2138 = vmatpush2.msra.mxu0 0.0
    %2139 = vmatprep.subr.mxu0 0.0
    %2140 = vmatpush2.msra.mxu0 0.0
    %2141 = vmatprep.subr.mxu0 0.0
    %2142 = vmatpush2.msra.mxu0 0.0
    %2143 = vmatprep.subr.mxu0 0.0
    %2144 = vmatpush2.msra.mxu0 0.0
    %2145 = vmatprep.subr.mxu0 0.0
    %2146 = vmatpush2.msra.mxu0 0.0
    %2147 = vmatprep.subr.mxu0 0.0
    %2148 = vmatpush2.msra.mxu0 0.0
    %2149 = vmatprep.subr.mxu0 0.0
    %2150 = vmatpush2.msra.mxu0 0.0
    %2151 = vmatprep.subr.mxu0 0.0
    %2152 = vmatpush2.msra.mxu0 0.0
    %2153 = vmatprep.mubr.f32.mxu0 0.0
    %2154 = vmatmul.mubr.f32.gmra.mxu0 %v2087
    %v2155 = vpop.f32.mrf.mxu0
    %v2156 = vadd.f32 0.0, %v2155
    %v2157 = vpop.f32.mrf.mxu0
    %2158 = vdwg.mxu0
    %v2159 = vld [vmem:[%s61] sm:$0xf]
    %v2160 = vld [vmem:[%s63] sm:$0xff]
    %v2161 = vld [vmem:[%s65] sm:$0xff]
    %v2162 = vld [vmem:[%s65 + $0x8] sm:$0xff]
    %v2163 = vld [vmem:[%s65 + $0x10] sm:$0xff]
    %v2164 = vld [vmem:[%s65 + $0x18] sm:$0xff]
    %v2165 = vld [vmem:[%s67] sm:$0xff]
    %v2166 = vld [vmem:[%s67 + $0x8] sm:$0xff]
    %v2167 = vld [vmem:[%s67 + $0x10] sm:$0xff]
    %v2168 = vld [vmem:[%s67 + $0x18] sm:$0xff]
    %v2169 = vld [vmem:[#allocation28] sm:$0x1]
    %v2170 = vld [vmem:[#allocation30] sm:$0x1]
    %2172 = vset.pattern.permute.xlu0 0
    %2173 = vperm.xlu0 %2172, %v1521
    %v2174 = vpop.permute.xlu0 %2173
    %v2176 = vmul.f32 %v2174, %v2160
    %vm2177 = vcmask 64512
    %v2179 = vsel %vm2177, %v2159, 0
    %2181 = vmatprep.subr.mxu0 0.0
    %2182 = vmatpush1.msra.mxu0 0.0
    %2183 = vmatprep.subr.mxu0 0.0
    %2184 = vmatpush1.msra.mxu0 0.0
    %2185 = vmatprep.subr.mxu0 0.0
    %2186 = vmatpush1.msra.mxu0 0.0
    %2187 = vmatprep.subr.mxu0 0.0
    %2188 = vmatpush1.msra.mxu0 0.0
    %2189 = vmatprep.subr.mxu0 0.0
    %2190 = vmatpush1.msra.mxu0 0.0
    %2191 = vmatprep.subr.mxu0 0.0
    %2192 = vmatpush1.msra.mxu0 0.0
    %2193 = vmatprep.subr.mxu0 0.0
    %2194 = vmatpush1.msra.mxu0 0.0
    %2195 = vmatprep.subr.mxu0 0.0
    %2196 = vmatpush1.msra.mxu0 0.0
    %2197 = vmatprep.subr.mxu0 0.0
    %2198 = vmatpush1.msra.mxu0 0.0
    %2199 = vmatprep.subr.mxu0 0.0
    %2200 = vmatpush1.msra.mxu0 0.0
    %2201 = vmatprep.subr.mxu0 0.0
    %2202 = vmatpush1.msra.mxu0 0.0
    %2203 = vmatprep.subr.mxu0 0.0
    %2204 = vmatpush1.msra.mxu0 0.0
    %2205 = vmatprep.subr.mxu0 0.0
    %2206 = vmatpush1.msra.mxu0 0.0
    %2207 = vmatprep.subr.mxu0 0.0
    %2208 = vmatpush1.msra.mxu0 0.0
    %2209 = vmatprep.subr.mxu0 0.0
    %2210 = vmatpush1.msra.mxu0 0.0
    %2211 = vmatprep.subr.mxu0 0.0
    %2212 = vmatpush1.msra.mxu0 %v2176
    %2213 = vmatprep.subr.mxu0 0.0
    %2214 = vmatpush2.msra.mxu0 0.0
    %2215 = vmatprep.subr.mxu0 0.0
    %2216 = vmatpush2.msra.mxu0 0.0
    %2217 = vmatprep.subr.mxu0 0.0
    %2218 = vmatpush2.msra.mxu0 0.0
    %2219 = vmatprep.subr.mxu0 0.0
    %2220 = vmatpush2.msra.mxu0 0.0
    %2221 = vmatprep.subr.mxu0 0.0
    %2222 = vmatpush2.msra.mxu0 0.0
    %2223 = vmatprep.subr.mxu0 0.0
    %2224 = vmatpush2.msra.mxu0 0.0
    %2225 = vmatprep.subr.mxu0 0.0
    %2226 = vmatpush2.msra.mxu0 0.0
    %2227 = vmatprep.subr.mxu0 0.0
    %2228 = vmatpush2.msra.mxu0 0.0
    %2229 = vmatprep.subr.mxu0 0.0
    %2230 = vmatpush2.msra.mxu0 0.0
    %2231 = vmatprep.subr.mxu0 0.0
    %2232 = vmatpush2.msra.mxu0 0.0
    %2233 = vmatprep.subr.mxu0 0.0
    %2234 = vmatpush2.msra.mxu0 0.0
    %2235 = vmatprep.subr.mxu0 0.0
    %2236 = vmatpush2.msra.mxu0 0.0
    %2237 = vmatprep.subr.mxu0 0.0
    %2238 = vmatpush2.msra.mxu0 0.0
    %2239 = vmatprep.subr.mxu0 0.0
    %2240 = vmatpush2.msra.mxu0 0.0
    %2241 = vmatprep.subr.mxu0 0.0
    %2242 = vmatpush2.msra.mxu0 0.0
    %2243 = vmatprep.subr.mxu0 0.0
    %2244 = vmatpush2.msra.mxu0 0.0
    %2245 = vmatprep.mubr.f32.mxu0 0.0
    %2246 = vmatmul.mubr.f32.gmra.mxu0 %v2179
    %v2247 = vpop.f32.mrf.mxu0
    %v2248 = vadd.f32 %v849, %v2247
    %v2249 = vpop.f32.mrf.mxu0
    %2250 = vdwg.mxu0
    %vm2251 = vcmask 27648
    %v2252 = vsel %vm2251, %v2248, 0.0
    %2253 = vadd.xlane.f32.xlu0 %v2252
    %v2254 = vpop.xlane.xlu0 %2253
    %vm2255 = vcmp.gt.f32.partialorder %v2254, 0.0
    %v2256 = vmax.f32 %v2254, 1e-12
    %v2257 = vrsqrt.pop %v2256
    %v2258 = vsel %vm2255, %v2257, 0.0
    %v2259 = vmul.f32 %v2258, %v2248
    %v2260 = vmul.f32 %v849, %v2258
    %vm2261 = vcmask 31744
    %v2263 = vsel %vm2261, %v2259, 0
    %vm2265 = vcmask 1043456
    %v2267 = vsel %vm2265, %v2260, 0
    %2269 = vmatprep.subr.mxu0 0.0
    %2270 = vmatpush1.msra.mxu0 0.0
    %2271 = vmatprep.subr.mxu0 0.0
    %2272 = vmatpush1.msra.mxu0 0.0
    %2273 = vmatprep.subr.mxu0 0.0
    %2274 = vmatpush1.msra.mxu0 0.0
    %2275 = vmatprep.subr.mxu0 0.0
    %2276 = vmatpush1.msra.mxu0 0.0
    %2277 = vmatprep.subr.mxu0 0.0
    %2278 = vmatpush1.msra.mxu0 0.0
    %2279 = vmatprep.subr.mxu0 0.0
    %2280 = vmatpush1.msra.mxu0 0.0
    %2281 = vmatprep.subr.mxu0 0.0
    %2282 = vmatpush1.msra.mxu0 0.0
    %2283 = vmatprep.subr.mxu0 0.0
    %2284 = vmatpush1.msra.mxu0 0.0
    %2285 = vmatprep.subr.mxu0 0.0
    %2286 = vmatpush1.msra.mxu0 0.0
    %2287 = vmatprep.subr.mxu0 0.0
    %2288 = vmatpush1.msra.mxu0 0.0
    %2289 = vmatprep.subr.mxu0 0.0
    %2290 = vmatpush1.msra.mxu0 0.0
    %2291 = vmatprep.subr.mxu0 0.0
    %2292 = vmatpush1.msra.mxu0 0.0
    %2293 = vmatprep.subr.mxu0 0.0
    %2294 = vmatpush1.msra.mxu0 0.0
    %2295 = vmatprep.subr.mxu0 0.0
    %2296 = vmatpush1.msra.mxu0 0.0
    %2297 = vmatprep.subr.mxu0 0.0
    %2298 = vmatpush1.msra.mxu0 0.0
    %2299 = vmatprep.subr.mxu0 0.0
    %2300 = vmatpush1.msra.mxu0 %v2267
    %2301 = vmatprep.subr.mxu0 0.0
    %2302 = vmatpush2.msra.mxu0 0.0
    %2303 = vmatprep.subr.mxu0 0.0
    %2304 = vmatpush2.msra.mxu0 0.0
    %2305 = vmatprep.subr.mxu0 0.0
    %2306 = vmatpush2.msra.mxu0 0.0
    %2307 = vmatprep.subr.mxu0 0.0
    %2308 = vmatpush2.msra.mxu0 0.0
    %2309 = vmatprep.subr.mxu0 0.0
    %2310 = vmatpush2.msra.mxu0 0.0
    %2311 = vmatprep.subr.mxu0 0.0
    %2312 = vmatpush2.msra.mxu0 0.0
    %2313 = vmatprep.subr.mxu0 0.0
    %2314 = vmatpush2.msra.mxu0 0.0
    %2315 = vmatprep.subr.mxu0 0.0
    %2316 = vmatpush2.msra.mxu0 0.0
    %2317 = vmatprep.subr.mxu0 0.0
    %2318 = vmatpush2.msra.mxu0 0.0
    %2319 = vmatprep.subr.mxu0 0.0
    %2320 = vmatpush2.msra.mxu0 0.0
    %2321 = vmatprep.subr.mxu0 0.0
    %2322 = vmatpush2.msra.mxu0 0.0
    %2323 = vmatprep.subr.mxu0 0.0
    %2324 = vmatpush2.msra.mxu0 0.0
    %2325 = vmatprep.subr.mxu0 0.0
    %2326 = vmatpush2.msra.mxu0 0.0
    %2327 = vmatprep.subr.mxu0 0.0
    %2328 = vmatpush2.msra.mxu0 0.0
    %2329 = vmatprep.subr.mxu0 0.0
    %2330 = vmatpush2.msra.mxu0 0.0
    %2331 = vmatprep.subr.mxu0 0.0
    %2332 = vmatpush2.msra.mxu0 0.0
    %2333 = vmatprep.mubr.f32.mxu0 0.0
    %2334 = vmatmul.mubr.f32.gmra.mxu0 %v2263
    %v2335 = vpop.f32.mrf.mxu0
    %v2336 = vadd.f32 0.0, %v2335
    %v2337 = vpop.f32.mrf.mxu0
    %2338 = vdwg.mxu0
    %v2340 = vsel %vm522, %v2156, 0
    %2342 = vmatprep.subr.mxu0 0.0
    %2343 = vmatpush1.msra.mxu0 0.0
    %2344 = vmatprep.subr.mxu0 0.0
    %2345 = vmatpush1.msra.mxu0 0.0
    %2346 = vmatprep.subr.mxu0 0.0
    %2347 = vmatpush1.msra.mxu0 0.0
    %2348 = vmatprep.subr.mxu0 0.0
    %2349 = vmatpush1.msra.mxu0 0.0
    %2350 = vmatprep.subr.mxu0 0.0
    %2351 = vmatpush1.msra.mxu0 0.0
    %2352 = vmatprep.subr.mxu0 0.0
    %2353 = vmatpush1.msra.mxu0 0.0
    %2354 = vmatprep.subr.mxu0 0.0
    %2355 = vmatpush1.msra.mxu0 0.0
    %2356 = vmatprep.subr.mxu0 0.0
    %2357 = vmatpush1.msra.mxu0 0.0
    %2358 = vmatprep.subr.mxu0 0.0
    %2359 = vmatpush1.msra.mxu0 0.0
    %2360 = vmatprep.subr.mxu0 0.0
    %2361 = vmatpush1.msra.mxu0 0.0
    %2362 = vmatprep.subr.mxu0 0.0
    %2363 = vmatpush1.msra.mxu0 0.0
    %2364 = vmatprep.subr.mxu0 0.0
    %2365 = vmatpush1.msra.mxu0 0.0
    %2366 = vmatprep.subr.mxu0 0.0
    %2367 = vmatpush1.msra.mxu0 %v2164
    %2368 = vmatprep.subr.mxu0 0.0
    %2369 = vmatpush1.msra.mxu0 %v2163
    %2370 = vmatprep.subr.mxu0 0.0
    %2371 = vmatpush1.msra.mxu0 %v2162
    %2372 = vmatprep.subr.mxu0 0.0
    %2373 = vmatpush1.msra.mxu0 %v2161
    %2374 = vmatprep.subr.mxu0 0.0
    %2375 = vmatpush2.msra.mxu0 0.0
    %2376 = vmatprep.subr.mxu0 0.0
    %2377 = vmatpush2.msra.mxu0 0.0
    %2378 = vmatprep.subr.mxu0 0.0
    %2379 = vmatpush2.msra.mxu0 0.0
    %2380 = vmatprep.subr.mxu0 0.0
    %2381 = vmatpush2.msra.mxu0 0.0
    %2382 = vmatprep.subr.mxu0 0.0
    %2383 = vmatpush2.msra.mxu0 0.0
    %2384 = vmatprep.subr.mxu0 0.0
    %2385 = vmatpush2.msra.mxu0 0.0
    %2386 = vmatprep.subr.mxu0 0.0
    %2387 = vmatpush2.msra.mxu0 0.0
    %2388 = vmatprep.subr.mxu0 0.0
    %2389 = vmatpush2.msra.mxu0 0.0
    %2390 = vmatprep.subr.mxu0 0.0
    %2391 = vmatpush2.msra.mxu0 0.0
    %2392 = vmatprep.subr.mxu0 0.0
    %2393 = vmatpush2.msra.mxu0 0.0
    %2394 = vmatprep.subr.mxu0 0.0
    %2395 = vmatpush2.msra.mxu0 0.0
    %2396 = vmatprep.subr.mxu0 0.0
    %2397 = vmatpush2.msra.mxu0 0.0
    %2398 = vmatprep.subr.mxu0 0.0
    %2399 = vmatpush2.msra.mxu0 0.0
    %2400 = vmatprep.subr.mxu0 0.0
    %2401 = vmatpush2.msra.mxu0 0.0
    %2402 = vmatprep.subr.mxu0 0.0
    %2403 = vmatpush2.msra.mxu0 0.0
    %2404 = vmatprep.subr.mxu0 0.0
    %2405 = vmatpush2.msra.mxu0 0.0
    %2406 = vmatprep.mubr.f32.mxu0 0.0
    %2407 = vmatmul.mubr.f32.gmra.mxu0 %v2340
    %v2408 = vpop.f32.mrf.mxu0
    %v2409 = vadd.f32 0.0, %v2408
    %v2410 = vpop.f32.mrf.mxu0
    %2411 = vdwg.mxu0
    %v2413 = vlaneseq
    %v2414 = vshrl.u32 %v2413, 7
    %v2415 = vsub.s32 0, %v2414
    %v2416 = vrot.slane %v2169, %v2415
    %v2419 = vsel %vm2261, %v2336, 0
    %v2422 = vsel %vm2265, %v2409, 0
    %2424 = vmatprep.subr.mxu0 0.0
    %2425 = vmatpush1.msra.mxu0 0.0
    %2426 = vmatprep.subr.mxu0 0.0
    %2427 = vmatpush1.msra.mxu0 0.0
    %2428 = vmatprep.subr.mxu0 0.0
    %2429 = vmatpush1.msra.mxu0 0.0
    %2430 = vmatprep.subr.mxu0 0.0
    %2431 = vmatpush1.msra.mxu0 0.0
    %2432 = vmatprep.subr.mxu0 0.0
    %2433 = vmatpush1.msra.mxu0 0.0
    %2434 = vmatprep.subr.mxu0 0.0
    %2435 = vmatpush1.msra.mxu0 0.0
    %2436 = vmatprep.subr.mxu0 0.0
    %2437 = vmatpush1.msra.mxu0 0.0
    %2438 = vmatprep.subr.mxu0 0.0
    %2439 = vmatpush1.msra.mxu0 0.0
    %2440 = vmatprep.subr.mxu0 0.0
    %2441 = vmatpush1.msra.mxu0 0.0
    %2442 = vmatprep.subr.mxu0 0.0
    %2443 = vmatpush1.msra.mxu0 0.0
    %2444 = vmatprep.subr.mxu0 0.0
    %2445 = vmatpush1.msra.mxu0 0.0
    %2446 = vmatprep.subr.mxu0 0.0
    %2447 = vmatpush1.msra.mxu0 0.0
    %2448 = vmatprep.subr.mxu0 0.0
    %2449 = vmatpush1.msra.mxu0 0.0
    %2450 = vmatprep.subr.mxu0 0.0
    %2451 = vmatpush1.msra.mxu0 0.0
    %2452 = vmatprep.subr.mxu0 0.0
    %2453 = vmatpush1.msra.mxu0 0.0
    %2454 = vmatprep.subr.mxu0 0.0
    %2455 = vmatpush1.msra.mxu0 %v2422
    %2456 = vmatprep.subr.mxu0 0.0
    %2457 = vmatpush2.msra.mxu0 0.0
    %2458 = vmatprep.subr.mxu0 0.0
    %2459 = vmatpush2.msra.mxu0 0.0
    %2460 = vmatprep.subr.mxu0 0.0
    %2461 = vmatpush2.msra.mxu0 0.0
    %2462 = vmatprep.subr.mxu0 0.0
    %2463 = vmatpush2.msra.mxu0 0.0
    %2464 = vmatprep.subr.mxu0 0.0
    %2465 = vmatpush2.msra.mxu0 0.0
    %2466 = vmatprep.subr.mxu0 0.0
    %2467 = vmatpush2.msra.mxu0 0.0
    %2468 = vmatprep.subr.mxu0 0.0
    %2469 = vmatpush2.msra.mxu0 0.0
    %2470 = vmatprep.subr.mxu0 0.0
    %2471 = vmatpush2.msra.mxu0 0.0
    %2472 = vmatprep.subr.mxu0 0.0
    %2473 = vmatpush2.msra.mxu0 0.0
    %2474 = vmatprep.subr.mxu0 0.0
    %2475 = vmatpush2.msra.mxu0 0.0
    %2476 = vmatprep.subr.mxu0 0.0
    %2477 = vmatpush2.msra.mxu0 0.0
    %2478 = vmatprep.subr.mxu0 0.0
    %2479 = vmatpush2.msra.mxu0 0.0
    %2480 = vmatprep.subr.mxu0 0.0
    %2481 = vmatpush2.msra.mxu0 0.0
    %2482 = vmatprep.subr.mxu0 0.0
    %2483 = vmatpush2.msra.mxu0 0.0
    %2484 = vmatprep.subr.mxu0 0.0
    %2485 = vmatpush2.msra.mxu0 0.0
    %2486 = vmatprep.subr.mxu0 0.0
    %2487 = vmatpush2.msra.mxu0 0.0
    %2488 = vmatprep.mubr.f32.mxu0 0.0
    %2489 = vmatmul.mubr.f32.gmra.mxu0 %v2419
    %v2490 = vpop.f32.mrf.mxu0
    %v2491 = vadd.f32 %v2416, %v2490
    %v2492 = vpop.f32.mrf.mxu0
    %2493 = vdwg.mxu0
    %vm2494 = vcmp.gt.f32.partialorder %v2491, 0.0
    %v2495 = vmin.f32 %v2491, 0.0
    %v2496 = vmul.f32 %v2495, 1.442695
    %v2497 = vpow.pop %v2496
    %v2498 = vsub.f32 %v2497, 1.0
    %v2499 = vsel %vm2494, %v2491, %v2498
    %v2501 = vsel %vm522, %v2499, 0
    %2503 = vmatprep.subr.mxu0 0.0
    %2504 = vmatpush1.msra.mxu0 0.0
    %2505 = vmatprep.subr.mxu0 0.0
    %2506 = vmatpush1.msra.mxu0 0.0
    %2507 = vmatprep.subr.mxu0 0.0
    %2508 = vmatpush1.msra.mxu0 0.0
    %2509 = vmatprep.subr.mxu0 0.0
    %2510 = vmatpush1.msra.mxu0 0.0
    %2511 = vmatprep.subr.mxu0 0.0
    %2512 = vmatpush1.msra.mxu0 0.0
    %2513 = vmatprep.subr.mxu0 0.0
    %2514 = vmatpush1.msra.mxu0 0.0
    %2515 = vmatprep.subr.mxu0 0.0
    %2516 = vmatpush1.msra.mxu0 0.0
    %2517 = vmatprep.subr.mxu0 0.0
    %2518 = vmatpush1.msra.mxu0 0.0
    %2519 = vmatprep.subr.mxu0 0.0
    %2520 = vmatpush1.msra.mxu0 0.0
    %2521 = vmatprep.subr.mxu0 0.0
    %2522 = vmatpush1.msra.mxu0 0.0
    %2523 = vmatprep.subr.mxu0 0.0
    %2524 = vmatpush1.msra.mxu0 0.0
    %2525 = vmatprep.subr.mxu0 0.0
    %2526 = vmatpush1.msra.mxu0 0.0
    %2527 = vmatprep.subr.mxu0 0.0
    %2528 = vmatpush1.msra.mxu0 %v2168
    %2529 = vmatprep.subr.mxu0 0.0
    %2530 = vmatpush1.msra.mxu0 %v2167
    %2531 = vmatprep.subr.mxu0 0.0
    %2532 = vmatpush1.msra.mxu0 %v2166
    %2533 = vmatprep.subr.mxu0 0.0
    %2534 = vmatpush1.msra.mxu0 %v2165
    %2535 = vmatprep.subr.mxu0 0.0
    %2536 = vmatpush2.msra.mxu0 0.0
    %2537 = vmatprep.subr.mxu0 0.0
    %2538 = vmatpush2.msra.mxu0 0.0
    %2539 = vmatprep.subr.mxu0 0.0
    %2540 = vmatpush2.msra.mxu0 0.0
    %2541 = vmatprep.subr.mxu0 0.0
    %2542 = vmatpush2.msra.mxu0 0.0
    %2543 = vmatprep.subr.mxu0 0.0
    %2544 = vmatpush2.msra.mxu0 0.0
    %2545 = vmatprep.subr.mxu0 0.0
    %2546 = vmatpush2.msra.mxu0 0.0
    %2547 = vmatprep.subr.mxu0 0.0
    %2548 = vmatpush2.msra.mxu0 0.0
    %2549 = vmatprep.subr.mxu0 0.0
    %2550 = vmatpush2.msra.mxu0 0.0
    %2551 = vmatprep.subr.mxu0 0.0
    %2552 = vmatpush2.msra.mxu0 0.0
    %2553 = vmatprep.subr.mxu0 0.0
    %2554 = vmatpush2.msra.mxu0 0.0
    %2555 = vmatprep.subr.mxu0 0.0
    %2556 = vmatpush2.msra.mxu0 0.0
    %2557 = vmatprep.subr.mxu0 0.0
    %2558 = vmatpush2.msra.mxu0 0.0
    %2559 = vmatprep.subr.mxu0 0.0
    %2560 = vmatpush2.msra.mxu0 0.0
    %2561 = vmatprep.subr.mxu0 0.0
    %2562 = vmatpush2.msra.mxu0 0.0
    %2563 = vmatprep.subr.mxu0 0.0
    %2564 = vmatpush2.msra.mxu0 0.0
    %2565 = vmatprep.subr.mxu0 0.0
    %2566 = vmatpush2.msra.mxu0 0.0
    %2567 = vmatprep.mubr.f32.mxu0 0.0
    %2568 = vmatmul.mubr.f32.gmra.mxu0 %v2501
    %v2569 = vpop.f32.mrf.mxu0
    %v2570 = vadd.f32 0.0, %v2569
    %v2571 = vpop.f32.mrf.mxu0
    %2572 = vdwg.mxu0
    %v2574 = vlaneseq
    %v2575 = vshrl.u32 %v2574, 7
    %v2576 = vsub.s32 0, %v2575
    %v2577 = vrot.slane %v2170, %v2576
    %v2580 = vsel %vm2265, %v2570, 0
    %2582 = vmatprep.subr.mxu0 0.0
    %2583 = vmatpush1.msra.mxu0 0.0
    %2584 = vmatprep.subr.mxu0 0.0
    %2585 = vmatpush1.msra.mxu0 0.0
    %2586 = vmatprep.subr.mxu0 0.0
    %2587 = vmatpush1.msra.mxu0 0.0
    %2588 = vmatprep.subr.mxu0 0.0
    %2589 = vmatpush1.msra.mxu0 0.0
    %2590 = vmatprep.subr.mxu0 0.0
    %2591 = vmatpush1.msra.mxu0 0.0
    %2592 = vmatprep.subr.mxu0 0.0
    %2593 = vmatpush1.msra.mxu0 0.0
    %2594 = vmatprep.subr.mxu0 0.0
    %2595 = vmatpush1.msra.mxu0 0.0
    %2596 = vmatprep.subr.mxu0 0.0
    %2597 = vmatpush1.msra.mxu0 0.0
    %2598 = vmatprep.subr.mxu0 0.0
    %2599 = vmatpush1.msra.mxu0 0.0
    %2600 = vmatprep.subr.mxu0 0.0
    %2601 = vmatpush1.msra.mxu0 0.0
    %2602 = vmatprep.subr.mxu0 0.0
    %2603 = vmatpush1.msra.mxu0 0.0
    %2604 = vmatprep.subr.mxu0 0.0
    %2605 = vmatpush1.msra.mxu0 0.0
    %2606 = vmatprep.subr.mxu0 0.0
    %2607 = vmatpush1.msra.mxu0 0.0
    %2608 = vmatprep.subr.mxu0 0.0
    %2609 = vmatpush1.msra.mxu0 0.0
    %2610 = vmatprep.subr.mxu0 0.0
    %2611 = vmatpush1.msra.mxu0 0.0
    %2612 = vmatprep.subr.mxu0 0.0
    %2613 = vmatpush1.msra.mxu0 %v2580
    %2614 = vmatprep.subr.mxu0 0.0
    %2615 = vmatpush2.msra.mxu0 0.0
    %2616 = vmatprep.subr.mxu0 0.0
    %2617 = vmatpush2.msra.mxu0 0.0
    %2618 = vmatprep.subr.mxu0 0.0
    %2619 = vmatpush2.msra.mxu0 0.0
    %2620 = vmatprep.subr.mxu0 0.0
    %2621 = vmatpush2.msra.mxu0 0.0
    %2622 = vmatprep.subr.mxu0 0.0
    %2623 = vmatpush2.msra.mxu0 0.0
    %2624 = vmatprep.subr.mxu0 0.0
    %2625 = vmatpush2.msra.mxu0 0.0
    %2626 = vmatprep.subr.mxu0 0.0
    %2627 = vmatpush2.msra.mxu0 0.0
    %2628 = vmatprep.subr.mxu0 0.0
    %2629 = vmatpush2.msra.mxu0 0.0
    %2630 = vmatprep.subr.mxu0 0.0
    %2631 = vmatpush2.msra.mxu0 0.0
    %2632 = vmatprep.subr.mxu0 0.0
    %2633 = vmatpush2.msra.mxu0 0.0
    %2634 = vmatprep.subr.mxu0 0.0
    %2635 = vmatpush2.msra.mxu0 0.0
    %2636 = vmatprep.subr.mxu0 0.0
    %2637 = vmatpush2.msra.mxu0 0.0
    %2638 = vmatprep.subr.mxu0 0.0
    %2639 = vmatpush2.msra.mxu0 0.0
    %2640 = vmatprep.subr.mxu0 0.0
    %2641 = vmatpush2.msra.mxu0 0.0
    %2642 = vmatprep.subr.mxu0 0.0
    %2643 = vmatpush2.msra.mxu0 0.0
    %2644 = vmatprep.subr.mxu0 0.0
    %2645 = vmatpush2.msra.mxu0 0.0
    %2646 = vmatprep.mubr.f32.mxu0 0.0
    %2647 = vmatmul.mubr.f32.gmra.mxu0 %v2419
    %v2648 = vpop.f32.mrf.mxu0
    %v2649 = vadd.f32 %v2577, %v2648
    %v2650 = vpop.f32.mrf.mxu0
    %2651 = vdwg.mxu0
    %vm2652 = vcmp.gt.f32.partialorder %v2649, 0.0
    %v2653 = vmin.f32 %v2649, 0.0
    %v2654 = vmul.f32 %v2653, 1.442695
    %v2655 = vpow.pop %v2654
    %v2656 = vsub.f32 %v2655, 1.0
    %v2657 = vsel %vm2652, %v2649, %v2656
    %vm2658 = vcmask 257024
    %2659 = vst.msk [vmem:[%s83] sm:$0xf] %vm2658, %v2657
    %2660 = vst.msk [vmem:[%s87] sm:$0xff] %vm1389, %v1521
    // Predicated region
    $region230: #{encoder_forward.1} parent=1 // pred_check
      _
    $region231: #{encoder_forward.1} parent=1 // pred_check_branch
      %2662 = sbr.rel (0) target = $region233
    $region232: #{encoder_forward.1} parent=1 // pred_region
      %s2664 = ssub.s32 256, 256
      %2665 = vsyncadd [#allocation6], %s2664
      %s2666 = sshll.u32 [#allocation31], 4
      %s2667 = int_to_ptr.vmem [resolvable:$true] %s2666
      %2672 = dma.vmem_to_hbm [thread:$0]  %s2667, 256, %s81, [#allocation6], 128, 128, 8
    $region233: #{encoder_forward.1} parent=1 // pred_fallthru
      _
    // Predicated region
    $region234: #{encoder_forward.1} parent=1 // pred_check
      _
    $region235: #{encoder_forward.1} parent=1 // pred_check_branch
      %2674 = sbr.rel (0) target = $region237
    $region236: #{encoder_forward.1} parent=1 // pred_region
      _
    $region237: #{encoder_forward.1} parent=1 // pred_fallthru
      _
    // Predicated region
    $region238: #{encoder_forward.1} parent=1 // pred_check
      _
    $region239: #{encoder_forward.1} parent=1 // pred_check_branch
      %2676 = sbr.rel (0) target = $region241
    $region240: #{encoder_forward.1} parent=1 // pred_region
      _
    $region241: #{encoder_forward.1} parent=1 // pred_fallthru
      _
    // Predicated region
    $region242: #{encoder_forward.1} parent=1 // pred_check
      _
    $region243: #{encoder_forward.1} parent=1 // pred_check_branch
      %2678 = sbr.rel (0) target = $region245
    $region244: #{encoder_forward.1} parent=1 // pred_region
      _
    $region245: #{encoder_forward.1} parent=1 // pred_fallthru
      _
    // Predicated region
    $region246: #{encoder_forward.1} parent=1 // pred_check
      _
    $region247: #{encoder_forward.1} parent=1 // pred_check_branch
      %2680 = sbr.rel (0) target = $region249
    $region248: #{encoder_forward.1} parent=1 // pred_region
      %2681 = dma.done [#allocation6], 256
    $region249: #{encoder_forward.1} parent=1 // pred_fallthru
      _
    // Predicated region
    $region250: #{encoder_forward.1} parent=1 // pred_check
      _
    $region251: #{encoder_forward.1} parent=1 // pred_check_branch
      %2683 = sbr.rel (0) target = $region253
    $region252: #{encoder_forward.1} parent=1 // pred_region
      _
    $region253: #{encoder_forward.1} parent=1 // pred_fallthru
      _
    // Predicated region
    $region254: #{encoder_forward.1} parent=1 // pred_check
      _
    $region255: #{encoder_forward.1} parent=1 // pred_check_branch
      %2685 = sbr.rel (0) target = $region257
    $region256: #{encoder_forward.1} parent=1 // pred_region
      _
    $region257: #{encoder_forward.1} parent=1 // pred_fallthru
      _
    // Predicated region
    $region258: #{encoder_forward.1} parent=1 // pred_check
      _
    $region259: #{encoder_forward.1} parent=1 // pred_check_branch
      %2687 = sbr.rel (0) target = $region261
    $region260: #{encoder_forward.1} parent=1 // pred_region
      _
    $region261: #{encoder_forward.1} parent=1 // pred_fallthru
      _
    %2688 = vsyncpa [#allocation5], 1
    %2689 = vsyncpa [#allocation8], 1
    %2690 = vsyncpa [#allocation11], 1
    %2691 = vsyncpa [#allocation14], 1
    %2692 = vsyncpa [#allocation17], 1
    %2693 = vsyncpa [#allocation20], 1
    %2694 = vsyncpa [#allocation23], 1
    %2695 = vsyncpa [#allocation26], 1
    %2696 = vsyncpa [#allocation29], 1
    %2697 = vsyncpa [#allocation6], 1

</llo_original>
